<compile_context>
chip_gen: v6e
topology: v6e:2x2x1
jax: 0.10.0
libtpu: 0.0.40
codegen_flags: <defaults>
</compile_context>

<pallas_src>
import functools
import math

import jax
import jax.numpy as jnp
from jax import lax
from jax.experimental import pallas as pl
from jax.experimental.pallas import tpu as pltpu


# --------------------------------------------------------------------------------------
# Kernel 1: fused (flow_out + mask_out) two-stage 3x3 conv head, NHWC, one grid step per batch
# --------------------------------------------------------------------------------------
def _fused_head_conv_kernel(xpad_ref, w1_ref, b1_ref, w2_ref, b2_ref, out_ref, hpad_ref):
    Hp, Wp, Cin = xpad_ref.shape
    H, W = Hp - 2, Wp - 2
    HW = H * W
    C1 = w1_ref.shape[-1]

    # ---- stage 1: 3x3 "same" conv as a single K=9*Cin im2col matmul (+bias, ReLU) ----
    cols = []
    for k in range(9):                                   # static unroll over the 3x3 taps
        dy, dx = divmod(k, 3)
        cols.append(xpad_ref[dy:dy + H, dx:dx + W, :].reshape(HW, Cin))
    patch1 = jnp.concatenate(cols, axis=1).astype(jnp.bfloat16)            # (HW, 9*Cin)
    h1 = jnp.dot(patch1, w1_ref[...], preferred_element_type=jnp.float32)  # (HW, C1)
    h1 = jnp.maximum(h1 + b1_ref[...], 0.0)

    # ---- zero-padded hidden kept in VMEM (halo for the second 'same' conv) ----
    hpad_ref[...] = jnp.zeros_like(hpad_ref)
    hpad_ref[1:1 + H, 1:1 + W, :] = h1.reshape(H, W, C1)

    # ---- stage 2: second 3x3 conv, single K=9*C1 matmul, block-diag weights (+bias) ----
    cols2 = []
    for k in range(9):
        dy, dx = divmod(k, 3)
        cols2.append(hpad_ref[dy:dy + H, dx:dx + W, :].reshape(HW, C1))
    patch2 = jnp.concatenate(cols2, axis=1).astype(jnp.bfloat16)           # (HW, 9*C1)
    out = jnp.dot(patch2, w2_ref[...], preferred_element_type=jnp.float32)  # (HW, Co2p)
    out_ref[...] = out + b2_ref[...]


def fused_flow_mask_convs(featp, w1, b1, w2, b2, H, W):
    """featp: (N, H+2, W+2, Cin) zero-padded NHWC; w1: (9*Cin, C1) bf16; w2: (9*C1, Co2p) bf16."""
    N, Hp, Wp, Cin = featp.shape
    C1 = w1.shape[-1]
    Co2p = w2.shape[-1]
    out = pl.pallas_call(
        _fused_head_conv_kernel,
        out_shape=jax.ShapeDtypeStruct((N, H * W, Co2p), jnp.float32),
        grid=(N,),
        in_specs=[
            pl.BlockSpec((None, Hp, Wp, Cin), lambda n: (n, 0, 0, 0)),
            pl.BlockSpec((9 * Cin, C1), lambda n: (0, 0)),
            pl.BlockSpec((1, C1), lambda n: (0, 0)),
            pl.BlockSpec((9 * C1, Co2p), lambda n: (0, 0)),
            pl.BlockSpec((1, Co2p), lambda n: (0, 0)),
        ],
        out_specs=pl.BlockSpec((None, H * W, Co2p), lambda n: (n, 0, 0)),
        scratch_shapes=[pltpu.VMEM((Hp, Wp, C1), jnp.float32)],
        compiler_params=pltpu.CompilerParams(dimension_semantics=("parallel",)),
    )(featp, w1, b1, w2, b2)
    return out                                            # (N, H*W, Co2p)


# --------------------------------------------------------------------------------------
# Kernel 2: convex-combination flow upsampling (softmax over 9 taps), lane-dense output
# --------------------------------------------------------------------------------------
def _upsample_flow_kernel(flowpad_ref, mask_ref, out_ref):
    Hp, Wp, _ = flowpad_ref.shape
    H, W = Hp - 2, Wp - 2
    HW = H * W
    s2 = mask_ref.shape[1] // 9                           # fd*fd

    msk = mask_ref[...]                                   # (HW, 9*s2), channel = k*s2 + (i*fd+j)
    parts = [msk[:, k * s2:(k + 1) * s2] for k in range(9)]
    mx = parts[0]
    for k in range(1, 9):
        mx = jnp.maximum(mx, parts[k])
    exps = [jnp.exp(p - mx) for p in parts]
    denom = exps[0]
    for k in range(1, 9):
        denom = denom + exps[k]
    inv = pl.reciprocal(denom, approx=True)               # softmax denominator on the EUP

    acc_x = jnp.zeros((HW, s2), jnp.float32)
    acc_y = jnp.zeros((HW, s2), jnp.float32)
    for k in range(9):                                    # static unroll, matches F.unfold order
        dy, dx = divmod(k, 3)
        nb = flowpad_ref[dy:dy + H, dx:dx + W, :].reshape(HW, 2)  # fd-scaled flow neighbours
        w = exps[k] * inv                                  # (HW, s2)
        acc_x = acc_x + w * nb[:, 0:1]
        acc_y = acc_y + w * nb[:, 1:2]
    out_ref[...] = jnp.concatenate([acc_x, acc_y], axis=1)  # (HW, 2*s2) lane-dense


def upsample_flow_pallas(flow_lr, mask, fd):
    """flow_lr: (N, H, W, 2); mask: (N, H*W, 9*fd*fd)  ->  (N, fd*H, fd*W, 2)."""
    N, H, W, _ = flow_lr.shape
    HW = H * W
    s2 = fd * fd
    # fold the *fd scale in once (not per tap inside the kernel)
    flowpad = jnp.pad(flow_lr * float(fd), ((0, 0), (1, 1), (1, 1), (0, 0)))
    out = pl.pallas_call(
        _upsample_flow_kernel,
        out_shape=jax.ShapeDtypeStruct((N, HW, 2 * s2), jnp.float32),
        grid=(N,),
        in_specs=[
            pl.BlockSpec((None, H + 2, W + 2, 2), lambda n: (n, 0, 0, 0)),
            pl.BlockSpec((None, HW, 9 * s2), lambda n: (n, 0, 0)),
        ],
        out_specs=pl.BlockSpec((None, HW, 2 * s2), lambda n: (n, 0, 0)),
        compiler_params=pltpu.CompilerParams(dimension_semantics=("parallel",)),
    )(flowpad, mask)
    # (N, p, c*s2 + s) -> (N, H, W, 2, fd, fd) -> (N, H, fd, W, fd, 2) -> (N, fd*H, fd*W, 2)
    delta = out.reshape(N, H, W, 2, fd, fd).transpose(0, 1, 4, 2, 5, 3)
    return delta.reshape(N, fd * H, fd * W, 2)


# --------------------------------------------------------------------------------------
# Kernel 3: bilinear grid_sample (padding_mode='border', align_corners=False), factored weights
# --------------------------------------------------------------------------------------
def _grid_sample_kernel(grid_ref, img_ref, out_ref, *, Hi, Wi, C):
    Pt = grid_ref.shape[1]
    x = grid_ref[0:1, :]                                  # (1, Pt), normalized x in [-1, 1]
    y = grid_ref[1:2, :]
    # un-normalize (align_corners=False), clamp float coords (border padding)
    xs = jnp.clip((x + 1.0) * (Wi * 0.5) - 0.5, 0.0, Wi - 1.0)
    ys = jnp.clip((y + 1.0) * (Hi * 0.5) - 0.5, 0.0, Hi - 1.0)
    x0 = jnp.floor(xs)
    y0 = jnp.floor(ys)
    wx1 = xs - x0
    wx0 = 1.0 - wx1
    wy1 = ys - y0
    wy0 = 1.0 - wy1
    x0i = x0.astype(jnp.int32)
    y0i = y0.astype(jnp.int32)
    x1i = jnp.minimum(x0i + 1, Wi - 1)
    y1i = jnp.minimum(y0i + 1, Hi - 1)
    # factored bilinear weights: O(P*(Hi+Wi)) build instead of a dense (P, Hi*Wi) matrix
    wq = lax.broadcasted_iota(jnp.int32, (Wi, Pt), 0)
    hq = lax.broadcasted_iota(jnp.int32, (Hi, Pt), 0)
    wxt = wx0 * (wq == x0i).astype(jnp.float32) + wx1 * (wq == x1i).astype(jnp.float32)  # (Wi, Pt)
    wyt = wy0 * (hq == y0i).astype(jnp.float32) + wy1 * (hq == y1i).astype(jnp.float32)  # (Hi, Pt)
    # stage 1: contract the W axis on the MXU (bf16 operands, f32 accumulation)
    a = jnp.dot(img_ref[...], wxt.astype(jnp.bfloat16),
                preferred_element_type=jnp.float32)        # (C*Hi, Pt)
    # stage 2: weight by wyt and reduce the H axis on the VPU; output is (C, Pt) = NCHW order
    a = a.reshape(C, Hi, Pt)
    out_ref[...] = jnp.sum(a * wyt[None, :, :], axis=1)


def grid_sample_pallas(img_nchw, grid, padding_mode="border"):
    """img: (N, C, Hi, Wi); grid: (N, Hg, Wg, 2) (x, y) in [-1,1] -> warped image (N, C, Hg, Wg)."""
    assert padding_mode == "border"  # TODO(synk): 'reflection'/'zeros' padding not implemented
    N, C, Hi, Wi = img_nchw.shape
    _, Hg, Wg, _ = grid.shape
    P = Hg * Wg
    Pt = 256 if P % 256 == 0 else P                       # tile the query axis
    img_r = img_nchw.reshape(N, C * Hi, Wi).astype(jnp.bfloat16)
    grid_t = jnp.transpose(grid.reshape(N, P, 2), (0, 2, 1))      # (N, 2, P), lane-dense
    kern = functools.partial(_grid_sample_kernel, Hi=Hi, Wi=Wi, C=C)
    out = pl.pallas_call(
        kern,
        out_shape=jax.ShapeDtypeStruct((N, C, P), jnp.float32),
        grid=(N, P // Pt),
        in_specs=[
            pl.BlockSpec((None, 2, Pt), lambda n, p: (n, 0, p)),
            pl.BlockSpec((None, C * Hi, Wi), lambda n, p: (n, 0, 0)),
        ],
        out_specs=pl.BlockSpec((None, C, Pt), lambda n, p: (n, 0, p)),
        compiler_params=pltpu.CompilerParams(
            dimension_semantics=("parallel", "parallel")),
    )(grid_t, img_r)
    return out.reshape(N, C, Hg, Wg)                      # already NCHW, no transpose needed


# --------------------------------------------------------------------------------------
# Glue (plain JAX): parameters, identity flow (F.affine_grid with identity), apply_affine
# --------------------------------------------------------------------------------------
def _eq_scale(w):
    """EqualConv2d scaling: weight stored (kh, kw, Cin, Cout); scale = 1/sqrt(Cin*kh*kw)."""
    kh, kw, cin, _ = w.shape
    return w * (1.0 / math.sqrt(cin * kh * kw))


def make_identity_flow(N, Ho, Wo):
    # F.affine_grid(eye(2,3), align_corners=False): pixel-centre coords in [-1, 1], (x, y) last.
    xs = (2.0 * (jnp.arange(Wo, dtype=jnp.float32) + 0.5) / Wo) - 1.0
    ys = (2.0 * (jnp.arange(Ho, dtype=jnp.float32) + 0.5) / Ho) - 1.0
    gx = jnp.broadcast_to(xs[None, :], (Ho, Wo))
    gy = jnp.broadcast_to(ys[:, None], (Ho, Wo))
    grid = jnp.stack([gx, gy], axis=-1)
    return jnp.broadcast_to(grid[None], (N, Ho, Wo, 2))


def apply_affine(matrix, grid):
    """matrix: (N, 2, 3); grid: (N, H, W, 2)."""
    N, Hg, Wg, _ = grid.shape
    g = grid.reshape(N, -1, 2)
    ones = jnp.ones((N, g.shape[1], 1), grid.dtype)
    g = jnp.concatenate([g, ones], axis=2)
    warped = jnp.einsum("npk,nqk->npq", g, matrix)        # grid @ matrix^T
    return warped.reshape(N, Hg, Wg, 2)


def init_params(key, D, fd):
    # NOTE: the module zero-initializes flow_out[-1]; we use small deterministic random
    # values instead so the demo exercises non-trivial flow compute.
    ks = jax.random.split(key, 8)
    mout = 9 * fd * fd
    return {
        "wf1": jax.random.normal(ks[0], (3, 3, D, D), jnp.float32),
        "bf1": jax.random.normal(ks[1], (D,), jnp.float32) * 0.1,
        "wf2": jax.random.normal(ks[2], (3, 3, D, 2), jnp.float32) * 0.05,
        "bf2": jnp.zeros((2,), jnp.float32),
        "wm1": jax.random.normal(ks[4], (3, 3, D, D), jnp.float32),
        "bm1": jax.random.normal(ks[5], (D,), jnp.float32) * 0.1,
        "wm2": jax.random.normal(ks[6], (3, 3, D, mout), jnp.float32),
        "bm2": jax.random.normal(ks[7], (mout,), jnp.float32) * 0.1,
    }


def flow_head_forward(img, features, params, fd=8, base_warp=None,
                      output_resolution=None, padding_mode="border",
                      output_final_congealed_image=True):
    """Returns (warped_img NCHW, flow, delta_flow, flow_high_res) — matches FlowHead.forward."""
    N, D, H, W = features.shape
    feat = jnp.transpose(features, (0, 2, 3, 1))                       # NCHW -> NHWC
    featp = jnp.pad(feat, ((0, 0), (1, 1), (1, 1), (0, 0)))

    # ---- build fused, equal-lr-scaled weights: both branches + both stages ----
    wf1 = _eq_scale(params["wf1"])
    wm1 = _eq_scale(params["wm1"])
    wf2 = _eq_scale(params["wf2"])
    wm2 = _eq_scale(params["wm2"])
    C1 = 2 * D
    Co2 = 2 + 9 * fd * fd
    Co2p = ((Co2 + 127) // 128) * 128                                  # lane-dense output width
    w1 = jnp.concatenate([wf1, wm1], axis=3).reshape(9 * D, C1)
    b1 = jnp.concatenate([params["bf1"], params["bm1"]])[None, :]
    w2 = (jnp.zeros((3, 3, C1, Co2p), jnp.float32)
          .at[:, :, :D, 0:2].set(wf2)                                  # flow branch (block diag)
          .at[:, :, D:, 2:Co2].set(wm2)                                # mask branch (block diag)
          .reshape(9 * C1, Co2p))
    b2 = (jnp.zeros((Co2p,), jnp.float32)
          .at[0:2].set(params["bf2"])
          .at[2:Co2].set(params["bm2"]))[None, :]

    conv_out = fused_flow_mask_convs(featp, w1.astype(jnp.bfloat16), b1,
                                     w2.astype(jnp.bfloat16), b2, H, W)  # (N, H*W, Co2p)
    flow_lr = conv_out[:, :, 0:2].reshape(N, H, W, 2)                    # (N, H, W, 2)
    mask = conv_out[:, :, 2:Co2]                                         # (N, H*W, 9*fd*fd)

    delta_flow = upsample_flow_pallas(flow_lr, mask, fd)                 # (N, fd*H, fd*W, 2)
    identity = make_identity_flow(N, fd * H, fd * W)
    flow = identity + delta_flow
    if base_warp is not None:
        flow = apply_affine(base_warp, flow)

    if output_final_congealed_image:
        flow_high_res = flow
        if output_resolution is not None and output_resolution != flow.shape[1]:
            # TODO(synk): bilinear F.interpolate of the flow field not implemented.
            raise NotImplementedError("output_resolution resizing not implemented")
        out = grid_sample_pallas(img, flow_high_res, padding_mode=padding_mode)
    else:
        out = None
        flow_high_res = flow
    return out, flow, delta_flow, flow_high_res


if __name__ == "__main__":
    N, D, H, W = 2, 8, 4, 4          # features: (N, D, H, W)
    fd = 8                           # flow_downsample
    C = 3                            # image channels
    Ho, Wo = fd * H, fd * W          # 32 x 32 upsampled flow
    Hi, Wi = 32, 32                  # input image resolution

    key = jax.random.PRNGKey(0)
    k_feat, k_img, k_par = jax.random.split(key, 3)
    features = jax.random.normal(k_feat, (N, D, H, W), jnp.float32)
    img = jax.random.normal(k_img, (N, C, Hi, Wi), jnp.float32)
    params = init_params(k_par, D, fd)

    fwd = jax.jit(lambda im, fe, pa: flow_head_forward(im, fe, pa, fd=fd))
    out, flow, delta_flow, flow_high_res = fwd(img, features, params)
    jax.block_until_ready((out, flow, delta_flow, flow_high_res))

    assert out.shape == (N, C, Ho, Wo)
    assert flow.shape == (N, Ho, Wo, 2)
    assert delta_flow.shape == (N, Ho, Wo, 2)
    assert flow_high_res.shape == (N, Ho, Wo, 2)
    assert bool(jnp.all(jnp.isfinite(out)))
    assert bool(jnp.all(jnp.isfinite(flow)))
    print("KERNEL_OK")
</pallas_src>

<mosaic_0001>
module attributes {stable_mosaic.version = 11 : i64} {
  func.func @_fused_head_conv_kernel(%arg0: i32, %arg1: memref<1x6x6x8xf32, #tpu.memory_space<vmem>>, %arg2: memref<72x16xbf16, #tpu.memory_space<vmem>>, %arg3: memref<1x16xf32, #tpu.memory_space<vmem>>, %arg4: memref<144x640xbf16, #tpu.memory_space<vmem>>, %arg5: memref<1x640xf32, #tpu.memory_space<vmem>>, %arg6: memref<1x16x640xf32, #tpu.memory_space<vmem>>, %arg7: memref<6x6x16xf32, #tpu.memory_space<vmem>>) attributes {dimension_semantics = [#tpu.dimension_semantics<parallel>], iteration_bounds = array<i64: 2>, scalar_prefetch = 0 : i64, scratch_operands = 1 : i64, tpu.core_type = #tpu.core_type<tc>, window_params = [{transform_indices = @transform_0, window_bounds = array<i64: 1, 6, 6, 8>}, {pipeline_mode = #tpu.pipeline_mode<synchronous>, transform_indices = @transform_1, window_bounds = array<i64: 72, 16>}, {pipeline_mode = #tpu.pipeline_mode<synchronous>, transform_indices = @transform_2, window_bounds = array<i64: 1, 16>}, {pipeline_mode = #tpu.pipeline_mode<synchronous>, transform_indices = @transform_3, window_bounds = array<i64: 144, 640>}, {pipeline_mode = #tpu.pipeline_mode<synchronous>, transform_indices = @transform_4, window_bounds = array<i64: 1, 640>}, {transform_indices = @transform_5, window_bounds = array<i64: 1, 16, 640>}]} {
    %c0 = arith.constant 0 : index
    %c0_0 = arith.constant 0 : index
    %c0_1 = arith.constant 0 : index
    %c0_2 = arith.constant 0 : index
    %0 = vector.load %arg1[%c0, %c0_0, %c0_1, %c0_2] : memref<1x6x6x8xf32, #tpu.memory_space<vmem>>, vector<1x4x4x8xf32>
    %1 = vector.shape_cast %0 : vector<1x4x4x8xf32> to vector<4x4x8xf32>
    %2 = vector.shape_cast %1 : vector<4x4x8xf32> to vector<16x8xf32>
    %c0_3 = arith.constant 0 : index
    %c0_4 = arith.constant 0 : index
    %c1 = arith.constant 1 : index
    %c0_5 = arith.constant 0 : index
    %3 = vector.load %arg1[%c0_3, %c0_4, %c1, %c0_5] : memref<1x6x6x8xf32, #tpu.memory_space<vmem>>, vector<1x4x4x8xf32>
    %4 = vector.shape_cast %3 : vector<1x4x4x8xf32> to vector<4x4x8xf32>
    %5 = vector.shape_cast %4 : vector<4x4x8xf32> to vector<16x8xf32>
    %c0_6 = arith.constant 0 : index
    %c0_7 = arith.constant 0 : index
    %c2 = arith.constant 2 : index
    %c0_8 = arith.constant 0 : index
    %6 = vector.load %arg1[%c0_6, %c0_7, %c2, %c0_8] : memref<1x6x6x8xf32, #tpu.memory_space<vmem>>, vector<1x4x4x8xf32>
    %7 = vector.shape_cast %6 : vector<1x4x4x8xf32> to vector<4x4x8xf32>
    %8 = vector.shape_cast %7 : vector<4x4x8xf32> to vector<16x8xf32>
    %c0_9 = arith.constant 0 : index
    %c1_10 = arith.constant 1 : index
    %c0_11 = arith.constant 0 : index
    %c0_12 = arith.constant 0 : index
    %9 = vector.load %arg1[%c0_9, %c1_10, %c0_11, %c0_12] : memref<1x6x6x8xf32, #tpu.memory_space<vmem>>, vector<1x4x4x8xf32>
    %10 = vector.shape_cast %9 : vector<1x4x4x8xf32> to vector<4x4x8xf32>
    %11 = vector.shape_cast %10 : vector<4x4x8xf32> to vector<16x8xf32>
    %c0_13 = arith.constant 0 : index
    %c1_14 = arith.constant 1 : index
    %c1_15 = arith.constant 1 : index
    %c0_16 = arith.constant 0 : index
    %12 = vector.load %arg1[%c0_13, %c1_14, %c1_15, %c0_16] : memref<1x6x6x8xf32, #tpu.memory_space<vmem>>, vector<1x4x4x8xf32>
    %13 = vector.shape_cast %12 : vector<1x4x4x8xf32> to vector<4x4x8xf32>
    %14 = vector.shape_cast %13 : vector<4x4x8xf32> to vector<16x8xf32>
    %c0_17 = arith.constant 0 : index
    %c1_18 = arith.constant 1 : index
    %c2_19 = arith.constant 2 : index
    %c0_20 = arith.constant 0 : index
    %15 = vector.load %arg1[%c0_17, %c1_18, %c2_19, %c0_20] : memref<1x6x6x8xf32, #tpu.memory_space<vmem>>, vector<1x4x4x8xf32>
    %16 = vector.shape_cast %15 : vector<1x4x4x8xf32> to vector<4x4x8xf32>
    %17 = vector.shape_cast %16 : vector<4x4x8xf32> to vector<16x8xf32>
    %c0_21 = arith.constant 0 : index
    %c2_22 = arith.constant 2 : index
    %c0_23 = arith.constant 0 : index
    %c0_24 = arith.constant 0 : index
    %18 = vector.load %arg1[%c0_21, %c2_22, %c0_23, %c0_24] : memref<1x6x6x8xf32, #tpu.memory_space<vmem>>, vector<1x4x4x8xf32>
    %19 = vector.shape_cast %18 : vector<1x4x4x8xf32> to vector<4x4x8xf32>
    %20 = vector.shape_cast %19 : vector<4x4x8xf32> to vector<16x8xf32>
    %c0_25 = arith.constant 0 : index
    %c2_26 = arith.constant 2 : index
    %c1_27 = arith.constant 1 : index
    %c0_28 = arith.constant 0 : index
    %21 = vector.load %arg1[%c0_25, %c2_26, %c1_27, %c0_28] : memref<1x6x6x8xf32, #tpu.memory_space<vmem>>, vector<1x4x4x8xf32>
    %22 = vector.shape_cast %21 : vector<1x4x4x8xf32> to vector<4x4x8xf32>
    %23 = vector.shape_cast %22 : vector<4x4x8xf32> to vector<16x8xf32>
    %c0_29 = arith.constant 0 : index
    %c2_30 = arith.constant 2 : index
    %c2_31 = arith.constant 2 : index
    %c0_32 = arith.constant 0 : index
    %24 = vector.load %arg1[%c0_29, %c2_30, %c2_31, %c0_32] : memref<1x6x6x8xf32, #tpu.memory_space<vmem>>, vector<1x4x4x8xf32>
    %25 = vector.shape_cast %24 : vector<1x4x4x8xf32> to vector<4x4x8xf32>
    %26 = vector.shape_cast %25 : vector<4x4x8xf32> to vector<16x8xf32>
    %27 = tpu.concatenate %2, %5, %8, %11, %14, %17, %20, %23, %26 in 1 : vector<16x8xf32>, vector<16x8xf32>, vector<16x8xf32>, vector<16x8xf32>, vector<16x8xf32>, vector<16x8xf32>, vector<16x8xf32>, vector<16x8xf32>, vector<16x8xf32> -> vector<16x72xf32>
    %28 = arith.truncf %27 : vector<16x72xf32> to vector<16x72xbf16>
    %c0_33 = arith.constant 0 : index
    %c0_34 = arith.constant 0 : index
    %29 = vector.load %arg2[%c0_33, %c0_34] : memref<72x16xbf16, #tpu.memory_space<vmem>>, vector<72x16xbf16>
    %cst = arith.constant dense<0.000000e+00> : vector<16x16xf32>
    %30 = tpu.matmul %28, %29, %cst {dimension_numbers = #tpu.dot_dimension_numbers<[1], [0], [0], [1], [0, 0, 1, 1], [], []>} : vector<16x72xbf16>, vector<72x16xbf16>, vector<16x16xf32> -> vector<16x16xf32>
    %c0_35 = arith.constant 0 : index
    %c0_36 = arith.constant 0 : index
    %31 = vector.load %arg3[%c0_35, %c0_36] : memref<1x16xf32, #tpu.memory_space<vmem>>, vector<1x16xf32>
    %32 = vector.broadcast %31 : vector<1x16xf32> to vector<16x16xf32>
    %33 = arith.addf %30, %32 : vector<16x16xf32>
    %cst_37 = arith.constant 0.000000e+00 : f32
    %34 = vector.broadcast %cst_37 : f32 to vector<16x16xf32>
    %35 = arith.maximumf %33, %34 : vector<16x16xf32>
    %cst_38 = arith.constant 0.000000e+00 : f32
    %36 = vector.broadcast %cst_38 : f32 to vector<6x6x16xf32>
    %c0_39 = arith.constant 0 : index
    %c0_40 = arith.constant 0 : index
    %c0_41 = arith.constant 0 : index
    %37 = vector.load %arg7[%c0_39, %c0_40, %c0_41] : memref<6x6x16xf32, #tpu.memory_space<vmem>>, vector<6x6x16xf32>
    tpu.vector_store %arg7[%c0_39, %c0_40, %c0_41], %36 {strides = array<i32>} : memref<6x6x16xf32, #tpu.memory_space<vmem>>, vector<6x6x16xf32>,
    %38 = vector.shape_cast %35 : vector<16x16xf32> to vector<4x4x16xf32>
    %c1_42 = arith.constant 1 : index
    %c1_43 = arith.constant 1 : index
    %c0_44 = arith.constant 0 : index
    %39 = vector.load %arg7[%c1_42, %c1_43, %c0_44] : memref<6x6x16xf32, #tpu.memory_space<vmem>>, vector<4x4x16xf32>
    tpu.vector_store %arg7[%c1_42, %c1_43, %c0_44], %38 {strides = array<i32>} : memref<6x6x16xf32, #tpu.memory_space<vmem>>, vector<4x4x16xf32>,
    %c0_45 = arith.constant 0 : index
    %c0_46 = arith.constant 0 : index
    %c0_47 = arith.constant 0 : index
    %40 = vector.load %arg7[%c0_45, %c0_46, %c0_47] : memref<6x6x16xf32, #tpu.memory_space<vmem>>, vector<4x4x16xf32>
    %41 = vector.shape_cast %40 : vector<4x4x16xf32> to vector<16x16xf32>
    %c0_48 = arith.constant 0 : index
    %c1_49 = arith.constant 1 : index
    %c0_50 = arith.constant 0 : index
    %42 = vector.load %arg7[%c0_48, %c1_49, %c0_50] : memref<6x6x16xf32, #tpu.memory_space<vmem>>, vector<4x4x16xf32>
    %43 = vector.shape_cast %42 : vector<4x4x16xf32> to vector<16x16xf32>
    %c0_51 = arith.constant 0 : index
    %c2_52 = arith.constant 2 : index
    %c0_53 = arith.constant 0 : index
    %44 = vector.load %arg7[%c0_51, %c2_52, %c0_53] : memref<6x6x16xf32, #tpu.memory_space<vmem>>, vector<4x4x16xf32>
    %45 = vector.shape_cast %44 : vector<4x4x16xf32> to vector<16x16xf32>
    %c1_54 = arith.constant 1 : index
    %c0_55 = arith.constant 0 : index
    %c0_56 = arith.constant 0 : index
    %46 = vector.load %arg7[%c1_54, %c0_55, %c0_56] : memref<6x6x16xf32, #tpu.memory_space<vmem>>, vector<4x4x16xf32>
    %47 = vector.shape_cast %46 : vector<4x4x16xf32> to vector<16x16xf32>
    %c1_57 = arith.constant 1 : index
    %c1_58 = arith.constant 1 : index
    %c0_59 = arith.constant 0 : index
    %48 = vector.load %arg7[%c1_57, %c1_58, %c0_59] : memref<6x6x16xf32, #tpu.memory_space<vmem>>, vector<4x4x16xf32>
    %49 = vector.shape_cast %48 : vector<4x4x16xf32> to vector<16x16xf32>
    %c1_60 = arith.constant 1 : index
    %c2_61 = arith.constant 2 : index
    %c0_62 = arith.constant 0 : index
    %50 = vector.load %arg7[%c1_60, %c2_61, %c0_62] : memref<6x6x16xf32, #tpu.memory_space<vmem>>, vector<4x4x16xf32>
    %51 = vector.shape_cast %50 : vector<4x4x16xf32> to vector<16x16xf32>
    %c2_63 = arith.constant 2 : index
    %c0_64 = arith.constant 0 : index
    %c0_65 = arith.constant 0 : index
    %52 = vector.load %arg7[%c2_63, %c0_64, %c0_65] : memref<6x6x16xf32, #tpu.memory_space<vmem>>, vector<4x4x16xf32>
    %53 = vector.shape_cast %52 : vector<4x4x16xf32> to vector<16x16xf32>
    %c2_66 = arith.constant 2 : index
    %c1_67 = arith.constant 1 : index
    %c0_68 = arith.constant 0 : index
    %54 = vector.load %arg7[%c2_66, %c1_67, %c0_68] : memref<6x6x16xf32, #tpu.memory_space<vmem>>, vector<4x4x16xf32>
    %55 = vector.shape_cast %54 : vector<4x4x16xf32> to vector<16x16xf32>
    %c2_69 = arith.constant 2 : index
    %c2_70 = arith.constant 2 : index
    %c0_71 = arith.constant 0 : index
    %56 = vector.load %arg7[%c2_69, %c2_70, %c0_71] : memref<6x6x16xf32, #tpu.memory_space<vmem>>, vector<4x4x16xf32>
    %57 = vector.shape_cast %56 : vector<4x4x16xf32> to vector<16x16xf32>
    %58 = tpu.concatenate %41, %43, %45, %47, %49, %51, %53, %55, %57 in 1 : vector<16x16xf32>, vector<16x16xf32>, vector<16x16xf32>, vector<16x16xf32>, vector<16x16xf32>, vector<16x16xf32>, vector<16x16xf32>, vector<16x16xf32>, vector<16x16xf32> -> vector<16x144xf32>
    %59 = arith.truncf %58 : vector<16x144xf32> to vector<16x144xbf16>
    %c0_72 = arith.constant 0 : index
    %c0_73 = arith.constant 0 : index
    %60 = vector.load %arg4[%c0_72, %c0_73] : memref<144x640xbf16, #tpu.memory_space<vmem>>, vector<144x640xbf16>
    %cst_74 = arith.constant dense<0.000000e+00> : vector<16x640xf32>
    %61 = tpu.matmul %59, %60, %cst_74 {dimension_numbers = #tpu.dot_dimension_numbers<[1], [0], [0], [1], [0, 0, 1, 1], [], []>} : vector<16x144xbf16>, vector<144x640xbf16>, vector<16x640xf32> -> vector<16x640xf32>
    %c0_75 = arith.constant 0 : index
    %c0_76 = arith.constant 0 : index
    %62 = vector.load %arg5[%c0_75, %c0_76] : memref<1x640xf32, #tpu.memory_space<vmem>>, vector<1x640xf32>
    %63 = vector.broadcast %62 : vector<1x640xf32> to vector<16x640xf32>
    %64 = arith.addf %61, %63 : vector<16x640xf32>
    %c0_77 = arith.constant 0 : index
    %c0_78 = arith.constant 0 : index
    %c0_79 = arith.constant 0 : index
    %65 = vector.load %arg6[%c0_77, %c0_78, %c0_79] : memref<1x16x640xf32, #tpu.memory_space<vmem>>, vector<1x16x640xf32>
    %66 = vector.shape_cast %65 : vector<1x16x640xf32> to vector<16x640xf32>
    %67 = vector.shape_cast %64 : vector<16x640xf32> to vector<1x16x640xf32>
    tpu.vector_store %arg6[%c0_77, %c0_78, %c0_79], %67 {strides = array<i32>} : memref<1x16x640xf32, #tpu.memory_space<vmem>>, vector<1x16x640xf32>,
    return
  }
  func.func @transform_0(%arg0: i32) -> (i32, i32, i32, i32) {
    %c0_i32 = arith.constant 0 : i32
    %c0_i32_0 = arith.constant 0 : i32
    %c0_i32_1 = arith.constant 0 : i32
    %c0_i32_2 = arith.constant 0 : i32
    return %arg0, %c0_i32, %c0_i32_0, %c0_i32_1 : i32, i32, i32, i32
  }
  func.func @transform_1(%arg0: i32) -> (i32, i32) {
    %c0_i32 = arith.constant 0 : i32
    %c0_i32_0 = arith.constant 0 : i32
    %c0_i32_1 = arith.constant 0 : i32
    return %c0_i32, %c0_i32_0 : i32, i32
  }
  func.func @transform_2(%arg0: i32) -> (i32, i32) {
    %c0_i32 = arith.constant 0 : i32
    %c0_i32_0 = arith.constant 0 : i32
    %c0_i32_1 = arith.constant 0 : i32
    return %c0_i32, %c0_i32_0 : i32, i32
  }
  func.func @transform_3(%arg0: i32) -> (i32, i32) {
    %c0_i32 = arith.constant 0 : i32
    %c0_i32_0 = arith.constant 0 : i32
    %c0_i32_1 = arith.constant 0 : i32
    return %c0_i32, %c0_i32_0 : i32, i32
  }
  func.func @transform_4(%arg0: i32) -> (i32, i32) {
    %c0_i32 = arith.constant 0 : i32
    %c0_i32_0 = arith.constant 0 : i32
    %c0_i32_1 = arith.constant 0 : i32
    return %c0_i32, %c0_i32_0 : i32, i32
  }
  func.func @transform_5(%arg0: i32) -> (i32, i32, i32) {
    %c0_i32 = arith.constant 0 : i32
    %c0_i32_0 = arith.constant 0 : i32
    %c0_i32_1 = arith.constant 0 : i32
    return %arg0, %c0_i32, %c0_i32_0 : i32, i32, i32
  }
}

module attributes {stable_mosaic.version = 11 : i64} {
  func.func @_upsample_flow_kernel(%arg0: i32, %arg1: memref<1x6x6x2xf32, #tpu.memory_space<vmem>>, %arg2: memref<1x16x576xf32, #tpu.memory_space<vmem>>, %arg3: memref<1x16x128xf32, #tpu.memory_space<vmem>>) attributes {dimension_semantics = [#tpu.dimension_semantics<parallel>], iteration_bounds = array<i64: 2>, scalar_prefetch = 0 : i64, scratch_operands = 0 : i64, tpu.core_type = #tpu.core_type<tc>, window_params = [{transform_indices = @transform_0, window_bounds = array<i64: 1, 6, 6, 2>}, {transform_indices = @transform_1, window_bounds = array<i64: 1, 16, 576>}, {transform_indices = @transform_2, window_bounds = array<i64: 1, 16, 128>}]} {
    %c0 = arith.constant 0 : index
    %c0_0 = arith.constant 0 : index
    %c0_1 = arith.constant 0 : index
    %0 = vector.load %arg2[%c0, %c0_0, %c0_1] : memref<1x16x576xf32, #tpu.memory_space<vmem>>, vector<1x16x576xf32>
    %1 = vector.shape_cast %0 : vector<1x16x576xf32> to vector<16x576xf32>
    %2 = vector.extract_strided_slice %1 {offsets = [0, 0], sizes = [16, 64], strides = [1, 1]} : vector<16x576xf32> to vector<16x64xf32>
    %3 = vector.extract_strided_slice %1 {offsets = [0, 64], sizes = [16, 64], strides = [1, 1]} : vector<16x576xf32> to vector<16x64xf32>
    %4 = vector.extract_strided_slice %1 {offsets = [0, 128], sizes = [16, 64], strides = [1, 1]} : vector<16x576xf32> to vector<16x64xf32>
    %5 = vector.extract_strided_slice %1 {offsets = [0, 192], sizes = [16, 64], strides = [1, 1]} : vector<16x576xf32> to vector<16x64xf32>
    %6 = vector.extract_strided_slice %1 {offsets = [0, 256], sizes = [16, 64], strides = [1, 1]} : vector<16x576xf32> to vector<16x64xf32>
    %7 = vector.extract_strided_slice %1 {offsets = [0, 320], sizes = [16, 64], strides = [1, 1]} : vector<16x576xf32> to vector<16x64xf32>
    %8 = vector.extract_strided_slice %1 {offsets = [0, 384], sizes = [16, 64], strides = [1, 1]} : vector<16x576xf32> to vector<16x64xf32>
    %9 = vector.extract_strided_slice %1 {offsets = [0, 448], sizes = [16, 64], strides = [1, 1]} : vector<16x576xf32> to vector<16x64xf32>
    %10 = vector.extract_strided_slice %1 {offsets = [0, 512], sizes = [16, 64], strides = [1, 1]} : vector<16x576xf32> to vector<16x64xf32>
    %11 = arith.maximumf %2, %3 : vector<16x64xf32>
    %12 = arith.maximumf %11, %4 : vector<16x64xf32>
    %13 = arith.maximumf %12, %5 : vector<16x64xf32>
    %14 = arith.maximumf %13, %6 : vector<16x64xf32>
    %15 = arith.maximumf %14, %7 : vector<16x64xf32>
    %16 = arith.maximumf %15, %8 : vector<16x64xf32>
    %17 = arith.maximumf %16, %9 : vector<16x64xf32>
    %18 = arith.maximumf %17, %10 : vector<16x64xf32>
    %19 = arith.subf %2, %18 : vector<16x64xf32>
    %20 = math.exp %19 : vector<16x64xf32>
    %21 = arith.subf %3, %18 : vector<16x64xf32>
    %22 = math.exp %21 : vector<16x64xf32>
    %23 = arith.subf %4, %18 : vector<16x64xf32>
    %24 = math.exp %23 : vector<16x64xf32>
    %25 = arith.subf %5, %18 : vector<16x64xf32>
    %26 = math.exp %25 : vector<16x64xf32>
    %27 = arith.subf %6, %18 : vector<16x64xf32>
    %28 = math.exp %27 : vector<16x64xf32>
    %29 = arith.subf %7, %18 : vector<16x64xf32>
    %30 = math.exp %29 : vector<16x64xf32>
    %31 = arith.subf %8, %18 : vector<16x64xf32>
    %32 = math.exp %31 : vector<16x64xf32>
    %33 = arith.subf %9, %18 : vector<16x64xf32>
    %34 = math.exp %33 : vector<16x64xf32>
    %35 = arith.subf %10, %18 : vector<16x64xf32>
    %36 = math.exp %35 : vector<16x64xf32>
    %37 = arith.addf %20, %22 : vector<16x64xf32>
    %38 = arith.addf %37, %24 : vector<16x64xf32>
    %39 = arith.addf %38, %26 : vector<16x64xf32>
    %40 = arith.addf %39, %28 : vector<16x64xf32>
    %41 = arith.addf %40, %30 : vector<16x64xf32>
    %42 = arith.addf %41, %32 : vector<16x64xf32>
    %43 = arith.addf %42, %34 : vector<16x64xf32>
    %44 = arith.addf %43, %36 : vector<16x64xf32>
    %45 = tpu.reciprocal %44 {approx = true} : vector<16x64xf32> -> vector<16x64xf32>
    %cst = arith.constant 0.000000e+00 : f32
    %46 = vector.broadcast %cst : f32 to vector<16x64xf32>
    %cst_2 = arith.constant 0.000000e+00 : f32
    %47 = vector.broadcast %cst_2 : f32 to vector<16x64xf32>
    %c0_3 = arith.constant 0 : index
    %c0_4 = arith.constant 0 : index
    %c0_5 = arith.constant 0 : index
    %c0_6 = arith.constant 0 : index
    %48 = vector.load %arg1[%c0_3, %c0_4, %c0_5, %c0_6] : memref<1x6x6x2xf32, #tpu.memory_space<vmem>>, vector<1x4x4x2xf32>
    %49 = vector.shape_cast %48 : vector<1x4x4x2xf32> to vector<4x4x2xf32>
    %50 = vector.shape_cast %49 : vector<4x4x2xf32> to vector<16x2xf32>
    %51 = arith.mulf %20, %45 : vector<16x64xf32>
    %52 = vector.extract_strided_slice %50 {offsets = [0, 0], sizes = [16, 1], strides = [1, 1]} : vector<16x2xf32> to vector<16x1xf32>
    %53 = vector.broadcast %52 : vector<16x1xf32> to vector<16x64xf32>
    %54 = arith.mulf %51, %53 : vector<16x64xf32>
    %55 = arith.addf %46, %54 : vector<16x64xf32>
    %56 = vector.extract_strided_slice %50 {offsets = [0, 1], sizes = [16, 1], strides = [1, 1]} : vector<16x2xf32> to vector<16x1xf32>
    %57 = vector.broadcast %56 : vector<16x1xf32> to vector<16x64xf32>
    %58 = arith.mulf %51, %57 : vector<16x64xf32>
    %59 = arith.addf %47, %58 : vector<16x64xf32>
    %c0_7 = arith.constant 0 : index
    %c0_8 = arith.constant 0 : index
    %c1 = arith.constant 1 : index
    %c0_9 = arith.constant 0 : index
    %60 = vector.load %arg1[%c0_7, %c0_8, %c1, %c0_9] : memref<1x6x6x2xf32, #tpu.memory_space<vmem>>, vector<1x4x4x2xf32>
    %61 = vector.shape_cast %60 : vector<1x4x4x2xf32> to vector<4x4x2xf32>
    %62 = vector.shape_cast %61 : vector<4x4x2xf32> to vector<16x2xf32>
    %63 = arith.mulf %22, %45 : vector<16x64xf32>
    %64 = vector.extract_strided_slice %62 {offsets = [0, 0], sizes = [16, 1], strides = [1, 1]} : vector<16x2xf32> to vector<16x1xf32>
    %65 = vector.broadcast %64 : vector<16x1xf32> to vector<16x64xf32>
    %66 = arith.mulf %63, %65 : vector<16x64xf32>
    %67 = arith.addf %55, %66 : vector<16x64xf32>
    %68 = vector.extract_strided_slice %62 {offsets = [0, 1], sizes = [16, 1], strides = [1, 1]} : vector<16x2xf32> to vector<16x1xf32>
    %69 = vector.broadcast %68 : vector<16x1xf32> to vector<16x64xf32>
    %70 = arith.mulf %63, %69 : vector<16x64xf32>
    %71 = arith.addf %59, %70 : vector<16x64xf32>
    %c0_10 = arith.constant 0 : index
    %c0_11 = arith.constant 0 : index
    %c2 = arith.constant 2 : index
    %c0_12 = arith.constant 0 : index
    %72 = vector.load %arg1[%c0_10, %c0_11, %c2, %c0_12] : memref<1x6x6x2xf32, #tpu.memory_space<vmem>>, vector<1x4x4x2xf32>
    %73 = vector.shape_cast %72 : vector<1x4x4x2xf32> to vector<4x4x2xf32>
    %74 = vector.shape_cast %73 : vector<4x4x2xf32> to vector<16x2xf32>
    %75 = arith.mulf %24, %45 : vector<16x64xf32>
    %76 = vector.extract_strided_slice %74 {offsets = [0, 0], sizes = [16, 1], strides = [1, 1]} : vector<16x2xf32> to vector<16x1xf32>
    %77 = vector.broadcast %76 : vector<16x1xf32> to vector<16x64xf32>
    %78 = arith.mulf %75, %77 : vector<16x64xf32>
    %79 = arith.addf %67, %78 : vector<16x64xf32>
    %80 = vector.extract_strided_slice %74 {offsets = [0, 1], sizes = [16, 1], strides = [1, 1]} : vector<16x2xf32> to vector<16x1xf32>
    %81 = vector.broadcast %80 : vector<16x1xf32> to vector<16x64xf32>
    %82 = arith.mulf %75, %81 : vector<16x64xf32>
    %83 = arith.addf %71, %82 : vector<16x64xf32>
    %c0_13 = arith.constant 0 : index
    %c1_14 = arith.constant 1 : index
    %c0_15 = arith.constant 0 : index
    %c0_16 = arith.constant 0 : index
    %84 = vector.load %arg1[%c0_13, %c1_14, %c0_15, %c0_16] : memref<1x6x6x2xf32, #tpu.memory_space<vmem>>, vector<1x4x4x2xf32>
    %85 = vector.shape_cast %84 : vector<1x4x4x2xf32> to vector<4x4x2xf32>
    %86 = vector.shape_cast %85 : vector<4x4x2xf32> to vector<16x2xf32>
    %87 = arith.mulf %26, %45 : vector<16x64xf32>
    %88 = vector.extract_strided_slice %86 {offsets = [0, 0], sizes = [16, 1], strides = [1, 1]} : vector<16x2xf32> to vector<16x1xf32>
    %89 = vector.broadcast %88 : vector<16x1xf32> to vector<16x64xf32>
    %90 = arith.mulf %87, %89 : vector<16x64xf32>
    %91 = arith.addf %79, %90 : vector<16x64xf32>
    %92 = vector.extract_strided_slice %86 {offsets = [0, 1], sizes = [16, 1], strides = [1, 1]} : vector<16x2xf32> to vector<16x1xf32>
    %93 = vector.broadcast %92 : vector<16x1xf32> to vector<16x64xf32>
    %94 = arith.mulf %87, %93 : vector<16x64xf32>
    %95 = arith.addf %83, %94 : vector<16x64xf32>
    %c0_17 = arith.constant 0 : index
    %c1_18 = arith.constant 1 : index
    %c1_19 = arith.constant 1 : index
    %c0_20 = arith.constant 0 : index
    %96 = vector.load %arg1[%c0_17, %c1_18, %c1_19, %c0_20] : memref<1x6x6x2xf32, #tpu.memory_space<vmem>>, vector<1x4x4x2xf32>
    %97 = vector.shape_cast %96 : vector<1x4x4x2xf32> to vector<4x4x2xf32>
    %98 = vector.shape_cast %97 : vector<4x4x2xf32> to vector<16x2xf32>
    %99 = arith.mulf %28, %45 : vector<16x64xf32>
    %100 = vector.extract_strided_slice %98 {offsets = [0, 0], sizes = [16, 1], strides = [1, 1]} : vector<16x2xf32> to vector<16x1xf32>
    %101 = vector.broadcast %100 : vector<16x1xf32> to vector<16x64xf32>
    %102 = arith.mulf %99, %101 : vector<16x64xf32>
    %103 = arith.addf %91, %102 : vector<16x64xf32>
    %104 = vector.extract_strided_slice %98 {offsets = [0, 1], sizes = [16, 1], strides = [1, 1]} : vector<16x2xf32> to vector<16x1xf32>
    %105 = vector.broadcast %104 : vector<16x1xf32> to vector<16x64xf32>
    %106 = arith.mulf %99, %105 : vector<16x64xf32>
    %107 = arith.addf %95, %106 : vector<16x64xf32>
    %c0_21 = arith.constant 0 : index
    %c1_22 = arith.constant 1 : index
    %c2_23 = arith.constant 2 : index
    %c0_24 = arith.constant 0 : index
    %108 = vector.load %arg1[%c0_21, %c1_22, %c2_23, %c0_24] : memref<1x6x6x2xf32, #tpu.memory_space<vmem>>, vector<1x4x4x2xf32>
    %109 = vector.shape_cast %108 : vector<1x4x4x2xf32> to vector<4x4x2xf32>
    %110 = vector.shape_cast %109 : vector<4x4x2xf32> to vector<16x2xf32>
    %111 = arith.mulf %30, %45 : vector<16x64xf32>
    %112 = vector.extract_strided_slice %110 {offsets = [0, 0], sizes = [16, 1], strides = [1, 1]} : vector<16x2xf32> to vector<16x1xf32>
    %113 = vector.broadcast %112 : vector<16x1xf32> to vector<16x64xf32>
    %114 = arith.mulf %111, %113 : vector<16x64xf32>
    %115 = arith.addf %103, %114 : vector<16x64xf32>
    %116 = vector.extract_strided_slice %110 {offsets = [0, 1], sizes = [16, 1], strides = [1, 1]} : vector<16x2xf32> to vector<16x1xf32>
    %117 = vector.broadcast %116 : vector<16x1xf32> to vector<16x64xf32>
    %118 = arith.mulf %111, %117 : vector<16x64xf32>
    %119 = arith.addf %107, %118 : vector<16x64xf32>
    %c0_25 = arith.constant 0 : index
    %c2_26 = arith.constant 2 : index
    %c0_27 = arith.constant 0 : index
    %c0_28 = arith.constant 0 : index
    %120 = vector.load %arg1[%c0_25, %c2_26, %c0_27, %c0_28] : memref<1x6x6x2xf32, #tpu.memory_space<vmem>>, vector<1x4x4x2xf32>
    %121 = vector.shape_cast %120 : vector<1x4x4x2xf32> to vector<4x4x2xf32>
    %122 = vector.shape_cast %121 : vector<4x4x2xf32> to vector<16x2xf32>
    %123 = arith.mulf %32, %45 : vector<16x64xf32>
    %124 = vector.extract_strided_slice %122 {offsets = [0, 0], sizes = [16, 1], strides = [1, 1]} : vector<16x2xf32> to vector<16x1xf32>
    %125 = vector.broadcast %124 : vector<16x1xf32> to vector<16x64xf32>
    %126 = arith.mulf %123, %125 : vector<16x64xf32>
    %127 = arith.addf %115, %126 : vector<16x64xf32>
    %128 = vector.extract_strided_slice %122 {offsets = [0, 1], sizes = [16, 1], strides = [1, 1]} : vector<16x2xf32> to vector<16x1xf32>
    %129 = vector.broadcast %128 : vector<16x1xf32> to vector<16x64xf32>
    %130 = arith.mulf %123, %129 : vector<16x64xf32>
    %131 = arith.addf %119, %130 : vector<16x64xf32>
    %c0_29 = arith.constant 0 : index
    %c2_30 = arith.constant 2 : index
    %c1_31 = arith.constant 1 : index
    %c0_32 = arith.constant 0 : index
    %132 = vector.load %arg1[%c0_29, %c2_30, %c1_31, %c0_32] : memref<1x6x6x2xf32, #tpu.memory_space<vmem>>, vector<1x4x4x2xf32>
    %133 = vector.shape_cast %132 : vector<1x4x4x2xf32> to vector<4x4x2xf32>
    %134 = vector.shape_cast %133 : vector<4x4x2xf32> to vector<16x2xf32>
    %135 = arith.mulf %34, %45 : vector<16x64xf32>
    %136 = vector.extract_strided_slice %134 {offsets = [0, 0], sizes = [16, 1], strides = [1, 1]} : vector<16x2xf32> to vector<16x1xf32>
    %137 = vector.broadcast %136 : vector<16x1xf32> to vector<16x64xf32>
    %138 = arith.mulf %135, %137 : vector<16x64xf32>
    %139 = arith.addf %127, %138 : vector<16x64xf32>
    %140 = vector.extract_strided_slice %134 {offsets = [0, 1], sizes = [16, 1], strides = [1, 1]} : vector<16x2xf32> to vector<16x1xf32>
    %141 = vector.broadcast %140 : vector<16x1xf32> to vector<16x64xf32>
    %142 = arith.mulf %135, %141 : vector<16x64xf32>
    %143 = arith.addf %131, %142 : vector<16x64xf32>
    %c0_33 = arith.constant 0 : index
    %c2_34 = arith.constant 2 : index
    %c2_35 = arith.constant 2 : index
    %c0_36 = arith.constant 0 : index
    %144 = vector.load %arg1[%c0_33, %c2_34, %c2_35, %c0_36] : memref<1x6x6x2xf32, #tpu.memory_space<vmem>>, vector<1x4x4x2xf32>
    %145 = vector.shape_cast %144 : vector<1x4x4x2xf32> to vector<4x4x2xf32>
    %146 = vector.shape_cast %145 : vector<4x4x2xf32> to vector<16x2xf32>
    %147 = arith.mulf %36, %45 : vector<16x64xf32>
    %148 = vector.extract_strided_slice %146 {offsets = [0, 0], sizes = [16, 1], strides = [1, 1]} : vector<16x2xf32> to vector<16x1xf32>
    %149 = vector.broadcast %148 : vector<16x1xf32> to vector<16x64xf32>
    %150 = arith.mulf %147, %149 : vector<16x64xf32>
    %151 = arith.addf %139, %150 : vector<16x64xf32>
    %152 = vector.extract_strided_slice %146 {offsets = [0, 1], sizes = [16, 1], strides = [1, 1]} : vector<16x2xf32> to vector<16x1xf32>
    %153 = vector.broadcast %152 : vector<16x1xf32> to vector<16x64xf32>
    %154 = arith.mulf %147, %153 : vector<16x64xf32>
    %155 = arith.addf %143, %154 : vector<16x64xf32>
    %156 = tpu.concatenate %151, %155 in 1 : vector<16x64xf32>, vector<16x64xf32> -> vector<16x128xf32>
    %c0_37 = arith.constant 0 : index
    %c0_38 = arith.constant 0 : index
    %c0_39 = arith.constant 0 : index
    %157 = vector.load %arg3[%c0_37, %c0_38, %c0_39] : memref<1x16x128xf32, #tpu.memory_space<vmem>>, vector<1x16x128xf32>
    %158 = vector.shape_cast %157 : vector<1x16x128xf32> to vector<16x128xf32>
    %159 = vector.shape_cast %156 : vector<16x128xf32> to vector<1x16x128xf32>
    tpu.vector_store %arg3[%c0_37, %c0_38, %c0_39], %159 {strides = array<i32>} : memref<1x16x128xf32, #tpu.memory_space<vmem>>, vector<1x16x128xf32>,
    return
  }
  func.func @transform_0(%arg0: i32) -> (i32, i32, i32, i32) {
    %c0_i32 = arith.constant 0 : i32
    %c0_i32_0 = arith.constant 0 : i32
    %c0_i32_1 = arith.constant 0 : i32
    %c0_i32_2 = arith.constant 0 : i32
    return %arg0, %c0_i32, %c0_i32_0, %c0_i32_1 : i32, i32, i32, i32
  }
  func.func @transform_1(%arg0: i32) -> (i32, i32, i32) {
    %c0_i32 = arith.constant 0 : i32
    %c0_i32_0 = arith.constant 0 : i32
    %c0_i32_1 = arith.constant 0 : i32
    return %arg0, %c0_i32, %c0_i32_0 : i32, i32, i32
  }
  func.func @transform_2(%arg0: i32) -> (i32, i32, i32) {
    %c0_i32 = arith.constant 0 : i32
    %c0_i32_0 = arith.constant 0 : i32
    %c0_i32_1 = arith.constant 0 : i32
    return %arg0, %c0_i32, %c0_i32_0 : i32, i32, i32
  }
}

module attributes {stable_mosaic.version = 11 : i64} {
  func.func @_grid_sample_kernel(%arg0: i32, %arg1: i32, %arg2: memref<1x2x256xf32, #tpu.memory_space<vmem>>, %arg3: memref<1x96x32xbf16, #tpu.memory_space<vmem>>, %arg4: memref<1x3x256xf32, #tpu.memory_space<vmem>>) attributes {dimension_semantics = [#tpu.dimension_semantics<parallel>, #tpu.dimension_semantics<parallel>], iteration_bounds = array<i64: 2, 4>, scalar_prefetch = 0 : i64, scratch_operands = 0 : i64, tpu.core_type = #tpu.core_type<tc>, window_params = [{transform_indices = @transform_0, window_bounds = array<i64: 1, 2, 256>}, {transform_indices = @transform_1, window_bounds = array<i64: 1, 96, 32>}, {transform_indices = @transform_2, window_bounds = array<i64: 1, 3, 256>}]} {
    %c0 = arith.constant 0 : index
    %c0_0 = arith.constant 0 : index
    %c0_1 = arith.constant 0 : index
    %0 = vector.load %arg2[%c0, %c0_0, %c0_1] : memref<1x2x256xf32, #tpu.memory_space<vmem>>, vector<1x1x256xf32>
    %1 = vector.shape_cast %0 : vector<1x1x256xf32> to vector<1x256xf32>
    %c0_2 = arith.constant 0 : index
    %c1 = arith.constant 1 : index
    %c0_3 = arith.constant 0 : index
    %2 = vector.load %arg2[%c0_2, %c1, %c0_3] : memref<1x2x256xf32, #tpu.memory_space<vmem>>, vector<1x1x256xf32>
    %3 = vector.shape_cast %2 : vector<1x1x256xf32> to vector<1x256xf32>
    %cst = arith.constant 1.000000e+00 : f32
    %4 = vector.broadcast %cst : f32 to vector<1x256xf32>
    %5 = arith.addf %1, %4 : vector<1x256xf32>
    %cst_4 = arith.constant 1.600000e+01 : f32
    %6 = vector.broadcast %cst_4 : f32 to vector<1x256xf32>
    %7 = arith.mulf %5, %6 : vector<1x256xf32>
    %cst_5 = arith.constant 5.000000e-01 : f32
    %8 = vector.broadcast %cst_5 : f32 to vector<1x256xf32>
    %9 = arith.subf %7, %8 : vector<1x256xf32>
    %cst_6 = arith.constant 0.000000e+00 : f32
    %cst_7 = arith.constant 3.100000e+01 : f32
    %10 = vector.broadcast %cst_6 : f32 to vector<1x256xf32>
    %11 = arith.maximumf %10, %9 : vector<1x256xf32>
    %12 = vector.broadcast %cst_7 : f32 to vector<1x256xf32>
    %13 = arith.minimumf %12, %11 : vector<1x256xf32>
    %cst_8 = arith.constant 1.000000e+00 : f32
    %14 = vector.broadcast %cst_8 : f32 to vector<1x256xf32>
    %15 = arith.addf %3, %14 : vector<1x256xf32>
    %cst_9 = arith.constant 1.600000e+01 : f32
    %16 = vector.broadcast %cst_9 : f32 to vector<1x256xf32>
    %17 = arith.mulf %15, %16 : vector<1x256xf32>
    %cst_10 = arith.constant 5.000000e-01 : f32
    %18 = vector.broadcast %cst_10 : f32 to vector<1x256xf32>
    %19 = arith.subf %17, %18 : vector<1x256xf32>
    %cst_11 = arith.constant 0.000000e+00 : f32
    %cst_12 = arith.constant 3.100000e+01 : f32
    %20 = vector.broadcast %cst_11 : f32 to vector<1x256xf32>
    %21 = arith.maximumf %20, %19 : vector<1x256xf32>
    %22 = vector.broadcast %cst_12 : f32 to vector<1x256xf32>
    %23 = arith.minimumf %22, %21 : vector<1x256xf32>
    %24 = math.floor %13 : vector<1x256xf32>
    %25 = math.floor %23 : vector<1x256xf32>
    %26 = arith.subf %13, %24 : vector<1x256xf32>
    %cst_13 = arith.constant 1.000000e+00 : f32
    %27 = vector.broadcast %cst_13 : f32 to vector<1x256xf32>
    %28 = arith.subf %27, %26 : vector<1x256xf32>
    %29 = arith.subf %23, %25 : vector<1x256xf32>
    %cst_14 = arith.constant 1.000000e+00 : f32
    %30 = vector.broadcast %cst_14 : f32 to vector<1x256xf32>
    %31 = arith.subf %30, %29 : vector<1x256xf32>
    %32 = arith.fptosi %24 : vector<1x256xf32> to vector<1x256xi32>
    %33 = arith.fptosi %25 : vector<1x256xf32> to vector<1x256xi32>
    %c1_i32 = arith.constant 1 : i32
    %34 = vector.broadcast %c1_i32 : i32 to vector<1x256xi32>
    %35 = arith.addi %32, %34 : vector<1x256xi32>
    %c31_i32 = arith.constant 31 : i32
    %36 = vector.broadcast %c31_i32 : i32 to vector<1x256xi32>
    %37 = arith.minsi %35, %36 : vector<1x256xi32>
    %c1_i32_15 = arith.constant 1 : i32
    %38 = vector.broadcast %c1_i32_15 : i32 to vector<1x256xi32>
    %39 = arith.addi %33, %38 : vector<1x256xi32>
    %c31_i32_16 = arith.constant 31 : i32
    %40 = vector.broadcast %c31_i32_16 : i32 to vector<1x256xi32>
    %41 = arith.minsi %39, %40 : vector<1x256xi32>
    %42 = tpu.iota {dimensions = array<i32: 0>} : vector<32x256xi32>
    %43 = tpu.iota {dimensions = array<i32: 0>} : vector<32x256xi32>
    %44 = vector.broadcast %32 : vector<1x256xi32> to vector<32x256xi32>
    %45 = arith.cmpi eq, %42, %44 : vector<32x256xi32>
    %46 = arith.extui %45 : vector<32x256xi1> to vector<32x256xi32>
    %47 = arith.sitofp %46 : vector<32x256xi32> to vector<32x256xf32>
    %48 = vector.broadcast %28 : vector<1x256xf32> to vector<32x256xf32>
    %49 = arith.mulf %48, %47 : vector<32x256xf32>
    %50 = vector.broadcast %37 : vector<1x256xi32> to vector<32x256xi32>
    %51 = arith.cmpi eq, %42, %50 : vector<32x256xi32>
    %52 = arith.extui %51 : vector<32x256xi1> to vector<32x256xi32>
    %53 = arith.sitofp %52 : vector<32x256xi32> to vector<32x256xf32>
    %54 = vector.broadcast %26 : vector<1x256xf32> to vector<32x256xf32>
    %55 = arith.mulf %54, %53 : vector<32x256xf32>
    %56 = arith.addf %49, %55 : vector<32x256xf32>
    %57 = vector.broadcast %33 : vector<1x256xi32> to vector<32x256xi32>
    %58 = arith.cmpi eq, %43, %57 : vector<32x256xi32>
    %59 = arith.extui %58 : vector<32x256xi1> to vector<32x256xi32>
    %60 = arith.sitofp %59 : vector<32x256xi32> to vector<32x256xf32>
    %61 = vector.broadcast %31 : vector<1x256xf32> to vector<32x256xf32>
    %62 = arith.mulf %61, %60 : vector<32x256xf32>
    %63 = vector.broadcast %41 : vector<1x256xi32> to vector<32x256xi32>
    %64 = arith.cmpi eq, %43, %63 : vector<32x256xi32>
    %65 = arith.extui %64 : vector<32x256xi1> to vector<32x256xi32>
    %66 = arith.sitofp %65 : vector<32x256xi32> to vector<32x256xf32>
    %67 = vector.broadcast %29 : vector<1x256xf32> to vector<32x256xf32>
    %68 = arith.mulf %67, %66 : vector<32x256xf32>
    %69 = arith.addf %62, %68 : vector<32x256xf32>
    %c0_17 = arith.constant 0 : index
    %c0_18 = arith.constant 0 : index
    %c0_19 = arith.constant 0 : index
    %70 = vector.load %arg3[%c0_17, %c0_18, %c0_19] : memref<1x96x32xbf16, #tpu.memory_space<vmem>>, vector<1x96x32xbf16>
    %71 = vector.shape_cast %70 : vector<1x96x32xbf16> to vector<96x32xbf16>
    %72 = arith.truncf %56 : vector<32x256xf32> to vector<32x256xbf16>
    %cst_20 = arith.constant dense<0.000000e+00> : vector<96x256xf32>
    %73 = tpu.matmul %71, %72, %cst_20 {dimension_numbers = #tpu.dot_dimension_numbers<[1], [0], [0], [1], [0, 0, 1, 1], [], []>} : vector<96x32xbf16>, vector<32x256xbf16>, vector<96x256xf32> -> vector<96x256xf32>
    %74 = vector.shape_cast %73 : vector<96x256xf32> to vector<3x32x256xf32>
    %75 = vector.shape_cast %69 : vector<32x256xf32> to vector<1x32x256xf32>
    %76 = vector.broadcast %75 : vector<1x32x256xf32> to vector<3x32x256xf32>
    %77 = arith.mulf %74, %76 : vector<3x32x256xf32>
    %cst_21 = arith.constant dense<0.000000e+00> : vector<3x256xf32>
    %78 = vector.multi_reduction <add>, %77, %cst_21 [1] : vector<3x32x256xf32> to vector<3x256xf32>
    %c0_22 = arith.constant 0 : index
    %c0_23 = arith.constant 0 : index
    %c0_24 = arith.constant 0 : index
    %79 = vector.load %arg4[%c0_22, %c0_23, %c0_24] : memref<1x3x256xf32, #tpu.memory_space<vmem>>, vector<1x3x256xf32>
    %80 = vector.shape_cast %79 : vector<1x3x256xf32> to vector<3x256xf32>
    %81 = vector.shape_cast %78 : vector<3x256xf32> to vector<1x3x256xf32>
    tpu.vector_store %arg4[%c0_22, %c0_23, %c0_24], %81 {strides = array<i32>} : memref<1x3x256xf32, #tpu.memory_space<vmem>>, vector<1x3x256xf32>,
    return
  }
  func.func @transform_0(%arg0: i32, %arg1: i32) -> (i32, i32, i32) {
    %c0_i32 = arith.constant 0 : i32
    %c0_i32_0 = arith.constant 0 : i32
    return %arg0, %c0_i32, %arg1 : i32, i32, i32
  }
  func.func @transform_1(%arg0: i32, %arg1: i32) -> (i32, i32, i32) {
    %c0_i32 = arith.constant 0 : i32
    %c0_i32_0 = arith.constant 0 : i32
    %c0_i32_1 = arith.constant 0 : i32
    return %arg0, %c0_i32, %c0_i32_0 : i32, i32, i32
  }
  func.func @transform_2(%arg0: i32, %arg1: i32) -> (i32, i32, i32) {
    %c0_i32 = arith.constant 0 : i32
    %c0_i32_0 = arith.constant 0 : i32
    return %arg0, %c0_i32, %arg1 : i32, i32, i32
  }
}

</mosaic_0001>

<llo_original>
// kernel: _lambda_.4
$region0: #{_lambda_.4}
  #allocation0 [shape = 'u32[]', space=smem, size = 0x4, offset = 0x4, fixed_abs, tag = 'smem constant byte address 0x4 - core index']
  #allocation1 [shape = 'u32[144,128]{1,0:T(1,128)}', space=vmem, size = 0x12000, scoped, tag = 'internal scratch']
  %s0 = inlined_call_operand.vmem [shape: f32[2,6,6,2], index: 0, kind: input, shape index: {}]
  %s1 = inlined_call_operand.vmem [shape: f32[2,16,576], index: 1, kind: input, shape index: {}]
  %s2 = inlined_call_operand.vmem [shape: f32[2,16,128], index: 2, kind: output, shape index: {}]
  %s3 = sld [smem:[#allocation0]]
  $region41: #{_lambda_.4} parent=0
    _
  %s5 = ssub.s32 1, %s3
  %s6 = scalar_select 0, %s5, %s3
  loop: start=0, step=1, limit=4
  $region2: #{_lambda_.4} parent=0 // loop_pre_header
    _
  $region3: #{_lambda_.4} parent=0 // loop_header
    %s8 = sphi 0, %s12
    %p9 = scmp.ge.s32.totalorder %s8, 4
    %s18 = sphi 0, %s20
    %s21 = sphi 0, %s18
    %s22 = sphi 0, %s21
    %s38 = sphi 0, %s22
    %s44 = sphi 0, %s46
    %s47 = sphi 0, %s44
    %s48 = sphi 0, %s47
    %s64 = sphi 0, %s48
    %s70 = sphi 0, %s72
    %s73 = sphi 0, %s70
    %s74 = sphi 0, %s73
    %s90 = sphi 0, %s74
  $region4: #{_lambda_.4} parent=0 // loop_header_branch
    %11 = sbr.rel (%p9) target = $region8
  $region5: #{_lambda_.4} parent=0 // loop_body
    %s13 = ssub.s32 %s8, 1
    %s14 = ssub.s32 %s8, 2
    %s15 = sadd.s32 %s8, 1
    %s16 = ssub.s32 %s8, %s15
    %p17 = scmp.eq.s32.totalorder %s16, 0
    %s19 = sadd.s32 %s18, 1
    %s20 = scalar_select %p17, %s18, %s19
    %p23 = pneg %p17
    %p24 = scmp.eq.s32.totalorder %s8, 1
    %p25 = por %p23, %p24
    %p26 = scmp.ne.s32.totalorder %s18, %s21
    %p27 = scmp.eq.s32.totalorder %s8, 0
    %p28 = por %p26, %p27
    %p29 = scmp.ne.s32.totalorder %s18, %s21
    %p30 = scmp.eq.s32.totalorder %s13, 1
    %p31 = por %p29, %p30
    %p32 = scmp.ne.s32.totalorder %s21, %s22
    %p33 = scmp.eq.s32.totalorder %s13, 0
    %p34 = por %p32, %p33
    %p35 = scmp.ne.s32.totalorder %s21, %s22
    %p36 = scmp.eq.s32.totalorder %s14, 1
    %p37 = por %p35, %p36
    %p39 = scmp.ne.s32.totalorder %s22, %s38
    %p40 = scmp.eq.s32.totalorder %s14, 0
    %p41 = por %p39, %p40
    %s42 = ssub.s32 %s8, %s15
    %p43 = scmp.eq.s32.totalorder %s42, 0
    %s45 = sadd.s32 %s44, 1
    %s46 = scalar_select %p43, %s44, %s45
    %p49 = pneg %p43
    %p50 = scmp.eq.s32.totalorder %s8, 1
    %p51 = por %p49, %p50
    %p52 = scmp.ne.s32.totalorder %s44, %s47
    %p53 = scmp.eq.s32.totalorder %s8, 0
    %p54 = por %p52, %p53
    %p55 = scmp.ne.s32.totalorder %s44, %s47
    %p56 = scmp.eq.s32.totalorder %s13, 1
    %p57 = por %p55, %p56
    %p58 = scmp.ne.s32.totalorder %s47, %s48
    %p59 = scmp.eq.s32.totalorder %s13, 0
    %p60 = por %p58, %p59
    %p61 = scmp.ne.s32.totalorder %s47, %s48
    %p62 = scmp.eq.s32.totalorder %s14, 1
    %p63 = por %p61, %p62
    %p65 = scmp.ne.s32.totalorder %s48, %s64
    %p66 = scmp.eq.s32.totalorder %s14, 0
    %p67 = por %p65, %p66
    %s68 = ssub.s32 %s8, %s15
    %p69 = scmp.eq.s32.totalorder %s68, 0
    %s71 = sadd.s32 %s70, 1
    %s72 = scalar_select %p69, %s70, %s71
    %p75 = pneg %p69
    %p76 = scmp.eq.s32.totalorder %s8, 1
    %p77 = por %p75, %p76
    %p78 = scmp.ne.s32.totalorder %s70, %s73
    %p79 = scmp.eq.s32.totalorder %s8, 0
    %p80 = por %p78, %p79
    %p81 = scmp.ne.s32.totalorder %s70, %s73
    %p82 = scmp.eq.s32.totalorder %s13, 1
    %p83 = por %p81, %p82
    %p84 = scmp.ne.s32.totalorder %s73, %s74
    %p85 = scmp.eq.s32.totalorder %s13, 0
    %p86 = por %p84, %p85
    %p87 = scmp.ne.s32.totalorder %s73, %s74
    %p88 = scmp.eq.s32.totalorder %s14, 1
    %p89 = por %p87, %p88
    %p91 = scmp.ne.s32.totalorder %s74, %s90
    %p92 = scmp.eq.s32.totalorder %s14, 0
    %p93 = por %p91, %p92
    %p94 = scmp.le.s32.totalorder 1, %s8
    %p95 = scmp.lt.s32.totalorder %s8, 3
    %p96 = pnand %p94, %p95
    %p97 = pneg %p96
    // Predicated region
    $region9: #{_lambda_.4} parent=5 // pred_check
      _
    $region10: #{_lambda_.4} parent=5 // pred_check_branch
      %99 = sbr.rel (%p96) target = $region12
    $region11: #{_lambda_.4} parent=5 // pred_region
      %s100 = ssub.s32 %s8, 1
    $region12: #{_lambda_.4} parent=5 // pred_fallthru
      _
    %p101 = scmp.lt.s32.totalorder %s8, 2
    // Predicated region
    $region13: #{_lambda_.4} parent=5 // pred_check
      %p102 = pneg %p101
    $region14: #{_lambda_.4} parent=5 // pred_check_branch
      %104 = sbr.rel (%p102) target = $region16
    $region15: #{_lambda_.4} parent=5 // pred_region
      // Predicated region
      $region17: #{_lambda_.4} parent=15 // pred_check
        %p105 = pneg %p28
      $region18: #{_lambda_.4} parent=15 // pred_check_branch
        %107 = sbr.rel (%p105) target = $region20
      $region19: #{_lambda_.4} parent=15 // pred_region
        %p108 = scmp.lt.s32.totalorder %s8, 1
        %s109 = scalar_select %p108, %s8, 1
        %s110 = smul.addr %s109, 6
        %s111 = smul.addr %s110, 8
        %s112 = scalar_lea.vmem %s0, %s111
      $region20: #{_lambda_.4} parent=15 // pred_fallthru
        _
      // Predicated region
      $region21: #{_lambda_.4} parent=15 // pred_check
        %p113 = pneg %p54
      $region22: #{_lambda_.4} parent=15 // pred_check_branch
        %115 = sbr.rel (%p113) target = $region24
      $region23: #{_lambda_.4} parent=15 // pred_region
        %p116 = scmp.lt.s32.totalorder %s8, 1
        %s117 = scalar_select %p116, %s8, 1
        %s118 = smul.addr %s117, 10
        %s119 = smul.addr %s118, 8
        %s120 = scalar_lea.vmem %s1, %s119
      $region24: #{_lambda_.4} parent=15 // pred_fallthru
        _
    $region16: #{_lambda_.4} parent=5 // pred_fallthru
      _
    %p121 = scmp.le.s32.totalorder 1, %s8
    %p122 = scmp.lt.s32.totalorder %s8, 3
    %p123 = pnand %p121, %p122
    %p124 = pneg %p123
    // Predicated region
    $region25: #{_lambda_.4} parent=5 // pred_check
      _
    $region26: #{_lambda_.4} parent=5 // pred_check_branch
      %126 = sbr.rel (%p123) target = $region28
    $region27: #{_lambda_.4} parent=5 // pred_region
      %s127 = ssub.s32 %s8, 1
      %p128 = scmp.lt.s32.totalorder %s13, 1
      %s129 = scalar_select %p128, %s13, 1
      %s130 = smul.addr %s129, 6
      %s131 = smul.addr %s130, 8
      %s132 = scalar_lea.vmem %s0, %s131
      %p133 = pneg %p34
      %p134 = pneg %p31
      %p135 = scmp.lt.s32.totalorder %s13, 1
      %s136 = scalar_select %p135, %s13, 1
      %s137 = smul.addr %s136, 10
      %s138 = smul.addr %s137, 8
      %s139 = scalar_lea.vmem %s1, %s138
      %p140 = pneg %p60
      %p141 = pneg %p57
      %p142 = pneg %p86
      %p143 = pneg %p83
      %p144 = scmp.lt.s32.totalorder %s13, 1
      %s145 = scalar_select %p144, %s13, 1
      %s146 = smul.addr %s145, 2
      %s147 = smul.addr %s146, 8
      %s148 = scalar_lea.vmem %s2, %s147
      %p149 = scmp.lt.s32.totalorder %s13, 1
      %s150 = scalar_select %p149, %s13, 1
      %s151 = smul.addr %s150, 6
      %s152 = smul.addr %s151, 8
      %s153 = scalar_lea.vmem %s0, %s152
      %p154 = scmp.lt.s32.totalorder %s13, 1
      %s155 = scalar_select %p154, %s13, 1
      %s156 = smul.addr %s155, 10
      %s157 = smul.addr %s156, 8
      %s158 = scalar_lea.vmem %s1, %s157
      %p159 = scmp.lt.s32.totalorder %s13, 1
      %s160 = scalar_select %p159, %s13, 1
      %s161 = smul.addr %s160, 2
      %s162 = smul.addr %s161, 8
      %s163 = scalar_lea.vmem %s2, %s162
      %v164 = vld [vmem:[%s158] sm:$0xff]
      %v165 = vld [vmem:[%s158 + $0x8] sm:$0xff]
      %v166 = vld [vmem:[%s158 + $0x10] sm:$0xff]
      %v167 = vld [vmem:[%s158 + $0x18] sm:$0xff]
      %v168 = vld [vmem:[%s158 + $0x20] sm:$0xff]
      %v169 = vld [vmem:[%s158 + $0x28] sm:$0xff]
      %v170 = vld [vmem:[%s158 + $0x30] sm:$0xff]
      %v171 = vld [vmem:[%s158 + $0x38] sm:$0xff]
      %v172 = vld [vmem:[%s158 + $0x40] sm:$0xff]
      %v173 = vld [vmem:[%s158 + $0x48] sm:$0xff]
      %176 = vrot.lane.b32.xlu0 %v164, 64
      %v177 = vpop.permute.xlu0 %176
      %178 = vrot.lane.b32.xlu0 %v169, 64
      %v179 = vpop.permute.xlu0 %178
      %v182 = vmax.f32 %v164, %v177
      %v183 = vmax.f32 %v169, %v179
      %v184 = vmax.f32 %v182, %v165
      %v185 = vmax.f32 %v183, %v170
      %188 = vrot.lane.b32.xlu0 %v165, 64
      %v189 = vpop.permute.xlu0 %188
      %190 = vrot.lane.b32.xlu0 %v170, 64
      %v191 = vpop.permute.xlu0 %190
      %v194 = vmax.f32 %v184, %v189
      %v195 = vmax.f32 %v185, %v191
      %v196 = vmax.f32 %v194, %v166
      %v197 = vmax.f32 %v195, %v171
      %200 = vrot.lane.b32.xlu0 %v166, 64
      %v201 = vpop.permute.xlu0 %200
      %202 = vrot.lane.b32.xlu0 %v171, 64
      %v203 = vpop.permute.xlu0 %202
      %v206 = vmax.f32 %v196, %v201
      %v207 = vmax.f32 %v197, %v203
      %v208 = vmax.f32 %v206, %v167
      %v209 = vmax.f32 %v207, %v172
      %212 = vrot.lane.b32.xlu0 %v167, 64
      %v213 = vpop.permute.xlu0 %212
      %214 = vrot.lane.b32.xlu0 %v172, 64
      %v215 = vpop.permute.xlu0 %214
      %v218 = vmax.f32 %v208, %v213
      %v219 = vmax.f32 %v209, %v215
      %v220 = vmax.f32 %v218, %v168
      %v221 = vmax.f32 %v219, %v173
      %v222 = vsub.f32 %v164, %v220
      %v223 = vsub.f32 %v169, %v221
      %v224 = vmul.f32 %v222, 1.442695
      %v225 = vpow.pop %v224
      %v226 = vmul.f32 %v223, 1.442695
      %v227 = vpow.pop %v226
      %230 = vrot.lane.b32.xlu0 %v220, 64
      %v231 = vpop.permute.xlu0 %230
      %232 = vrot.lane.b32.xlu0 %v221, 64
      %v233 = vpop.permute.xlu0 %232
      %v236 = vsub.f32 %v164, %v231
      %v237 = vsub.f32 %v169, %v233
      %v238 = vmul.f32 %v236, 1.442695
      %v239 = vpow.pop %v238
      %v240 = vmul.f32 %v237, 1.442695
      %v241 = vpow.pop %v240
      %v242 = vsub.f32 %v165, %v220
      %v243 = vsub.f32 %v170, %v221
      %v244 = vmul.f32 %v242, 1.442695
      %v245 = vpow.pop %v244
      %v246 = vmul.f32 %v243, 1.442695
      %v247 = vpow.pop %v246
      %v248 = vsub.f32 %v165, %v231
      %v249 = vsub.f32 %v170, %v233
      %v250 = vmul.f32 %v248, 1.442695
      %v251 = vpow.pop %v250
      %v252 = vmul.f32 %v249, 1.442695
      %v253 = vpow.pop %v252
      %v254 = vsub.f32 %v166, %v220
      %v255 = vsub.f32 %v171, %v221
      %v256 = vmul.f32 %v254, 1.442695
      %v257 = vpow.pop %v256
      %v258 = vmul.f32 %v255, 1.442695
      %v259 = vpow.pop %v258
      %v260 = vsub.f32 %v166, %v231
      %v261 = vsub.f32 %v171, %v233
      %v262 = vmul.f32 %v260, 1.442695
      %v263 = vpow.pop %v262
      %v264 = vmul.f32 %v261, 1.442695
      %v265 = vpow.pop %v264
      %v266 = vsub.f32 %v167, %v220
      %v267 = vsub.f32 %v172, %v221
      %v268 = vmul.f32 %v266, 1.442695
      %v269 = vpow.pop %v268
      %v270 = vmul.f32 %v267, 1.442695
      %v271 = vpow.pop %v270
      %v272 = vsub.f32 %v167, %v231
      %v273 = vsub.f32 %v172, %v233
      %v274 = vmul.f32 %v272, 1.442695
      %v275 = vpow.pop %v274
      %v276 = vmul.f32 %v273, 1.442695
      %v277 = vpow.pop %v276
      %v278 = vsub.f32 %v168, %v220
      %v279 = vsub.f32 %v173, %v221
      %v280 = vmul.f32 %v278, 1.442695
      %v281 = vpow.pop %v280
      %v282 = vmul.f32 %v279, 1.442695
      %v283 = vpow.pop %v282
      %286 = vrot.lane.b32.xlu0 %v239, 64
      %v287 = vpop.permute.xlu0 %286
      %288 = vrot.lane.b32.xlu0 %v241, 64
      %v289 = vpop.permute.xlu0 %288
      %v292 = vadd.f32 %v225, %v287
      %v293 = vadd.f32 %v227, %v289
      %v294 = vadd.f32 %v292, %v245
      %v295 = vadd.f32 %v293, %v247
      %298 = vrot.lane.b32.xlu0 %v251, 64
      %v299 = vpop.permute.xlu0 %298
      %300 = vrot.lane.b32.xlu0 %v253, 64
      %v301 = vpop.permute.xlu0 %300
      %v304 = vadd.f32 %v294, %v299
      %v305 = vadd.f32 %v295, %v301
      %v306 = vadd.f32 %v304, %v257
      %v307 = vadd.f32 %v305, %v259
      %310 = vrot.lane.b32.xlu0 %v263, 64
      %v311 = vpop.permute.xlu0 %310
      %312 = vrot.lane.b32.xlu0 %v265, 64
      %v313 = vpop.permute.xlu0 %312
      %v316 = vadd.f32 %v306, %v311
      %v317 = vadd.f32 %v307, %v313
      %v318 = vadd.f32 %v316, %v269
      %v319 = vadd.f32 %v317, %v271
      %322 = vrot.lane.b32.xlu0 %v275, 64
      %v323 = vpop.permute.xlu0 %322
      %324 = vrot.lane.b32.xlu0 %v277, 64
      %v325 = vpop.permute.xlu0 %324
      %v328 = vadd.f32 %v318, %v323
      %v329 = vadd.f32 %v319, %v325
      %v330 = vadd.f32 %v328, %v281
      %v331 = vadd.f32 %v329, %v283
      %v332 = vrcp.pop %v330
      %v333 = vrcp.pop %v331
      %v334 = vld [vmem:[%s153] sm:$0xf]
      %v335 = vld [vmem:[%s153 + $0x8] sm:$0xf]
      %v336 = vld [vmem:[%s153 + $0x10] sm:$0xf]
      %v337 = vld [vmem:[%s153 + $0x18] sm:$0xf]
      %v338 = vmul.f32 %v225, %v332
      %v339 = vmul.f32 %v227, %v333
      %341 = vset.pattern.permute.xlu0 0
      %342 = vperm.xlu0 %341, %v334
      %v343 = vpop.permute.xlu0 %342
      %v346 = vunpack.c.l.s4 839922192
      %v347 = vunpack.c.0.s8 %v346
      %v348 = vlaneseq
      %v349 = vshrl.u32 %v348, 7
      %v350 = vsub.s32 %v347, %v349
      %v351 = vrot.slane %v343, %v350
      %353 = vset.pattern.permute.xlu0 0
      %354 = vperm.xlu0 %353, %v335
      %v355 = vpop.permute.xlu0 %354
      %v358 = vunpack.c.l.s4 839922192
      %v359 = vunpack.c.0.s8 %v358
      %v360 = vlaneseq
      %v361 = vshrl.u32 %v360, 7
      %v362 = vsub.s32 %v359, %v361
      %v363 = vrot.slane %v355, %v362
      %365 = vset.pattern.permute.xlu0 0
      %366 = vperm.xlu0 %365, %v336
      %v367 = vpop.permute.xlu0 %366
      %v370 = vunpack.c.l.s4 839922192
      %v371 = vunpack.c.0.s8 %v370
      %v372 = vlaneseq
      %v373 = vshrl.u32 %v372, 7
      %v374 = vsub.s32 %v371, %v373
      %v375 = vrot.slane %v367, %v374
      %377 = vset.pattern.permute.xlu0 0
      %378 = vperm.xlu0 %377, %v337
      %v379 = vpop.permute.xlu0 %378
      %v382 = vunpack.c.l.s4 839922192
      %v383 = vunpack.c.0.s8 %v382
      %v384 = vlaneseq
      %v385 = vshrl.u32 %v384, 7
      %v386 = vsub.s32 %v383, %v385
      %v387 = vrot.slane %v379, %v386
      %v392 = vcombine.low %v351, %v363
      %v393 = vcombine.low %v375, %v387
      %v396 = vmul.f32 %v338, %v392
      %v397 = vmul.f32 %v339, %v393
      %v398 = vadd.f32 %v396, 0.0
      %v399 = vadd.f32 %v397, 0.0
      %400 = vset.pattern.permute.xlu0 1
      %401 = vperm.xlu0 %400, %v334
      %v402 = vpop.permute.xlu0 %401
      %v405 = vunpack.c.l.s4 839922192
      %v406 = vunpack.c.0.s8 %v405
      %v407 = vlaneseq
      %v408 = vshrl.u32 %v407, 7
      %v409 = vsub.s32 %v406, %v408
      %v410 = vrot.slane %v402, %v409
      %411 = vset.pattern.permute.xlu0 1
      %412 = vperm.xlu0 %411, %v335
      %v413 = vpop.permute.xlu0 %412
      %v416 = vunpack.c.l.s4 839922192
      %v417 = vunpack.c.0.s8 %v416
      %v418 = vlaneseq
      %v419 = vshrl.u32 %v418, 7
      %v420 = vsub.s32 %v417, %v419
      %v421 = vrot.slane %v413, %v420
      %422 = vset.pattern.permute.xlu0 1
      %423 = vperm.xlu0 %422, %v336
      %v424 = vpop.permute.xlu0 %423
      %v427 = vunpack.c.l.s4 839922192
      %v428 = vunpack.c.0.s8 %v427
      %v429 = vlaneseq
      %v430 = vshrl.u32 %v429, 7
      %v431 = vsub.s32 %v428, %v430
      %v432 = vrot.slane %v424, %v431
      %433 = vset.pattern.permute.xlu0 1
      %434 = vperm.xlu0 %433, %v337
      %v435 = vpop.permute.xlu0 %434
      %v438 = vunpack.c.l.s4 839922192
      %v439 = vunpack.c.0.s8 %v438
      %v440 = vlaneseq
      %v441 = vshrl.u32 %v440, 7
      %v442 = vsub.s32 %v439, %v441
      %v443 = vrot.slane %v435, %v442
      %v448 = vcombine.low %v410, %v421
      %v449 = vcombine.low %v432, %v443
      %v452 = vmul.f32 %v338, %v448
      %v453 = vmul.f32 %v339, %v449
      %v454 = vadd.f32 %v452, 0.0
      %v455 = vadd.f32 %v453, 0.0
      %v456 = vld [vmem:[%s153 + $0x1] sm:$0xf]
      %v457 = vld [vmem:[%s153 + $0x9] sm:$0xf]
      %v458 = vld [vmem:[%s153 + $0x11] sm:$0xf]
      %v459 = vld [vmem:[%s153 + $0x19] sm:$0xf]
      %462 = vrot.lane.b32.xlu0 %v332, 64
      %v463 = vpop.permute.xlu0 %462
      %464 = vrot.lane.b32.xlu0 %v333, 64
      %v465 = vpop.permute.xlu0 %464
      %v468 = vmul.f32 %v239, %v463
      %v469 = vmul.f32 %v241, %v465
      %471 = vset.pattern.permute.xlu0 0
      %472 = vperm.xlu0 %471, %v456
      %v473 = vpop.permute.xlu0 %472
      %v476 = vunpack.c.l.s4 839922192
      %v477 = vunpack.c.0.s8 %v476
      %v478 = vlaneseq
      %v479 = vshrl.u32 %v478, 7
      %v480 = vsub.s32 %v477, %v479
      %v481 = vrot.slane %v473, %v480
      %483 = vset.pattern.permute.xlu0 0
      %484 = vperm.xlu0 %483, %v457
      %v485 = vpop.permute.xlu0 %484
      %v488 = vunpack.c.l.s4 839922192
      %v489 = vunpack.c.0.s8 %v488
      %v490 = vlaneseq
      %v491 = vshrl.u32 %v490, 7
      %v492 = vsub.s32 %v489, %v491
      %v493 = vrot.slane %v485, %v492
      %495 = vset.pattern.permute.xlu0 0
      %496 = vperm.xlu0 %495, %v458
      %v497 = vpop.permute.xlu0 %496
      %v500 = vunpack.c.l.s4 839922192
      %v501 = vunpack.c.0.s8 %v500
      %v502 = vlaneseq
      %v503 = vshrl.u32 %v502, 7
      %v504 = vsub.s32 %v501, %v503
      %v505 = vrot.slane %v497, %v504
      %507 = vset.pattern.permute.xlu0 0
      %508 = vperm.xlu0 %507, %v459
      %v509 = vpop.permute.xlu0 %508
      %v512 = vunpack.c.l.s4 839922192
      %v513 = vunpack.c.0.s8 %v512
      %v514 = vlaneseq
      %v515 = vshrl.u32 %v514, 7
      %v516 = vsub.s32 %v513, %v515
      %v517 = vrot.slane %v509, %v516
      %v522 = vcombine.low %v481, %v493
      %v523 = vcombine.low %v505, %v517
      %524 = vrot.lane.b32.xlu0 %v522, 64
      %v525 = vpop.permute.xlu0 %524
      %526 = vrot.lane.b32.xlu0 %v523, 64
      %v527 = vpop.permute.xlu0 %526
      %v530 = vmul.f32 %v468, %v525
      %v531 = vmul.f32 %v469, %v527
      %534 = vrot.lane.b32.xlu0 %v530, 64
      %v535 = vpop.permute.xlu0 %534
      %536 = vrot.lane.b32.xlu0 %v531, 64
      %v537 = vpop.permute.xlu0 %536
      %v540 = vadd.f32 %v398, %v535
      %v541 = vadd.f32 %v399, %v537
      %542 = vset.pattern.permute.xlu0 1
      %543 = vperm.xlu0 %542, %v456
      %v544 = vpop.permute.xlu0 %543
      %v547 = vunpack.c.l.s4 839922192
      %v548 = vunpack.c.0.s8 %v547
      %v549 = vlaneseq
      %v550 = vshrl.u32 %v549, 7
      %v551 = vsub.s32 %v548, %v550
      %v552 = vrot.slane %v544, %v551
      %553 = vset.pattern.permute.xlu0 1
      %554 = vperm.xlu0 %553, %v457
      %v555 = vpop.permute.xlu0 %554
      %v558 = vunpack.c.l.s4 839922192
      %v559 = vunpack.c.0.s8 %v558
      %v560 = vlaneseq
      %v561 = vshrl.u32 %v560, 7
      %v562 = vsub.s32 %v559, %v561
      %v563 = vrot.slane %v555, %v562
      %564 = vset.pattern.permute.xlu0 1
      %565 = vperm.xlu0 %564, %v458
      %v566 = vpop.permute.xlu0 %565
      %v569 = vunpack.c.l.s4 839922192
      %v570 = vunpack.c.0.s8 %v569
      %v571 = vlaneseq
      %v572 = vshrl.u32 %v571, 7
      %v573 = vsub.s32 %v570, %v572
      %v574 = vrot.slane %v566, %v573
      %575 = vset.pattern.permute.xlu0 1
      %576 = vperm.xlu0 %575, %v459
      %v577 = vpop.permute.xlu0 %576
      %v580 = vunpack.c.l.s4 839922192
      %v581 = vunpack.c.0.s8 %v580
      %v582 = vlaneseq
      %v583 = vshrl.u32 %v582, 7
      %v584 = vsub.s32 %v581, %v583
      %v585 = vrot.slane %v577, %v584
      %v590 = vcombine.low %v552, %v563
      %v591 = vcombine.low %v574, %v585
      %592 = vrot.lane.b32.xlu0 %v590, 64
      %v593 = vpop.permute.xlu0 %592
      %594 = vrot.lane.b32.xlu0 %v591, 64
      %v595 = vpop.permute.xlu0 %594
      %v598 = vmul.f32 %v468, %v593
      %v599 = vmul.f32 %v469, %v595
      %602 = vrot.lane.b32.xlu0 %v598, 64
      %v603 = vpop.permute.xlu0 %602
      %604 = vrot.lane.b32.xlu0 %v599, 64
      %v605 = vpop.permute.xlu0 %604
      %v608 = vadd.f32 %v454, %v603
      %v609 = vadd.f32 %v455, %v605
      %v610 = vld [vmem:[%s153 + $0x2] sm:$0xf]
      %v611 = vld [vmem:[%s153 + $0xa] sm:$0xf]
      %v612 = vld [vmem:[%s153 + $0x12] sm:$0xf]
      %v613 = vld [vmem:[%s153 + $0x1a] sm:$0xf]
      %v614 = vmul.f32 %v245, %v332
      %v615 = vmul.f32 %v247, %v333
      %617 = vset.pattern.permute.xlu0 0
      %618 = vperm.xlu0 %617, %v610
      %v619 = vpop.permute.xlu0 %618
      %v622 = vunpack.c.l.s4 839922192
      %v623 = vunpack.c.0.s8 %v622
      %v624 = vlaneseq
      %v625 = vshrl.u32 %v624, 7
      %v626 = vsub.s32 %v623, %v625
      %v627 = vrot.slane %v619, %v626
      %629 = vset.pattern.permute.xlu0 0
      %630 = vperm.xlu0 %629, %v611
      %v631 = vpop.permute.xlu0 %630
      %v634 = vunpack.c.l.s4 839922192
      %v635 = vunpack.c.0.s8 %v634
      %v636 = vlaneseq
      %v637 = vshrl.u32 %v636, 7
      %v638 = vsub.s32 %v635, %v637
      %v639 = vrot.slane %v631, %v638
      %641 = vset.pattern.permute.xlu0 0
      %642 = vperm.xlu0 %641, %v612
      %v643 = vpop.permute.xlu0 %642
      %v646 = vunpack.c.l.s4 839922192
      %v647 = vunpack.c.0.s8 %v646
      %v648 = vlaneseq
      %v649 = vshrl.u32 %v648, 7
      %v650 = vsub.s32 %v647, %v649
      %v651 = vrot.slane %v643, %v650
      %653 = vset.pattern.permute.xlu0 0
      %654 = vperm.xlu0 %653, %v613
      %v655 = vpop.permute.xlu0 %654
      %v658 = vunpack.c.l.s4 839922192
      %v659 = vunpack.c.0.s8 %v658
      %v660 = vlaneseq
      %v661 = vshrl.u32 %v660, 7
      %v662 = vsub.s32 %v659, %v661
      %v663 = vrot.slane %v655, %v662
      %v668 = vcombine.low %v627, %v639
      %v669 = vcombine.low %v651, %v663
      %v672 = vmul.f32 %v614, %v668
      %v673 = vmul.f32 %v615, %v669
      %v674 = vadd.f32 %v540, %v672
      %v675 = vadd.f32 %v541, %v673
      %676 = vset.pattern.permute.xlu0 1
      %677 = vperm.xlu0 %676, %v610
      %v678 = vpop.permute.xlu0 %677
      %v681 = vunpack.c.l.s4 839922192
      %v682 = vunpack.c.0.s8 %v681
      %v683 = vlaneseq
      %v684 = vshrl.u32 %v683, 7
      %v685 = vsub.s32 %v682, %v684
      %v686 = vrot.slane %v678, %v685
      %687 = vset.pattern.permute.xlu0 1
      %688 = vperm.xlu0 %687, %v611
      %v689 = vpop.permute.xlu0 %688
      %v692 = vunpack.c.l.s4 839922192
      %v693 = vunpack.c.0.s8 %v692
      %v694 = vlaneseq
      %v695 = vshrl.u32 %v694, 7
      %v696 = vsub.s32 %v693, %v695
      %v697 = vrot.slane %v689, %v696
      %698 = vset.pattern.permute.xlu0 1
      %699 = vperm.xlu0 %698, %v612
      %v700 = vpop.permute.xlu0 %699
      %v703 = vunpack.c.l.s4 839922192
      %v704 = vunpack.c.0.s8 %v703
      %v705 = vlaneseq
      %v706 = vshrl.u32 %v705, 7
      %v707 = vsub.s32 %v704, %v706
      %v708 = vrot.slane %v700, %v707
      %709 = vset.pattern.permute.xlu0 1
      %710 = vperm.xlu0 %709, %v613
      %v711 = vpop.permute.xlu0 %710
      %v714 = vunpack.c.l.s4 839922192
      %v715 = vunpack.c.0.s8 %v714
      %v716 = vlaneseq
      %v717 = vshrl.u32 %v716, 7
      %v718 = vsub.s32 %v715, %v717
      %v719 = vrot.slane %v711, %v718
      %v724 = vcombine.low %v686, %v697
      %v725 = vcombine.low %v708, %v719
      %v728 = vmul.f32 %v614, %v724
      %v729 = vmul.f32 %v615, %v725
      %v730 = vadd.f32 %v608, %v728
      %v731 = vadd.f32 %v609, %v729
      %s732 = scalar_lea.vmem %s153, 8
      %v733 = vld [vmem:[%s732] sm:$0xf]
      %v734 = vld [vmem:[%s732 + $0x8] sm:$0xf]
      %v735 = vld [vmem:[%s732 + $0x10] sm:$0xf]
      %v736 = vld [vmem:[%s732 + $0x18] sm:$0xf]
      %v737 = vmul.f32 %v251, %v463
      %v738 = vmul.f32 %v253, %v465
      %740 = vset.pattern.permute.xlu0 0
      %741 = vperm.xlu0 %740, %v733
      %v742 = vpop.permute.xlu0 %741
      %v745 = vunpack.c.l.s4 839922192
      %v746 = vunpack.c.0.s8 %v745
      %v747 = vlaneseq
      %v748 = vshrl.u32 %v747, 7
      %v749 = vsub.s32 %v746, %v748
      %v750 = vrot.slane %v742, %v749
      %752 = vset.pattern.permute.xlu0 0
      %753 = vperm.xlu0 %752, %v734
      %v754 = vpop.permute.xlu0 %753
      %v757 = vunpack.c.l.s4 839922192
      %v758 = vunpack.c.0.s8 %v757
      %v759 = vlaneseq
      %v760 = vshrl.u32 %v759, 7
      %v761 = vsub.s32 %v758, %v760
      %v762 = vrot.slane %v754, %v761
      %764 = vset.pattern.permute.xlu0 0
      %765 = vperm.xlu0 %764, %v735
      %v766 = vpop.permute.xlu0 %765
      %v769 = vunpack.c.l.s4 839922192
      %v770 = vunpack.c.0.s8 %v769
      %v771 = vlaneseq
      %v772 = vshrl.u32 %v771, 7
      %v773 = vsub.s32 %v770, %v772
      %v774 = vrot.slane %v766, %v773
      %776 = vset.pattern.permute.xlu0 0
      %777 = vperm.xlu0 %776, %v736
      %v778 = vpop.permute.xlu0 %777
      %v781 = vunpack.c.l.s4 839922192
      %v782 = vunpack.c.0.s8 %v781
      %v783 = vlaneseq
      %v784 = vshrl.u32 %v783, 7
      %v785 = vsub.s32 %v782, %v784
      %v786 = vrot.slane %v778, %v785
      %v791 = vcombine.low %v750, %v762
      %v792 = vcombine.low %v774, %v786
      %793 = vrot.lane.b32.xlu0 %v791, 64
      %v794 = vpop.permute.xlu0 %793
      %795 = vrot.lane.b32.xlu0 %v792, 64
      %v796 = vpop.permute.xlu0 %795
      %v799 = vmul.f32 %v737, %v794
      %v800 = vmul.f32 %v738, %v796
      %803 = vrot.lane.b32.xlu0 %v799, 64
      %v804 = vpop.permute.xlu0 %803
      %805 = vrot.lane.b32.xlu0 %v800, 64
      %v806 = vpop.permute.xlu0 %805
      %v809 = vadd.f32 %v674, %v804
      %v810 = vadd.f32 %v675, %v806
      %811 = vset.pattern.permute.xlu0 1
      %812 = vperm.xlu0 %811, %v733
      %v813 = vpop.permute.xlu0 %812
      %v816 = vunpack.c.l.s4 839922192
      %v817 = vunpack.c.0.s8 %v816
      %v818 = vlaneseq
      %v819 = vshrl.u32 %v818, 7
      %v820 = vsub.s32 %v817, %v819
      %v821 = vrot.slane %v813, %v820
      %822 = vset.pattern.permute.xlu0 1
      %823 = vperm.xlu0 %822, %v734
      %v824 = vpop.permute.xlu0 %823
      %v827 = vunpack.c.l.s4 839922192
      %v828 = vunpack.c.0.s8 %v827
      %v829 = vlaneseq
      %v830 = vshrl.u32 %v829, 7
      %v831 = vsub.s32 %v828, %v830
      %v832 = vrot.slane %v824, %v831
      %833 = vset.pattern.permute.xlu0 1
      %834 = vperm.xlu0 %833, %v735
      %v835 = vpop.permute.xlu0 %834
      %v838 = vunpack.c.l.s4 839922192
      %v839 = vunpack.c.0.s8 %v838
      %v840 = vlaneseq
      %v841 = vshrl.u32 %v840, 7
      %v842 = vsub.s32 %v839, %v841
      %v843 = vrot.slane %v835, %v842
      %844 = vset.pattern.permute.xlu0 1
      %845 = vperm.xlu0 %844, %v736
      %v846 = vpop.permute.xlu0 %845
      %v849 = vunpack.c.l.s4 839922192
      %v850 = vunpack.c.0.s8 %v849
      %v851 = vlaneseq
      %v852 = vshrl.u32 %v851, 7
      %v853 = vsub.s32 %v850, %v852
      %v854 = vrot.slane %v846, %v853
      %v859 = vcombine.low %v821, %v832
      %v860 = vcombine.low %v843, %v854
      %861 = vrot.lane.b32.xlu0 %v859, 64
      %v862 = vpop.permute.xlu0 %861
      %863 = vrot.lane.b32.xlu0 %v860, 64
      %v864 = vpop.permute.xlu0 %863
      %v867 = vmul.f32 %v737, %v862
      %v868 = vmul.f32 %v738, %v864
      %871 = vrot.lane.b32.xlu0 %v867, 64
      %v872 = vpop.permute.xlu0 %871
      %873 = vrot.lane.b32.xlu0 %v868, 64
      %v874 = vpop.permute.xlu0 %873
      %v877 = vadd.f32 %v730, %v872
      %v878 = vadd.f32 %v731, %v874
      %v879 = vld [vmem:[%s732 + $0x1] sm:$0xf]
      %v880 = vld [vmem:[%s732 + $0x9] sm:$0xf]
      %v881 = vld [vmem:[%s732 + $0x11] sm:$0xf]
      %v882 = vld [vmem:[%s732 + $0x19] sm:$0xf]
      %v883 = vmul.f32 %v257, %v332
      %v884 = vmul.f32 %v259, %v333
      %886 = vset.pattern.permute.xlu0 0
      %887 = vperm.xlu0 %886, %v879
      %v888 = vpop.permute.xlu0 %887
      %v891 = vunpack.c.l.s4 839922192
      %v892 = vunpack.c.0.s8 %v891
      %v893 = vlaneseq
      %v894 = vshrl.u32 %v893, 7
      %v895 = vsub.s32 %v892, %v894
      %v896 = vrot.slane %v888, %v895
      %898 = vset.pattern.permute.xlu0 0
      %899 = vperm.xlu0 %898, %v880
      %v900 = vpop.permute.xlu0 %899
      %v903 = vunpack.c.l.s4 839922192
      %v904 = vunpack.c.0.s8 %v903
      %v905 = vlaneseq
      %v906 = vshrl.u32 %v905, 7
      %v907 = vsub.s32 %v904, %v906
      %v908 = vrot.slane %v900, %v907
      %910 = vset.pattern.permute.xlu0 0
      %911 = vperm.xlu0 %910, %v881
      %v912 = vpop.permute.xlu0 %911
      %v915 = vunpack.c.l.s4 839922192
      %v916 = vunpack.c.0.s8 %v915
      %v917 = vlaneseq
      %v918 = vshrl.u32 %v917, 7
      %v919 = vsub.s32 %v916, %v918
      %v920 = vrot.slane %v912, %v919
      %922 = vset.pattern.permute.xlu0 0
      %923 = vperm.xlu0 %922, %v882
      %v924 = vpop.permute.xlu0 %923
      %v927 = vunpack.c.l.s4 839922192
      %v928 = vunpack.c.0.s8 %v927
      %v929 = vlaneseq
      %v930 = vshrl.u32 %v929, 7
      %v931 = vsub.s32 %v928, %v930
      %v932 = vrot.slane %v924, %v931
      %v937 = vcombine.low %v896, %v908
      %v938 = vcombine.low %v920, %v932
      %v941 = vmul.f32 %v883, %v937
      %v942 = vmul.f32 %v884, %v938
      %v943 = vadd.f32 %v809, %v941
      %v944 = vadd.f32 %v810, %v942
      %945 = vset.pattern.permute.xlu0 1
      %946 = vperm.xlu0 %945, %v879
      %v947 = vpop.permute.xlu0 %946
      %v950 = vunpack.c.l.s4 839922192
      %v951 = vunpack.c.0.s8 %v950
      %v952 = vlaneseq
      %v953 = vshrl.u32 %v952, 7
      %v954 = vsub.s32 %v951, %v953
      %v955 = vrot.slane %v947, %v954
      %956 = vset.pattern.permute.xlu0 1
      %957 = vperm.xlu0 %956, %v880
      %v958 = vpop.permute.xlu0 %957
      %v961 = vunpack.c.l.s4 839922192
      %v962 = vunpack.c.0.s8 %v961
      %v963 = vlaneseq
      %v964 = vshrl.u32 %v963, 7
      %v965 = vsub.s32 %v962, %v964
      %v966 = vrot.slane %v958, %v965
      %967 = vset.pattern.permute.xlu0 1
      %968 = vperm.xlu0 %967, %v881
      %v969 = vpop.permute.xlu0 %968
      %v972 = vunpack.c.l.s4 839922192
      %v973 = vunpack.c.0.s8 %v972
      %v974 = vlaneseq
      %v975 = vshrl.u32 %v974, 7
      %v976 = vsub.s32 %v973, %v975
      %v977 = vrot.slane %v969, %v976
      %978 = vset.pattern.permute.xlu0 1
      %979 = vperm.xlu0 %978, %v882
      %v980 = vpop.permute.xlu0 %979
      %v983 = vunpack.c.l.s4 839922192
      %v984 = vunpack.c.0.s8 %v983
      %v985 = vlaneseq
      %v986 = vshrl.u32 %v985, 7
      %v987 = vsub.s32 %v984, %v986
      %v988 = vrot.slane %v980, %v987
      %v993 = vcombine.low %v955, %v966
      %v994 = vcombine.low %v977, %v988
      %v997 = vmul.f32 %v883, %v993
      %v998 = vmul.f32 %v884, %v994
      %v999 = vadd.f32 %v877, %v997
      %v1000 = vadd.f32 %v878, %v998
      %v1001 = vld [vmem:[%s732 + $0x2] sm:$0xf]
      %v1002 = vld [vmem:[%s732 + $0xa] sm:$0xf]
      %v1003 = vld [vmem:[%s732 + $0x12] sm:$0xf]
      %v1004 = vld [vmem:[%s732 + $0x1a] sm:$0xf]
      %v1005 = vmul.f32 %v263, %v463
      %v1006 = vmul.f32 %v265, %v465
      %1008 = vset.pattern.permute.xlu0 0
      %1009 = vperm.xlu0 %1008, %v1001
      %v1010 = vpop.permute.xlu0 %1009
      %v1013 = vunpack.c.l.s4 839922192
      %v1014 = vunpack.c.0.s8 %v1013
      %v1015 = vlaneseq
      %v1016 = vshrl.u32 %v1015, 7
      %v1017 = vsub.s32 %v1014, %v1016
      %v1018 = vrot.slane %v1010, %v1017
      %1020 = vset.pattern.permute.xlu0 0
      %1021 = vperm.xlu0 %1020, %v1002
      %v1022 = vpop.permute.xlu0 %1021
      %v1025 = vunpack.c.l.s4 839922192
      %v1026 = vunpack.c.0.s8 %v1025
      %v1027 = vlaneseq
      %v1028 = vshrl.u32 %v1027, 7
      %v1029 = vsub.s32 %v1026, %v1028
      %v1030 = vrot.slane %v1022, %v1029
      %1032 = vset.pattern.permute.xlu0 0
      %1033 = vperm.xlu0 %1032, %v1003
      %v1034 = vpop.permute.xlu0 %1033
      %v1037 = vunpack.c.l.s4 839922192
      %v1038 = vunpack.c.0.s8 %v1037
      %v1039 = vlaneseq
      %v1040 = vshrl.u32 %v1039, 7
      %v1041 = vsub.s32 %v1038, %v1040
      %v1042 = vrot.slane %v1034, %v1041
      %1044 = vset.pattern.permute.xlu0 0
      %1045 = vperm.xlu0 %1044, %v1004
      %v1046 = vpop.permute.xlu0 %1045
      %v1049 = vunpack.c.l.s4 839922192
      %v1050 = vunpack.c.0.s8 %v1049
      %v1051 = vlaneseq
      %v1052 = vshrl.u32 %v1051, 7
      %v1053 = vsub.s32 %v1050, %v1052
      %v1054 = vrot.slane %v1046, %v1053
      %v1059 = vcombine.low %v1018, %v1030
      %v1060 = vcombine.low %v1042, %v1054
      %1061 = vrot.lane.b32.xlu0 %v1059, 64
      %v1062 = vpop.permute.xlu0 %1061
      %1063 = vrot.lane.b32.xlu0 %v1060, 64
      %v1064 = vpop.permute.xlu0 %1063
      %v1067 = vmul.f32 %v1005, %v1062
      %v1068 = vmul.f32 %v1006, %v1064
      %1071 = vrot.lane.b32.xlu0 %v1067, 64
      %v1072 = vpop.permute.xlu0 %1071
      %1073 = vrot.lane.b32.xlu0 %v1068, 64
      %v1074 = vpop.permute.xlu0 %1073
      %v1077 = vadd.f32 %v943, %v1072
      %v1078 = vadd.f32 %v944, %v1074
      %1079 = vset.pattern.permute.xlu0 1
      %1080 = vperm.xlu0 %1079, %v1001
      %v1081 = vpop.permute.xlu0 %1080
      %v1084 = vunpack.c.l.s4 839922192
      %v1085 = vunpack.c.0.s8 %v1084
      %v1086 = vlaneseq
      %v1087 = vshrl.u32 %v1086, 7
      %v1088 = vsub.s32 %v1085, %v1087
      %v1089 = vrot.slane %v1081, %v1088
      %1090 = vset.pattern.permute.xlu0 1
      %1091 = vperm.xlu0 %1090, %v1002
      %v1092 = vpop.permute.xlu0 %1091
      %v1095 = vunpack.c.l.s4 839922192
      %v1096 = vunpack.c.0.s8 %v1095
      %v1097 = vlaneseq
      %v1098 = vshrl.u32 %v1097, 7
      %v1099 = vsub.s32 %v1096, %v1098
      %v1100 = vrot.slane %v1092, %v1099
      %1101 = vset.pattern.permute.xlu0 1
      %1102 = vperm.xlu0 %1101, %v1003
      %v1103 = vpop.permute.xlu0 %1102
      %v1106 = vunpack.c.l.s4 839922192
      %v1107 = vunpack.c.0.s8 %v1106
      %v1108 = vlaneseq
      %v1109 = vshrl.u32 %v1108, 7
      %v1110 = vsub.s32 %v1107, %v1109
      %v1111 = vrot.slane %v1103, %v1110
      %1112 = vset.pattern.permute.xlu0 1
      %1113 = vperm.xlu0 %1112, %v1004
      %v1114 = vpop.permute.xlu0 %1113
      %v1117 = vunpack.c.l.s4 839922192
      %v1118 = vunpack.c.0.s8 %v1117
      %v1119 = vlaneseq
      %v1120 = vshrl.u32 %v1119, 7
      %v1121 = vsub.s32 %v1118, %v1120
      %v1122 = vrot.slane %v1114, %v1121
      %v1127 = vcombine.low %v1089, %v1100
      %v1128 = vcombine.low %v1111, %v1122
      %1129 = vrot.lane.b32.xlu0 %v1127, 64
      %v1130 = vpop.permute.xlu0 %1129
      %1131 = vrot.lane.b32.xlu0 %v1128, 64
      %v1132 = vpop.permute.xlu0 %1131
      %v1135 = vmul.f32 %v1005, %v1130
      %v1136 = vmul.f32 %v1006, %v1132
      %1139 = vrot.lane.b32.xlu0 %v1135, 64
      %v1140 = vpop.permute.xlu0 %1139
      %1141 = vrot.lane.b32.xlu0 %v1136, 64
      %v1142 = vpop.permute.xlu0 %1141
      %v1145 = vadd.f32 %v999, %v1140
      %v1146 = vadd.f32 %v1000, %v1142
      %s1147 = scalar_lea.vmem %s153, 16
      %v1148 = vld [vmem:[%s1147] sm:$0xf]
      %v1149 = vld [vmem:[%s1147 + $0x8] sm:$0xf]
      %v1150 = vld [vmem:[%s1147 + $0x10] sm:$0xf]
      %v1151 = vld [vmem:[%s1147 + $0x18] sm:$0xf]
      %v1152 = vmul.f32 %v269, %v332
      %v1153 = vmul.f32 %v271, %v333
      %1155 = vset.pattern.permute.xlu0 0
      %1156 = vperm.xlu0 %1155, %v1148
      %v1157 = vpop.permute.xlu0 %1156
      %v1160 = vunpack.c.l.s4 839922192
      %v1161 = vunpack.c.0.s8 %v1160
      %v1162 = vlaneseq
      %v1163 = vshrl.u32 %v1162, 7
      %v1164 = vsub.s32 %v1161, %v1163
      %v1165 = vrot.slane %v1157, %v1164
      %1167 = vset.pattern.permute.xlu0 0
      %1168 = vperm.xlu0 %1167, %v1149
      %v1169 = vpop.permute.xlu0 %1168
      %v1172 = vunpack.c.l.s4 839922192
      %v1173 = vunpack.c.0.s8 %v1172
      %v1174 = vlaneseq
      %v1175 = vshrl.u32 %v1174, 7
      %v1176 = vsub.s32 %v1173, %v1175
      %v1177 = vrot.slane %v1169, %v1176
      %1179 = vset.pattern.permute.xlu0 0
      %1180 = vperm.xlu0 %1179, %v1150
      %v1181 = vpop.permute.xlu0 %1180
      %v1184 = vunpack.c.l.s4 839922192
      %v1185 = vunpack.c.0.s8 %v1184
      %v1186 = vlaneseq
      %v1187 = vshrl.u32 %v1186, 7
      %v1188 = vsub.s32 %v1185, %v1187
      %v1189 = vrot.slane %v1181, %v1188
      %1191 = vset.pattern.permute.xlu0 0
      %1192 = vperm.xlu0 %1191, %v1151
      %v1193 = vpop.permute.xlu0 %1192
      %v1196 = vunpack.c.l.s4 839922192
      %v1197 = vunpack.c.0.s8 %v1196
      %v1198 = vlaneseq
      %v1199 = vshrl.u32 %v1198, 7
      %v1200 = vsub.s32 %v1197, %v1199
      %v1201 = vrot.slane %v1193, %v1200
      %v1206 = vcombine.low %v1165, %v1177
      %v1207 = vcombine.low %v1189, %v1201
      %v1210 = vmul.f32 %v1152, %v1206
      %v1211 = vmul.f32 %v1153, %v1207
      %v1212 = vadd.f32 %v1077, %v1210
      %v1213 = vadd.f32 %v1078, %v1211
      %1214 = vset.pattern.permute.xlu0 1
      %1215 = vperm.xlu0 %1214, %v1148
      %v1216 = vpop.permute.xlu0 %1215
      %v1219 = vunpack.c.l.s4 839922192
      %v1220 = vunpack.c.0.s8 %v1219
      %v1221 = vlaneseq
      %v1222 = vshrl.u32 %v1221, 7
      %v1223 = vsub.s32 %v1220, %v1222
      %v1224 = vrot.slane %v1216, %v1223
      %1225 = vset.pattern.permute.xlu0 1
      %1226 = vperm.xlu0 %1225, %v1149
      %v1227 = vpop.permute.xlu0 %1226
      %v1230 = vunpack.c.l.s4 839922192
      %v1231 = vunpack.c.0.s8 %v1230
      %v1232 = vlaneseq
      %v1233 = vshrl.u32 %v1232, 7
      %v1234 = vsub.s32 %v1231, %v1233
      %v1235 = vrot.slane %v1227, %v1234
      %1236 = vset.pattern.permute.xlu0 1
      %1237 = vperm.xlu0 %1236, %v1150
      %v1238 = vpop.permute.xlu0 %1237
      %v1241 = vunpack.c.l.s4 839922192
      %v1242 = vunpack.c.0.s8 %v1241
      %v1243 = vlaneseq
      %v1244 = vshrl.u32 %v1243, 7
      %v1245 = vsub.s32 %v1242, %v1244
      %v1246 = vrot.slane %v1238, %v1245
      %1247 = vset.pattern.permute.xlu0 1
      %1248 = vperm.xlu0 %1247, %v1151
      %v1249 = vpop.permute.xlu0 %1248
      %v1252 = vunpack.c.l.s4 839922192
      %v1253 = vunpack.c.0.s8 %v1252
      %v1254 = vlaneseq
      %v1255 = vshrl.u32 %v1254, 7
      %v1256 = vsub.s32 %v1253, %v1255
      %v1257 = vrot.slane %v1249, %v1256
      %v1262 = vcombine.low %v1224, %v1235
      %v1263 = vcombine.low %v1246, %v1257
      %v1266 = vmul.f32 %v1152, %v1262
      %v1267 = vmul.f32 %v1153, %v1263
      %v1268 = vadd.f32 %v1145, %v1266
      %v1269 = vadd.f32 %v1146, %v1267
      %v1270 = vld [vmem:[%s1147 + $0x1] sm:$0xf]
      %v1271 = vld [vmem:[%s1147 + $0x9] sm:$0xf]
      %v1272 = vld [vmem:[%s1147 + $0x11] sm:$0xf]
      %v1273 = vld [vmem:[%s1147 + $0x19] sm:$0xf]
      %v1274 = vmul.f32 %v275, %v463
      %v1275 = vmul.f32 %v277, %v465
      %1277 = vset.pattern.permute.xlu0 0
      %1278 = vperm.xlu0 %1277, %v1270
      %v1279 = vpop.permute.xlu0 %1278
      %v1282 = vunpack.c.l.s4 839922192
      %v1283 = vunpack.c.0.s8 %v1282
      %v1284 = vlaneseq
      %v1285 = vshrl.u32 %v1284, 7
      %v1286 = vsub.s32 %v1283, %v1285
      %v1287 = vrot.slane %v1279, %v1286
      %1289 = vset.pattern.permute.xlu0 0
      %1290 = vperm.xlu0 %1289, %v1271
      %v1291 = vpop.permute.xlu0 %1290
      %v1294 = vunpack.c.l.s4 839922192
      %v1295 = vunpack.c.0.s8 %v1294
      %v1296 = vlaneseq
      %v1297 = vshrl.u32 %v1296, 7
      %v1298 = vsub.s32 %v1295, %v1297
      %v1299 = vrot.slane %v1291, %v1298
      %1301 = vset.pattern.permute.xlu0 0
      %1302 = vperm.xlu0 %1301, %v1272
      %v1303 = vpop.permute.xlu0 %1302
      %v1306 = vunpack.c.l.s4 839922192
      %v1307 = vunpack.c.0.s8 %v1306
      %v1308 = vlaneseq
      %v1309 = vshrl.u32 %v1308, 7
      %v1310 = vsub.s32 %v1307, %v1309
      %v1311 = vrot.slane %v1303, %v1310
      %1313 = vset.pattern.permute.xlu0 0
      %1314 = vperm.xlu0 %1313, %v1273
      %v1315 = vpop.permute.xlu0 %1314
      %v1318 = vunpack.c.l.s4 839922192
      %v1319 = vunpack.c.0.s8 %v1318
      %v1320 = vlaneseq
      %v1321 = vshrl.u32 %v1320, 7
      %v1322 = vsub.s32 %v1319, %v1321
      %v1323 = vrot.slane %v1315, %v1322
      %v1328 = vcombine.low %v1287, %v1299
      %v1329 = vcombine.low %v1311, %v1323
      %1330 = vrot.lane.b32.xlu0 %v1328, 64
      %v1331 = vpop.permute.xlu0 %1330
      %1332 = vrot.lane.b32.xlu0 %v1329, 64
      %v1333 = vpop.permute.xlu0 %1332
      %v1336 = vmul.f32 %v1274, %v1331
      %v1337 = vmul.f32 %v1275, %v1333
      %1340 = vrot.lane.b32.xlu0 %v1336, 64
      %v1341 = vpop.permute.xlu0 %1340
      %1342 = vrot.lane.b32.xlu0 %v1337, 64
      %v1343 = vpop.permute.xlu0 %1342
      %v1346 = vadd.f32 %v1212, %v1341
      %v1347 = vadd.f32 %v1213, %v1343
      %1348 = vset.pattern.permute.xlu0 1
      %1349 = vperm.xlu0 %1348, %v1270
      %v1350 = vpop.permute.xlu0 %1349
      %v1353 = vunpack.c.l.s4 839922192
      %v1354 = vunpack.c.0.s8 %v1353
      %v1355 = vlaneseq
      %v1356 = vshrl.u32 %v1355, 7
      %v1357 = vsub.s32 %v1354, %v1356
      %v1358 = vrot.slane %v1350, %v1357
      %1359 = vset.pattern.permute.xlu0 1
      %1360 = vperm.xlu0 %1359, %v1271
      %v1361 = vpop.permute.xlu0 %1360
      %v1364 = vunpack.c.l.s4 839922192
      %v1365 = vunpack.c.0.s8 %v1364
      %v1366 = vlaneseq
      %v1367 = vshrl.u32 %v1366, 7
      %v1368 = vsub.s32 %v1365, %v1367
      %v1369 = vrot.slane %v1361, %v1368
      %1370 = vset.pattern.permute.xlu0 1
      %1371 = vperm.xlu0 %1370, %v1272
      %v1372 = vpop.permute.xlu0 %1371
      %v1375 = vunpack.c.l.s4 839922192
      %v1376 = vunpack.c.0.s8 %v1375
      %v1377 = vlaneseq
      %v1378 = vshrl.u32 %v1377, 7
      %v1379 = vsub.s32 %v1376, %v1378
      %v1380 = vrot.slane %v1372, %v1379
      %1381 = vset.pattern.permute.xlu0 1
      %1382 = vperm.xlu0 %1381, %v1273
      %v1383 = vpop.permute.xlu0 %1382
      %v1386 = vunpack.c.l.s4 839922192
      %v1387 = vunpack.c.0.s8 %v1386
      %v1388 = vlaneseq
      %v1389 = vshrl.u32 %v1388, 7
      %v1390 = vsub.s32 %v1387, %v1389
      %v1391 = vrot.slane %v1383, %v1390
      %v1396 = vcombine.low %v1358, %v1369
      %v1397 = vcombine.low %v1380, %v1391
      %1398 = vrot.lane.b32.xlu0 %v1396, 64
      %v1399 = vpop.permute.xlu0 %1398
      %1400 = vrot.lane.b32.xlu0 %v1397, 64
      %v1401 = vpop.permute.xlu0 %1400
      %v1404 = vmul.f32 %v1274, %v1399
      %v1405 = vmul.f32 %v1275, %v1401
      %1408 = vrot.lane.b32.xlu0 %v1404, 64
      %v1409 = vpop.permute.xlu0 %1408
      %1410 = vrot.lane.b32.xlu0 %v1405, 64
      %v1411 = vpop.permute.xlu0 %1410
      %v1414 = vadd.f32 %v1268, %v1409
      %v1415 = vadd.f32 %v1269, %v1411
      %v1416 = vld [vmem:[%s1147 + $0x2] sm:$0xf]
      %v1417 = vld [vmem:[%s1147 + $0xa] sm:$0xf]
      %v1418 = vld [vmem:[%s1147 + $0x12] sm:$0xf]
      %v1419 = vld [vmem:[%s1147 + $0x1a] sm:$0xf]
      %v1420 = vmul.f32 %v281, %v332
      %v1421 = vmul.f32 %v283, %v333
      %1423 = vset.pattern.permute.xlu0 0
      %1424 = vperm.xlu0 %1423, %v1416
      %v1425 = vpop.permute.xlu0 %1424
      %v1428 = vunpack.c.l.s4 839922192
      %v1429 = vunpack.c.0.s8 %v1428
      %v1430 = vlaneseq
      %v1431 = vshrl.u32 %v1430, 7
      %v1432 = vsub.s32 %v1429, %v1431
      %v1433 = vrot.slane %v1425, %v1432
      %1435 = vset.pattern.permute.xlu0 0
      %1436 = vperm.xlu0 %1435, %v1417
      %v1437 = vpop.permute.xlu0 %1436
      %v1440 = vunpack.c.l.s4 839922192
      %v1441 = vunpack.c.0.s8 %v1440
      %v1442 = vlaneseq
      %v1443 = vshrl.u32 %v1442, 7
      %v1444 = vsub.s32 %v1441, %v1443
      %v1445 = vrot.slane %v1437, %v1444
      %1447 = vset.pattern.permute.xlu0 0
      %1448 = vperm.xlu0 %1447, %v1418
      %v1449 = vpop.permute.xlu0 %1448
      %v1452 = vunpack.c.l.s4 839922192
      %v1453 = vunpack.c.0.s8 %v1452
      %v1454 = vlaneseq
      %v1455 = vshrl.u32 %v1454, 7
      %v1456 = vsub.s32 %v1453, %v1455
      %v1457 = vrot.slane %v1449, %v1456
      %1459 = vset.pattern.permute.xlu0 0
      %1460 = vperm.xlu0 %1459, %v1419
      %v1461 = vpop.permute.xlu0 %1460
      %v1464 = vunpack.c.l.s4 839922192
      %v1465 = vunpack.c.0.s8 %v1464
      %v1466 = vlaneseq
      %v1467 = vshrl.u32 %v1466, 7
      %v1468 = vsub.s32 %v1465, %v1467
      %v1469 = vrot.slane %v1461, %v1468
      %v1474 = vcombine.low %v1433, %v1445
      %v1475 = vcombine.low %v1457, %v1469
      %v1478 = vmul.f32 %v1420, %v1474
      %v1479 = vmul.f32 %v1421, %v1475
      %v1480 = vadd.f32 %v1346, %v1478
      %v1481 = vadd.f32 %v1347, %v1479
      %1482 = vset.pattern.permute.xlu0 1
      %1483 = vperm.xlu0 %1482, %v1416
      %v1484 = vpop.permute.xlu0 %1483
      %v1487 = vunpack.c.l.s4 839922192
      %v1488 = vunpack.c.0.s8 %v1487
      %v1489 = vlaneseq
      %v1490 = vshrl.u32 %v1489, 7
      %v1491 = vsub.s32 %v1488, %v1490
      %v1492 = vrot.slane %v1484, %v1491
      %1493 = vset.pattern.permute.xlu0 1
      %1494 = vperm.xlu0 %1493, %v1417
      %v1495 = vpop.permute.xlu0 %1494
      %v1498 = vunpack.c.l.s4 839922192
      %v1499 = vunpack.c.0.s8 %v1498
      %v1500 = vlaneseq
      %v1501 = vshrl.u32 %v1500, 7
      %v1502 = vsub.s32 %v1499, %v1501
      %v1503 = vrot.slane %v1495, %v1502
      %1504 = vset.pattern.permute.xlu0 1
      %1505 = vperm.xlu0 %1504, %v1418
      %v1506 = vpop.permute.xlu0 %1505
      %v1509 = vunpack.c.l.s4 839922192
      %v1510 = vunpack.c.0.s8 %v1509
      %v1511 = vlaneseq
      %v1512 = vshrl.u32 %v1511, 7
      %v1513 = vsub.s32 %v1510, %v1512
      %v1514 = vrot.slane %v1506, %v1513
      %1515 = vset.pattern.permute.xlu0 1
      %1516 = vperm.xlu0 %1515, %v1419
      %v1517 = vpop.permute.xlu0 %1516
      %v1520 = vunpack.c.l.s4 839922192
      %v1521 = vunpack.c.0.s8 %v1520
      %v1522 = vlaneseq
      %v1523 = vshrl.u32 %v1522, 7
      %v1524 = vsub.s32 %v1521, %v1523
      %v1525 = vrot.slane %v1517, %v1524
      %v1530 = vcombine.low %v1492, %v1503
      %v1531 = vcombine.low %v1514, %v1525
      %v1534 = vmul.f32 %v1420, %v1530
      %v1535 = vmul.f32 %v1421, %v1531
      %v1536 = vadd.f32 %v1414, %v1534
      %v1537 = vadd.f32 %v1415, %v1535
      %1540 = vrot.lane.b32.xlu0 %v1536, 64
      %v1541 = vpop.permute.xlu0 %1540
      %1542 = vrot.lane.b32.xlu0 %v1537, 64
      %v1543 = vpop.permute.xlu0 %1542
      %vm1546 = vcmask 523264
      %v1547 = vsel %vm1546, %v1480, %v1541
      %v1548 = vsel %vm1546, %v1481, %v1543
      %1549 = vst [vmem:[%s163] sm:$0xff] %v1547
      %1550 = vst [vmem:[%s163 + $0x8] sm:$0xff] %v1548
      %p1551 = scmp.lt.s32.totalorder %s13, 1
      %s1552 = scalar_select %p1551, %s13, 1
      %s1553 = smul.addr %s1552, 2
      %s1554 = smul.addr %s1553, 8
      %s1555 = scalar_lea.vmem %s2, %s1554
      // Predicated region
      $region29: #{_lambda_.4} parent=27 // pred_check
        %p1556 = pneg %p83
      $region30: #{_lambda_.4} parent=27 // pred_check_branch
        %1558 = sbr.rel (%p1556) target = $region32
      $region31: #{_lambda_.4} parent=27 // pred_region
        _
      $region32: #{_lambda_.4} parent=27 // pred_fallthru
        _
    $region28: #{_lambda_.4} parent=5 // pred_fallthru
      _
    %p1559 = scmp.le.s32.totalorder 2, %s8
    // Predicated region
    $region33: #{_lambda_.4} parent=5 // pred_check
      %p1560 = pneg %p1559
    $region34: #{_lambda_.4} parent=5 // pred_check_branch
      %1562 = sbr.rel (%p1560) target = $region36
    $region35: #{_lambda_.4} parent=5 // pred_region
      %s1563 = ssub.s32 %s8, 2
      // Predicated region
      $region37: #{_lambda_.4} parent=35 // pred_check
        %p1564 = pneg %p89
      $region38: #{_lambda_.4} parent=35 // pred_check_branch
        %1566 = sbr.rel (%p1564) target = $region40
      $region39: #{_lambda_.4} parent=35 // pred_region
        %p1567 = scmp.lt.s32.totalorder %s14, 1
        %s1568 = scalar_select %p1567, %s14, 1
        %s1569 = smul.addr %s1568, 2
        %s1570 = smul.addr %s1569, 8
        %s1571 = scalar_lea.vmem %s2, %s1570
      $region40: #{_lambda_.4} parent=35 // pred_fallthru
        _
    $region36: #{_lambda_.4} parent=5 // pred_fallthru
      _
  $region6: #{_lambda_.4} parent=0 // loop_footer
    %s12 = sadd.s32 1, %s8
  $region7: #{_lambda_.4} parent=0 // loop_footer_branch
    %7 = sbr.rel target = $region3
  $region8: #{_lambda_.4} parent=0 // loop_exit
    _

// kernel: _lambda_.3
$region0: #{_lambda_.3}
  #allocation0 [shape = 'u32[]', space=smem, size = 0x4, offset = 0x4, fixed_abs, tag = 'smem constant byte address 0x4 - core index']
  #allocation1 [shape = 'u32[144,128]{1,0:T(1,128)}', space=vmem, size = 0x12000, scoped, tag = 'internal scratch']
  #allocation2 [shape = 'f32[6,6,16]{2,1,0:T(8,128)}', space=vmem, size = 0x6000, scoped, tag = 'scratch operand']
  %s0 = inlined_call_operand.vmem [shape: f32[2,6,6,8], index: 0, kind: input, shape index: {}]
  %s1 = inlined_call_operand.vmem [shape: bf16[72,16], index: 1, kind: input, shape index: {}]
  %s2 = inlined_call_operand.vmem [shape: f32[1,16], index: 2, kind: input, shape index: {}]
  %s3 = inlined_call_operand.vmem [shape: bf16[144,640], index: 3, kind: input, shape index: {}]
  %s4 = inlined_call_operand.vmem [shape: f32[1,640], index: 4, kind: input, shape index: {}]
  %s5 = inlined_call_operand.vmem [shape: f32[2,16,640], index: 5, kind: output, shape index: {}]
  %s6 = sld [smem:[#allocation0]]
  $region53: #{_lambda_.3} parent=0
    _
  %s8 = ssub.s32 1, %s6
  %s9 = scalar_select 0, %s8, %s6
  loop: start=0, step=1, limit=4
  $region2: #{_lambda_.3} parent=0 // loop_pre_header
    _
  $region3: #{_lambda_.3} parent=0 // loop_header
    %s11 = sphi 0, %s15
    %p12 = scmp.ge.s32.totalorder %s11, 4
    %s21 = sphi 0, %s23
    %s24 = sphi 0, %s21
    %s25 = sphi 0, %s24
    %s41 = sphi 0, %s25
    %s45 = sphi 0, %s45
    %s47 = sphi 0, %s45
    %s48 = sphi 0, %s47
    %s62 = sphi 0, %s48
    %s66 = sphi 0, %s66
    %s68 = sphi 0, %s66
    %s69 = sphi 0, %s68
    %s83 = sphi 0, %s69
    %s87 = sphi 0, %s87
    %s89 = sphi 0, %s87
    %s90 = sphi 0, %s89
    %s104 = sphi 0, %s90
    %s108 = sphi 0, %s108
    %s110 = sphi 0, %s108
    %s111 = sphi 0, %s110
    %s125 = sphi 0, %s111
    %s131 = sphi 0, %s133
    %s134 = sphi 0, %s131
    %s135 = sphi 0, %s134
    %s151 = sphi 0, %s135
  $region4: #{_lambda_.3} parent=0 // loop_header_branch
    %14 = sbr.rel (%p12) target = $region8
  $region5: #{_lambda_.3} parent=0 // loop_body
    %s16 = ssub.s32 %s11, 1
    %s17 = ssub.s32 %s11, 2
    %s18 = sadd.s32 %s11, 1
    %s19 = ssub.s32 %s11, %s18
    %p20 = scmp.eq.s32.totalorder %s19, 0
    %s22 = sadd.s32 %s21, 1
    %s23 = scalar_select %p20, %s21, %s22
    %p26 = pneg %p20
    %p27 = scmp.eq.s32.totalorder %s11, 1
    %p28 = por %p26, %p27
    %p29 = scmp.ne.s32.totalorder %s21, %s24
    %p30 = scmp.eq.s32.totalorder %s11, 0
    %p31 = por %p29, %p30
    %p32 = scmp.ne.s32.totalorder %s21, %s24
    %p33 = scmp.eq.s32.totalorder %s16, 1
    %p34 = por %p32, %p33
    %p35 = scmp.ne.s32.totalorder %s24, %s25
    %p36 = scmp.eq.s32.totalorder %s16, 0
    %p37 = por %p35, %p36
    %p38 = scmp.ne.s32.totalorder %s24, %s25
    %p39 = scmp.eq.s32.totalorder %s17, 1
    %p40 = por %p38, %p39
    %p42 = scmp.ne.s32.totalorder %s25, %s41
    %p43 = scmp.eq.s32.totalorder %s17, 0
    %p44 = por %p42, %p43
    %s46 = sadd.s32 %s45, 1
    %p49 = scmp.eq.s32.totalorder %s11, 1
    %p50 = scmp.ne.s32.totalorder %s45, %s47
    %p51 = scmp.eq.s32.totalorder %s11, 0
    %p52 = por %p50, %p51
    %p53 = scmp.ne.s32.totalorder %s45, %s47
    %p54 = scmp.eq.s32.totalorder %s16, 1
    %p55 = por %p53, %p54
    %p56 = scmp.ne.s32.totalorder %s47, %s48
    %p57 = scmp.eq.s32.totalorder %s16, 0
    %p58 = por %p56, %p57
    %p59 = scmp.ne.s32.totalorder %s47, %s48
    %p60 = scmp.eq.s32.totalorder %s17, 1
    %p61 = por %p59, %p60
    %p63 = scmp.ne.s32.totalorder %s48, %s62
    %p64 = scmp.eq.s32.totalorder %s17, 0
    %p65 = por %p63, %p64
    %s67 = sadd.s32 %s66, 1
    %p70 = scmp.eq.s32.totalorder %s11, 1
    %p71 = scmp.ne.s32.totalorder %s66, %s68
    %p72 = scmp.eq.s32.totalorder %s11, 0
    %p73 = por %p71, %p72
    %p74 = scmp.ne.s32.totalorder %s66, %s68
    %p75 = scmp.eq.s32.totalorder %s16, 1
    %p76 = por %p74, %p75
    %p77 = scmp.ne.s32.totalorder %s68, %s69
    %p78 = scmp.eq.s32.totalorder %s16, 0
    %p79 = por %p77, %p78
    %p80 = scmp.ne.s32.totalorder %s68, %s69
    %p81 = scmp.eq.s32.totalorder %s17, 1
    %p82 = por %p80, %p81
    %p84 = scmp.ne.s32.totalorder %s69, %s83
    %p85 = scmp.eq.s32.totalorder %s17, 0
    %p86 = por %p84, %p85
    %s88 = sadd.s32 %s87, 1
    %p91 = scmp.eq.s32.totalorder %s11, 1
    %p92 = scmp.ne.s32.totalorder %s87, %s89
    %p93 = scmp.eq.s32.totalorder %s11, 0
    %p94 = por %p92, %p93
    %p95 = scmp.ne.s32.totalorder %s87, %s89
    %p96 = scmp.eq.s32.totalorder %s16, 1
    %p97 = por %p95, %p96
    %p98 = scmp.ne.s32.totalorder %s89, %s90
    %p99 = scmp.eq.s32.totalorder %s16, 0
    %p100 = por %p98, %p99
    %p101 = scmp.ne.s32.totalorder %s89, %s90
    %p102 = scmp.eq.s32.totalorder %s17, 1
    %p103 = por %p101, %p102
    %p105 = scmp.ne.s32.totalorder %s90, %s104
    %p106 = scmp.eq.s32.totalorder %s17, 0
    %p107 = por %p105, %p106
    %s109 = sadd.s32 %s108, 1
    %p112 = scmp.eq.s32.totalorder %s11, 1
    %p113 = scmp.ne.s32.totalorder %s108, %s110
    %p114 = scmp.eq.s32.totalorder %s11, 0
    %p115 = por %p113, %p114
    %p116 = scmp.ne.s32.totalorder %s108, %s110
    %p117 = scmp.eq.s32.totalorder %s16, 1
    %p118 = por %p116, %p117
    %p119 = scmp.ne.s32.totalorder %s110, %s111
    %p120 = scmp.eq.s32.totalorder %s16, 0
    %p121 = por %p119, %p120
    %p122 = scmp.ne.s32.totalorder %s110, %s111
    %p123 = scmp.eq.s32.totalorder %s17, 1
    %p124 = por %p122, %p123
    %p126 = scmp.ne.s32.totalorder %s111, %s125
    %p127 = scmp.eq.s32.totalorder %s17, 0
    %p128 = por %p126, %p127
    %s129 = ssub.s32 %s11, %s18
    %p130 = scmp.eq.s32.totalorder %s129, 0
    %s132 = sadd.s32 %s131, 1
    %s133 = scalar_select %p130, %s131, %s132
    %p136 = pneg %p130
    %p137 = scmp.eq.s32.totalorder %s11, 1
    %p138 = por %p136, %p137
    %p139 = scmp.ne.s32.totalorder %s131, %s134
    %p140 = scmp.eq.s32.totalorder %s11, 0
    %p141 = por %p139, %p140
    %p142 = scmp.ne.s32.totalorder %s131, %s134
    %p143 = scmp.eq.s32.totalorder %s16, 1
    %p144 = por %p142, %p143
    %p145 = scmp.ne.s32.totalorder %s134, %s135
    %p146 = scmp.eq.s32.totalorder %s16, 0
    %p147 = por %p145, %p146
    %p148 = scmp.ne.s32.totalorder %s134, %s135
    %p149 = scmp.eq.s32.totalorder %s17, 1
    %p150 = por %p148, %p149
    %p152 = scmp.ne.s32.totalorder %s135, %s151
    %p153 = scmp.eq.s32.totalorder %s17, 0
    %p154 = por %p152, %p153
    %p155 = scmp.le.s32.totalorder 1, %s11
    %p156 = scmp.lt.s32.totalorder %s11, 3
    %p157 = pnand %p155, %p156
    %p158 = pneg %p157
    // Predicated region
    $region9: #{_lambda_.3} parent=5 // pred_check
      _
    $region10: #{_lambda_.3} parent=5 // pred_check_branch
      %160 = sbr.rel (%p157) target = $region12
    $region11: #{_lambda_.3} parent=5 // pred_region
      %s161 = ssub.s32 %s11, 1
      // Predicated region
      $region13: #{_lambda_.3} parent=11 // pred_check
        %p162 = pneg %p58
      $region14: #{_lambda_.3} parent=11 // pred_check_branch
        %164 = sbr.rel (%p162) target = $region16
      $region15: #{_lambda_.3} parent=11 // pred_region
        _
      $region16: #{_lambda_.3} parent=11 // pred_fallthru
        _
      // Predicated region
      $region17: #{_lambda_.3} parent=11 // pred_check
        %p165 = pneg %p79
      $region18: #{_lambda_.3} parent=11 // pred_check_branch
        %167 = sbr.rel (%p165) target = $region20
      $region19: #{_lambda_.3} parent=11 // pred_region
        _
      $region20: #{_lambda_.3} parent=11 // pred_fallthru
        _
      // Predicated region
      $region21: #{_lambda_.3} parent=11 // pred_check
        %p168 = pneg %p100
      $region22: #{_lambda_.3} parent=11 // pred_check_branch
        %170 = sbr.rel (%p168) target = $region24
      $region23: #{_lambda_.3} parent=11 // pred_region
        _
      $region24: #{_lambda_.3} parent=11 // pred_fallthru
        _
      // Predicated region
      $region25: #{_lambda_.3} parent=11 // pred_check
        %p171 = pneg %p121
      $region26: #{_lambda_.3} parent=11 // pred_check_branch
        %173 = sbr.rel (%p171) target = $region28
      $region27: #{_lambda_.3} parent=11 // pred_region
        _
      $region28: #{_lambda_.3} parent=11 // pred_fallthru
        _
    $region12: #{_lambda_.3} parent=5 // pred_fallthru
      _
    %p174 = scmp.lt.s32.totalorder %s11, 2
    // Predicated region
    $region29: #{_lambda_.3} parent=5 // pred_check
      %p175 = pneg %p174
    $region30: #{_lambda_.3} parent=5 // pred_check_branch
      %177 = sbr.rel (%p175) target = $region32
    $region31: #{_lambda_.3} parent=5 // pred_region
      // Predicated region
      $region33: #{_lambda_.3} parent=31 // pred_check
        %p178 = pneg %p31
      $region34: #{_lambda_.3} parent=31 // pred_check_branch
        %180 = sbr.rel (%p178) target = $region36
      $region35: #{_lambda_.3} parent=31 // pred_region
        %p181 = scmp.lt.s32.totalorder %s11, 1
        %s182 = scalar_select %p181, %s11, 1
        %s183 = smul.addr %s182, 6
        %s184 = smul.addr %s183, 8
        %s185 = scalar_lea.vmem %s0, %s184
      $region36: #{_lambda_.3} parent=31 // pred_fallthru
        _
    $region32: #{_lambda_.3} parent=5 // pred_fallthru
      _
    %p186 = scmp.le.s32.totalorder 1, %s11
    %p187 = scmp.lt.s32.totalorder %s11, 3
    %p188 = pnand %p186, %p187
    %p189 = pneg %p188
    // Predicated region
    $region37: #{_lambda_.3} parent=5 // pred_check
      _
    $region38: #{_lambda_.3} parent=5 // pred_check_branch
      %191 = sbr.rel (%p188) target = $region40
    $region39: #{_lambda_.3} parent=5 // pred_region
      %s192 = ssub.s32 %s11, 1
      %p193 = scmp.lt.s32.totalorder %s16, 1
      %s194 = scalar_select %p193, %s16, 1
      %s195 = smul.addr %s194, 6
      %s196 = smul.addr %s195, 8
      %s197 = scalar_lea.vmem %s0, %s196
      %p198 = pneg %p37
      %p199 = pneg %p34
      %p200 = pneg %p58
      %p201 = pneg %p55
      %p202 = pneg %p79
      %p203 = pneg %p76
      %p204 = pneg %p100
      %p205 = pneg %p97
      %p206 = pneg %p121
      %p207 = pneg %p118
      %p208 = pneg %p147
      %p209 = pneg %p144
      %p210 = scmp.lt.s32.totalorder %s16, 1
      %s211 = scalar_select %p210, %s16, 1
      %s212 = smul.addr %s211, 10
      %s213 = smul.addr %s212, 8
      %s214 = scalar_lea.vmem %s5, %s213
      %p215 = scmp.lt.s32.totalorder %s16, 1
      %s216 = scalar_select %p215, %s16, 1
      %s217 = smul.addr %s216, 6
      %s218 = smul.addr %s217, 8
      %s219 = scalar_lea.vmem %s0, %s218
      %p220 = scmp.lt.s32.totalorder %s16, 1
      %s221 = scalar_select %p220, %s16, 1
      %s222 = smul.addr %s221, 10
      %s223 = smul.addr %s222, 8
      %s224 = scalar_lea.vmem %s5, %s223
      %v226 = vld [vmem:[%s219] sm:$0xf]
      %v227 = vld [vmem:[%s219 + $0x8] sm:$0xf]
      %v228 = vld [vmem:[%s219 + $0x10] sm:$0xf]
      %v229 = vld [vmem:[%s219 + $0x18] sm:$0xf]
      %v230 = vld [vmem:[%s219 + $0x1] sm:$0xf]
      %v231 = vld [vmem:[%s219 + $0x9] sm:$0xf]
      %v232 = vld [vmem:[%s219 + $0x11] sm:$0xf]
      %v233 = vld [vmem:[%s219 + $0x19] sm:$0xf]
      %v234 = vld [vmem:[%s219 + $0x2] sm:$0xf]
      %v235 = vld [vmem:[%s219 + $0xa] sm:$0xf]
      %v236 = vld [vmem:[%s219 + $0x12] sm:$0xf]
      %v237 = vld [vmem:[%s219 + $0x1a] sm:$0xf]
      %s238 = scalar_lea.vmem %s219, 8
      %v239 = vld [vmem:[%s238] sm:$0xf]
      %v240 = vld [vmem:[%s238 + $0x8] sm:$0xf]
      %v241 = vld [vmem:[%s238 + $0x10] sm:$0xf]
      %v242 = vld [vmem:[%s238 + $0x18] sm:$0xf]
      %v243 = vld [vmem:[%s238 + $0x1] sm:$0xf]
      %v244 = vld [vmem:[%s238 + $0x9] sm:$0xf]
      %v245 = vld [vmem:[%s238 + $0x11] sm:$0xf]
      %v246 = vld [vmem:[%s238 + $0x19] sm:$0xf]
      %v247 = vld [vmem:[%s238 + $0x2] sm:$0xf]
      %v248 = vld [vmem:[%s238 + $0xa] sm:$0xf]
      %v249 = vld [vmem:[%s238 + $0x12] sm:$0xf]
      %v250 = vld [vmem:[%s238 + $0x1a] sm:$0xf]
      %s251 = scalar_lea.vmem %s219, 16
      %v252 = vld [vmem:[%s251] sm:$0xf]
      %v253 = vld [vmem:[%s251 + $0x8] sm:$0xf]
      %v254 = vld [vmem:[%s251 + $0x10] sm:$0xf]
      %v255 = vld [vmem:[%s251 + $0x18] sm:$0xf]
      %v256 = vld [vmem:[%s251 + $0x1] sm:$0xf]
      %v257 = vld [vmem:[%s251 + $0x9] sm:$0xf]
      %v258 = vld [vmem:[%s251 + $0x11] sm:$0xf]
      %v259 = vld [vmem:[%s251 + $0x19] sm:$0xf]
      %v260 = vld [vmem:[%s251 + $0x2] sm:$0xf]
      %v261 = vld [vmem:[%s251 + $0xa] sm:$0xf]
      %v262 = vld [vmem:[%s251 + $0x12] sm:$0xf]
      %v263 = vld [vmem:[%s251 + $0x1a] sm:$0xf]
      %v268 = vcombine.low %v226, %v227
      %v269 = vcombine.low %v228, %v229
      %v276 = vcombine.low %v230, %v231
      %v277 = vcombine.low %v232, %v233
      %278 = vrot.lane.b32.xlu0 %v276, 8
      %v279 = vpop.permute.xlu0 %278
      %280 = vrot.lane.b32.xlu0 %v277, 8
      %v281 = vpop.permute.xlu0 %280
      %v288 = vcombine.low %v234, %v235
      %v289 = vcombine.low %v236, %v237
      %290 = vrot.lane.b32.xlu0 %v288, 16
      %v291 = vpop.permute.xlu0 %290
      %292 = vrot.lane.b32.xlu0 %v289, 16
      %v293 = vpop.permute.xlu0 %292
      %v300 = vcombine.low %v239, %v240
      %v301 = vcombine.low %v241, %v242
      %302 = vrot.lane.b32.xlu0 %v300, 24
      %v303 = vpop.permute.xlu0 %302
      %304 = vrot.lane.b32.xlu0 %v301, 24
      %v305 = vpop.permute.xlu0 %304
      %v312 = vcombine.low %v243, %v244
      %v313 = vcombine.low %v245, %v246
      %314 = vrot.lane.b32.xlu0 %v312, 32
      %v315 = vpop.permute.xlu0 %314
      %316 = vrot.lane.b32.xlu0 %v313, 32
      %v317 = vpop.permute.xlu0 %316
      %v324 = vcombine.low %v247, %v248
      %v325 = vcombine.low %v249, %v250
      %326 = vrot.lane.b32.xlu0 %v324, 40
      %v327 = vpop.permute.xlu0 %326
      %328 = vrot.lane.b32.xlu0 %v325, 40
      %v329 = vpop.permute.xlu0 %328
      %v336 = vcombine.low %v252, %v253
      %v337 = vcombine.low %v254, %v255
      %338 = vrot.lane.b32.xlu0 %v336, 48
      %v339 = vpop.permute.xlu0 %338
      %340 = vrot.lane.b32.xlu0 %v337, 48
      %v341 = vpop.permute.xlu0 %340
      %v348 = vcombine.low %v256, %v257
      %v349 = vcombine.low %v258, %v259
      %350 = vrot.lane.b32.xlu0 %v348, 56
      %v351 = vpop.permute.xlu0 %350
      %352 = vrot.lane.b32.xlu0 %v349, 56
      %v353 = vpop.permute.xlu0 %352
      %v360 = vcombine.low %v260, %v261
      %v361 = vcombine.low %v262, %v263
      %362 = vrot.lane.b32.xlu0 %v360, 64
      %v363 = vpop.permute.xlu0 %362
      %364 = vrot.lane.b32.xlu0 %v361, 64
      %v365 = vpop.permute.xlu0 %364
      %vm368 = vcmask 64512
      %v369 = vsel %vm368, %v268, %v279
      %v370 = vsel %vm368, %v269, %v281
      %vm371 = vcmask 130048
      %v372 = vsel %vm371, %v369, %v291
      %v373 = vsel %vm371, %v370, %v293
      %vm374 = vcmask 195584
      %v375 = vsel %vm374, %v372, %v303
      %v376 = vsel %vm374, %v373, %v305
      %vm377 = vcmask 261120
      %v378 = vsel %vm377, %v375, %v315
      %v379 = vsel %vm377, %v376, %v317
      %vm380 = vcmask 326656
      %v381 = vsel %vm380, %v378, %v327
      %v382 = vsel %vm380, %v379, %v329
      %vm383 = vcmask 392192
      %v384 = vsel %vm383, %v381, %v339
      %v385 = vsel %vm383, %v382, %v341
      %vm386 = vcmask 457728
      %v387 = vsel %vm386, %v384, %v351
      %v388 = vsel %vm386, %v385, %v353
      %vm389 = vcmask 523264
      %v390 = vsel %vm389, %v387, %v363
      %v391 = vsel %vm389, %v388, %v365
      %v392 = vpack.c.bf16 %v391, %v390
      %v393 = vld [vmem:[%s1] sm:$0xf]
      %v394 = vld [vmem:[%s1 + $0x4] sm:$0xf]
      %v395 = vld [vmem:[%s1 + $0x8] sm:$0xf]
      %v396 = vld [vmem:[%s1 + $0xc] sm:$0xf]
      %v397 = vld [vmem:[%s1 + $0x10] sm:$0xf]
      %v398 = vld [vmem:[%s1 + $0x14] sm:$0xf]
      %v399 = vld [vmem:[%s1 + $0x18] sm:$0xf]
      %v400 = vld [vmem:[%s1 + $0x1c] sm:$0xf]
      %v401 = vld [vmem:[%s1 + $0x20] sm:$0xf]
      %v402 = vld [vmem:[%s2] sm:$0x1]
      %v404 = vlaneseq
      %v405 = vshrl.u32 %v404, 7
      %v406 = vsub.s32 0, %v405
      %v407 = vrot.slane %v402, %v406
      %v418 = vunpack.c.l.b16 %v393
      %v419 = vunpack.c.l.b16 %v394
      %v420 = vunpack.c.l.b16 %v395
      %v421 = vunpack.c.l.b16 %v396
      %v422 = vunpack.c.l.b16 %v397
      %v423 = vunpack.c.l.b16 %v398
      %v424 = vunpack.c.l.b16 %v399
      %v425 = vunpack.c.l.b16 %v400
      %v426 = vunpack.c.l.b16 %v401
      %v427 = vpack.c.b16 %v419, %v418
      %v428 = vpack.c.b16 %v421, %v420
      %v429 = vpack.c.b16 %v423, %v422
      %v430 = vpack.c.b16 %v425, %v424
      %v431 = vpack.c.b16 %v426, %v426
      %vm436 = vcmask 588800
      %v438 = vsel %vm436, %v392, 0
      %vm440 = vcmask 1043456
      %v442 = vsel %vm440, %v431, 0
      %444 = vmatprep.subr.bf16.mxu0 0
      %445 = vmatpush1.bf16.msra.mxu0 0
      %446 = vmatprep.subr.bf16.mxu0 0
      %447 = vmatpush1.bf16.msra.mxu0 0
      %448 = vmatprep.subr.bf16.mxu0 0
      %449 = vmatpush1.bf16.msra.mxu0 0
      %450 = vmatprep.subr.bf16.mxu0 0
      %451 = vmatpush1.bf16.msra.mxu0 %v442
      %452 = vmatprep.subr.bf16.mxu0 0
      %453 = vmatpush1.bf16.msra.mxu0 %v430
      %454 = vmatprep.subr.bf16.mxu0 0
      %455 = vmatpush1.bf16.msra.mxu0 %v429
      %456 = vmatprep.subr.bf16.mxu0 0
      %457 = vmatpush1.bf16.msra.mxu0 %v428
      %458 = vmatprep.subr.bf16.mxu0 0
      %459 = vmatpush1.bf16.msra.mxu0 %v427
      %460 = vmatprep.subr.bf16.mxu0 0
      %461 = vmatpush2.bf16.msra.mxu0 0
      %462 = vmatprep.subr.bf16.mxu0 0
      %463 = vmatpush2.bf16.msra.mxu0 0
      %464 = vmatprep.subr.bf16.mxu0 0
      %465 = vmatpush2.bf16.msra.mxu0 0
      %466 = vmatprep.subr.bf16.mxu0 0
      %467 = vmatpush2.bf16.msra.mxu0 0
      %468 = vmatprep.subr.bf16.mxu0 0
      %469 = vmatpush2.bf16.msra.mxu0 0
      %470 = vmatprep.subr.bf16.mxu0 0
      %471 = vmatpush2.bf16.msra.mxu0 0
      %472 = vmatprep.subr.bf16.mxu0 0
      %473 = vmatpush2.bf16.msra.mxu0 0
      %474 = vmatprep.subr.bf16.mxu0 0
      %475 = vmatpush2.bf16.msra.mxu0 0
      %476 = vmatprep.mubr.bf16.mxu0 0
      %477 = vmatmul.mubr.bf16.gmra.mxu0 %v438
      %v478 = vpop.f32.mrf.mxu0
      %v479 = vadd.f32 %v407, %v478
      %v480 = vpop.f32.mrf.mxu0
      %v481 = vpop.f32.mrf.mxu0
      %v482 = vadd.f32 %v407, %v481
      %v483 = vpop.f32.mrf.mxu0
      %484 = vdwg.mxu0
      %v485 = vmax.f32 %v479, 0.0
      %v486 = vmax.f32 %v482, 0.0
      %vm487 = vcmask 128000
      %488 = vst.msk [vmem:[#allocation2] sm:$0x3f] %vm487, 0.0
      %489 = vst.msk [vmem:[#allocation2 + $0x8] sm:$0x3f] %vm487, 0.0
      %490 = vst.msk [vmem:[#allocation2 + $0x10] sm:$0x3f] %vm487, 0.0
      %491 = vst.msk [vmem:[#allocation2 + $0x18] sm:$0x3f] %vm487, 0.0
      %492 = vst.msk [vmem:[#allocation2 + $0x20] sm:$0x3f] %vm487, 0.0
      %493 = vst.msk [vmem:[#allocation2 + $0x28] sm:$0x3f] %vm487, 0.0
      %v496 = vcombine.high %v485, %v485
      %v497 = vcombine.high %v486, %v486
      %s500 = scalar_lea.vmem [#allocation2], 8
      %vm501 = vcmask 125952
      %502 = vst.msk [vmem:[%s500 + $0x1] sm:$0xf] %vm501, %v485
      %503 = vst.msk [vmem:[%s500 + $0x9] sm:$0xf] %vm501, %v496
      %504 = vst.msk [vmem:[%s500 + $0x11] sm:$0xf] %vm501, %v486
      %505 = vst.msk [vmem:[%s500 + $0x19] sm:$0xf] %vm501, %v497
      %v506 = vld [vmem:[#allocation2] sm:$0xf]
      %v507 = vld [vmem:[#allocation2 + $0x8] sm:$0xf]
      %v508 = vld [vmem:[#allocation2 + $0x10] sm:$0xf]
      %v509 = vld [vmem:[#allocation2 + $0x18] sm:$0xf]
      %v510 = vld [vmem:[#allocation2 + $0x1] sm:$0xf]
      %v511 = vld [vmem:[#allocation2 + $0x9] sm:$0xf]
      %v512 = vld [vmem:[#allocation2 + $0x11] sm:$0xf]
      %v513 = vld [vmem:[#allocation2 + $0x19] sm:$0xf]
      %v514 = vld [vmem:[#allocation2 + $0x2] sm:$0xf]
      %v515 = vld [vmem:[#allocation2 + $0xa] sm:$0xf]
      %v516 = vld [vmem:[#allocation2 + $0x12] sm:$0xf]
      %v517 = vld [vmem:[#allocation2 + $0x1a] sm:$0xf]
      %v518 = vld [vmem:[%s500] sm:$0xf]
      %v519 = vld [vmem:[%s500 + $0x8] sm:$0xf]
      %v520 = vld [vmem:[%s500 + $0x10] sm:$0xf]
      %v521 = vld [vmem:[%s500 + $0x18] sm:$0xf]
      %v522 = vld [vmem:[%s500 + $0x1] sm:$0xf]
      %v523 = vld [vmem:[%s500 + $0x9] sm:$0xf]
      %v524 = vld [vmem:[%s500 + $0x11] sm:$0xf]
      %v525 = vld [vmem:[%s500 + $0x19] sm:$0xf]
      %v526 = vld [vmem:[%s500 + $0x2] sm:$0xf]
      %v527 = vld [vmem:[%s500 + $0xa] sm:$0xf]
      %v528 = vld [vmem:[%s500 + $0x12] sm:$0xf]
      %v529 = vld [vmem:[%s500 + $0x1a] sm:$0xf]
      %s530 = scalar_lea.vmem [#allocation2], 16
      %v531 = vld [vmem:[%s530] sm:$0xf]
      %v532 = vld [vmem:[%s530 + $0x8] sm:$0xf]
      %v533 = vld [vmem:[%s530 + $0x10] sm:$0xf]
      %v534 = vld [vmem:[%s530 + $0x18] sm:$0xf]
      %v535 = vld [vmem:[%s530 + $0x1] sm:$0xf]
      %v536 = vld [vmem:[%s530 + $0x9] sm:$0xf]
      %v537 = vld [vmem:[%s530 + $0x11] sm:$0xf]
      %v538 = vld [vmem:[%s530 + $0x19] sm:$0xf]
      %v539 = vld [vmem:[%s530 + $0x2] sm:$0xf]
      %v540 = vld [vmem:[%s530 + $0xa] sm:$0xf]
      %v541 = vld [vmem:[%s530 + $0x12] sm:$0xf]
      %v542 = vld [vmem:[%s530 + $0x1a] sm:$0xf]
      %v547 = vcombine.low %v506, %v507
      %v548 = vcombine.low %v508, %v509
      %v555 = vcombine.low %v510, %v511
      %v556 = vcombine.low %v512, %v513
      %557 = vrot.lane.b32.xlu0 %v555, 16
      %v558 = vpop.permute.xlu0 %557
      %559 = vrot.lane.b32.xlu0 %v556, 16
      %v560 = vpop.permute.xlu0 %559
      %v567 = vcombine.low %v514, %v515
      %v568 = vcombine.low %v516, %v517
      %569 = vrot.lane.b32.xlu0 %v567, 32
      %v570 = vpop.permute.xlu0 %569
      %571 = vrot.lane.b32.xlu0 %v568, 32
      %v572 = vpop.permute.xlu0 %571
      %v579 = vcombine.low %v518, %v519
      %v580 = vcombine.low %v520, %v521
      %581 = vrot.lane.b32.xlu0 %v579, 48
      %v582 = vpop.permute.xlu0 %581
      %583 = vrot.lane.b32.xlu0 %v580, 48
      %v584 = vpop.permute.xlu0 %583
      %v591 = vcombine.low %v522, %v523
      %v592 = vcombine.low %v524, %v525
      %593 = vrot.lane.b32.xlu0 %v591, 64
      %v594 = vpop.permute.xlu0 %593
      %595 = vrot.lane.b32.xlu0 %v592, 64
      %v596 = vpop.permute.xlu0 %595
      %v603 = vcombine.low %v526, %v527
      %v604 = vcombine.low %v528, %v529
      %605 = vrot.lane.b32.xlu0 %v603, 80
      %v606 = vpop.permute.xlu0 %605
      %607 = vrot.lane.b32.xlu0 %v604, 80
      %v608 = vpop.permute.xlu0 %607
      %v615 = vcombine.low %v531, %v532
      %v616 = vcombine.low %v533, %v534
      %617 = vrot.lane.b32.xlu0 %v615, 96
      %v618 = vpop.permute.xlu0 %617
      %619 = vrot.lane.b32.xlu0 %v616, 96
      %v620 = vpop.permute.xlu0 %619
      %v627 = vcombine.low %v535, %v536
      %v628 = vcombine.low %v537, %v538
      %629 = vrot.lane.b32.xlu0 %v627, 112
      %v630 = vpop.permute.xlu0 %629
      %631 = vrot.lane.b32.xlu0 %v628, 112
      %v632 = vpop.permute.xlu0 %631
      %v639 = vcombine.low %v539, %v540
      %v640 = vcombine.low %v541, %v542
      %v643 = vsel %vm371, %v547, %v558
      %v644 = vsel %vm371, %v548, %v560
      %v645 = vsel %vm377, %v643, %v570
      %v646 = vsel %vm377, %v644, %v572
      %v647 = vsel %vm383, %v645, %v582
      %v648 = vsel %vm383, %v646, %v584
      %v649 = vsel %vm389, %v647, %v594
      %v650 = vsel %vm389, %v648, %v596
      %vm651 = vcmask 654336
      %v652 = vsel %vm651, %v649, %v606
      %v653 = vsel %vm651, %v650, %v608
      %vm654 = vcmask 785408
      %v655 = vsel %vm654, %v652, %v618
      %v656 = vsel %vm654, %v653, %v620
      %vm657 = vcmask 916480
      %v658 = vsel %vm657, %v655, %v630
      %v659 = vsel %vm657, %v656, %v632
      %v660 = vpack.c.bf16 %v659, %v658
      %v661 = vpack.c.bf16 %v640, %v639
      %v662 = vld [vmem:[%s3] sm:$0xff]
      %v663 = vld [vmem:[%s3 + $0x8] sm:$0xff]
      %v664 = vld [vmem:[%s3 + $0x10] sm:$0xf]
      %v665 = vld [vmem:[%s3 + $0x14] sm:$0xff]
      %v666 = vld [vmem:[%s3 + $0x1c] sm:$0xff]
      %v667 = vld [vmem:[%s3 + $0x24] sm:$0xf]
      %v668 = vld [vmem:[%s3 + $0x28] sm:$0xff]
      %v669 = vld [vmem:[%s3 + $0x30] sm:$0xff]
      %v670 = vld [vmem:[%s3 + $0x38] sm:$0xf]
      %v671 = vld [vmem:[%s3 + $0x3c] sm:$0xff]
      %v672 = vld [vmem:[%s3 + $0x44] sm:$0xff]
      %v673 = vld [vmem:[%s3 + $0x4c] sm:$0xf]
      %v674 = vld [vmem:[%s3 + $0x50] sm:$0xff]
      %v675 = vld [vmem:[%s3 + $0x58] sm:$0xff]
      %v676 = vld [vmem:[%s3 + $0x60] sm:$0xf]
      %v677 = vld [vmem:[%s3 + $0x64] sm:$0xff]
      %v678 = vld [vmem:[%s3 + $0x6c] sm:$0xff]
      %v679 = vld [vmem:[%s3 + $0x74] sm:$0xf]
      %v680 = vld [vmem:[%s3 + $0x78] sm:$0xff]
      %v681 = vld [vmem:[%s3 + $0x80] sm:$0xff]
      %v682 = vld [vmem:[%s3 + $0x88] sm:$0xf]
      %v683 = vld [vmem:[%s3 + $0x8c] sm:$0xff]
      %v684 = vld [vmem:[%s3 + $0x94] sm:$0xff]
      %v685 = vld [vmem:[%s3 + $0x9c] sm:$0xf]
      %v686 = vld [vmem:[%s3 + $0xa0] sm:$0xff]
      %v687 = vld [vmem:[%s3 + $0xa8] sm:$0xff]
      %v688 = vld [vmem:[%s3 + $0xb0] sm:$0xf]
      %v689 = vld [vmem:[%s3 + $0xb4] sm:$0xff]
      %v690 = vld [vmem:[%s3 + $0xbc] sm:$0xff]
      %v691 = vld [vmem:[%s3 + $0xc4] sm:$0xf]
      %v692 = vld [vmem:[%s3 + $0xc8] sm:$0xff]
      %v693 = vld [vmem:[%s3 + $0xd0] sm:$0xff]
      %v694 = vld [vmem:[%s3 + $0xd8] sm:$0xf]
      %v695 = vld [vmem:[%s3 + $0xdc] sm:$0xff]
      %v696 = vld [vmem:[%s3 + $0xe4] sm:$0xff]
      %v697 = vld [vmem:[%s3 + $0xec] sm:$0xf]
      %v698 = vld [vmem:[%s3 + $0xf0] sm:$0xff]
      %v699 = vld [vmem:[%s3 + $0xf8] sm:$0xff]
      %v700 = vld [vmem:[%s3 + $0x100] sm:$0xf]
      %v701 = vld [vmem:[%s3 + $0x104] sm:$0xff]
      %v702 = vld [vmem:[%s3 + $0x10c] sm:$0xff]
      %v703 = vld [vmem:[%s3 + $0x114] sm:$0xf]
      %v704 = vld [vmem:[%s3 + $0x118] sm:$0xff]
      %v705 = vld [vmem:[%s3 + $0x120] sm:$0xff]
      %v706 = vld [vmem:[%s3 + $0x128] sm:$0xf]
      %v707 = vld [vmem:[%s3 + $0x12c] sm:$0xff]
      %v708 = vld [vmem:[%s3 + $0x134] sm:$0xff]
      %v709 = vld [vmem:[%s3 + $0x13c] sm:$0xf]
      %v710 = vld [vmem:[%s3 + $0x140] sm:$0xff]
      %v711 = vld [vmem:[%s3 + $0x148] sm:$0xff]
      %v712 = vld [vmem:[%s3 + $0x150] sm:$0xf]
      %v713 = vld [vmem:[%s3 + $0x154] sm:$0xff]
      %v714 = vld [vmem:[%s3 + $0x15c] sm:$0xff]
      %v715 = vld [vmem:[%s3 + $0x164] sm:$0xf]
      %v716 = vld [vmem:[%s4] sm:$0x1f]
      %v718 = vlaneseq
      %v719 = vshrl.u32 %v718, 7
      %v720 = vsub.s32 0, %v719
      %v721 = vrot.slane %v716, %v720
      %v722 = vlaneseq
      %v723 = vshrl.u32 %v722, 7
      %v724 = vsub.s32 1, %v723
      %v725 = vrot.slane %v716, %v724
      %v726 = vlaneseq
      %v727 = vshrl.u32 %v726, 7
      %v728 = vsub.s32 2, %v727
      %v729 = vrot.slane %v716, %v728
      %v730 = vlaneseq
      %v731 = vshrl.u32 %v730, 7
      %v732 = vsub.s32 3, %v731
      %v733 = vrot.slane %v716, %v732
      %v734 = vlaneseq
      %v735 = vshrl.u32 %v734, 7
      %v736 = vsub.s32 4, %v735
      %v737 = vrot.slane %v716, %v736
      %v797 = vunpack.c.l.b16 %v662
      %v798 = vunpack.c.h.b16 %v662
      %v799 = vunpack.c.l.b16 %v663
      %v800 = vunpack.c.h.b16 %v663
      %v801 = vunpack.c.l.b16 %v664
      %v802 = vunpack.c.l.b16 %v665
      %v803 = vunpack.c.h.b16 %v665
      %v804 = vunpack.c.l.b16 %v666
      %v805 = vunpack.c.h.b16 %v666
      %v806 = vunpack.c.l.b16 %v667
      %v807 = vunpack.c.l.b16 %v668
      %v808 = vunpack.c.h.b16 %v668
      %v809 = vunpack.c.l.b16 %v669
      %v810 = vunpack.c.h.b16 %v669
      %v811 = vunpack.c.l.b16 %v670
      %v812 = vunpack.c.l.b16 %v671
      %v813 = vunpack.c.h.b16 %v671
      %v814 = vunpack.c.l.b16 %v672
      %v815 = vunpack.c.h.b16 %v672
      %v816 = vunpack.c.l.b16 %v673
      %v817 = vunpack.c.l.b16 %v674
      %v818 = vunpack.c.h.b16 %v674
      %v819 = vunpack.c.l.b16 %v675
      %v820 = vunpack.c.h.b16 %v675
      %v821 = vunpack.c.l.b16 %v676
      %v822 = vunpack.c.l.b16 %v677
      %v823 = vunpack.c.h.b16 %v677
      %v824 = vunpack.c.l.b16 %v678
      %v825 = vunpack.c.h.b16 %v678
      %v826 = vunpack.c.l.b16 %v679
      %v827 = vunpack.c.l.b16 %v680
      %v828 = vunpack.c.h.b16 %v680
      %v829 = vunpack.c.l.b16 %v681
      %v830 = vunpack.c.h.b16 %v681
      %v831 = vunpack.c.l.b16 %v682
      %v832 = vunpack.c.l.b16 %v683
      %v833 = vunpack.c.h.b16 %v683
      %v834 = vunpack.c.l.b16 %v684
      %v835 = vunpack.c.h.b16 %v684
      %v836 = vunpack.c.l.b16 %v685
      %v837 = vunpack.c.l.b16 %v686
      %v838 = vunpack.c.h.b16 %v686
      %v839 = vunpack.c.l.b16 %v687
      %v840 = vunpack.c.h.b16 %v687
      %v841 = vunpack.c.l.b16 %v688
      %v842 = vunpack.c.l.b16 %v689
      %v843 = vunpack.c.h.b16 %v689
      %v844 = vunpack.c.l.b16 %v690
      %v845 = vunpack.c.h.b16 %v690
      %v846 = vunpack.c.l.b16 %v691
      %v847 = vunpack.c.l.b16 %v692
      %v848 = vunpack.c.h.b16 %v692
      %v849 = vunpack.c.l.b16 %v693
      %v850 = vunpack.c.h.b16 %v693
      %v851 = vunpack.c.l.b16 %v694
      %v852 = vunpack.c.l.b16 %v695
      %v853 = vunpack.c.h.b16 %v695
      %v854 = vunpack.c.l.b16 %v696
      %v855 = vunpack.c.h.b16 %v696
      %v856 = vunpack.c.l.b16 %v697
      %v857 = vunpack.c.l.b16 %v698
      %v858 = vunpack.c.h.b16 %v698
      %v859 = vunpack.c.l.b16 %v699
      %v860 = vunpack.c.h.b16 %v699
      %v861 = vunpack.c.l.b16 %v700
      %v862 = vunpack.c.l.b16 %v701
      %v863 = vunpack.c.h.b16 %v701
      %v864 = vunpack.c.l.b16 %v702
      %v865 = vunpack.c.h.b16 %v702
      %v866 = vunpack.c.l.b16 %v703
      %v867 = vunpack.c.l.b16 %v704
      %v868 = vunpack.c.h.b16 %v704
      %v869 = vunpack.c.l.b16 %v705
      %v870 = vunpack.c.h.b16 %v705
      %v871 = vunpack.c.l.b16 %v706
      %v872 = vunpack.c.l.b16 %v707
      %v873 = vunpack.c.h.b16 %v707
      %v874 = vunpack.c.l.b16 %v708
      %v875 = vunpack.c.h.b16 %v708
      %v876 = vunpack.c.l.b16 %v709
      %v877 = vunpack.c.l.b16 %v710
      %v878 = vunpack.c.h.b16 %v710
      %v879 = vunpack.c.l.b16 %v711
      %v880 = vunpack.c.h.b16 %v711
      %v881 = vunpack.c.l.b16 %v712
      %v882 = vunpack.c.l.b16 %v713
      %v883 = vunpack.c.h.b16 %v713
      %v884 = vunpack.c.l.b16 %v714
      %v885 = vunpack.c.h.b16 %v714
      %v886 = vunpack.c.l.b16 %v715
      %v887 = vpack.c.b16 %v802, %v797
      %v888 = vpack.c.b16 %v803, %v798
      %v889 = vpack.c.b16 %v804, %v799
      %v890 = vpack.c.b16 %v805, %v800
      %v891 = vpack.c.b16 %v806, %v801
      %v892 = vpack.c.b16 %v812, %v807
      %v893 = vpack.c.b16 %v813, %v808
      %v894 = vpack.c.b16 %v814, %v809
      %v895 = vpack.c.b16 %v815, %v810
      %v896 = vpack.c.b16 %v816, %v811
      %v897 = vpack.c.b16 %v822, %v817
      %v898 = vpack.c.b16 %v823, %v818
      %v899 = vpack.c.b16 %v824, %v819
      %v900 = vpack.c.b16 %v825, %v820
      %v901 = vpack.c.b16 %v826, %v821
      %v902 = vpack.c.b16 %v832, %v827
      %v903 = vpack.c.b16 %v833, %v828
      %v904 = vpack.c.b16 %v834, %v829
      %v905 = vpack.c.b16 %v835, %v830
      %v906 = vpack.c.b16 %v836, %v831
      %v907 = vpack.c.b16 %v842, %v837
      %v908 = vpack.c.b16 %v843, %v838
      %v909 = vpack.c.b16 %v844, %v839
      %v910 = vpack.c.b16 %v845, %v840
      %v911 = vpack.c.b16 %v846, %v841
      %v912 = vpack.c.b16 %v852, %v847
      %v913 = vpack.c.b16 %v853, %v848
      %v914 = vpack.c.b16 %v854, %v849
      %v915 = vpack.c.b16 %v855, %v850
      %v916 = vpack.c.b16 %v856, %v851
      %v917 = vpack.c.b16 %v862, %v857
      %v918 = vpack.c.b16 %v863, %v858
      %v919 = vpack.c.b16 %v864, %v859
      %v920 = vpack.c.b16 %v865, %v860
      %v921 = vpack.c.b16 %v866, %v861
      %v922 = vpack.c.b16 %v872, %v867
      %v923 = vpack.c.b16 %v873, %v868
      %v924 = vpack.c.b16 %v874, %v869
      %v925 = vpack.c.b16 %v875, %v870
      %v926 = vpack.c.b16 %v876, %v871
      %v927 = vpack.c.b16 %v882, %v877
      %v928 = vpack.c.b16 %v883, %v878
      %v929 = vpack.c.b16 %v884, %v879
      %v930 = vpack.c.b16 %v885, %v880
      %v931 = vpack.c.b16 %v886, %v881
      %v978 = vsel %vm371, %v661, 0
      %980 = vmatprep.subr.bf16.mxu0 %v923
      %981 = vmatpush1.bf16.msra.mxu0 %v922
      %982 = vmatprep.subr.bf16.mxu0 %v918
      %983 = vmatpush1.bf16.msra.mxu0 %v917
      %984 = vmatprep.subr.bf16.mxu0 %v913
      %985 = vmatpush1.bf16.msra.mxu0 %v912
      %986 = vmatprep.subr.bf16.mxu0 %v908
      %987 = vmatpush1.bf16.msra.mxu0 %v907
      %988 = vmatprep.subr.bf16.mxu0 %v903
      %989 = vmatpush1.bf16.msra.mxu0 %v902
      %990 = vmatprep.subr.bf16.mxu0 %v898
      %991 = vmatpush1.bf16.msra.mxu0 %v897
      %992 = vmatprep.subr.bf16.mxu0 %v893
      %993 = vmatpush1.bf16.msra.mxu0 %v892
      %994 = vmatprep.subr.bf16.mxu0 %v888
      %995 = vmatpush1.bf16.msra.mxu0 %v887
      %996 = vmatprep.subr.bf16.mxu0 0
      %997 = vmatpush2.bf16.msra.mxu0 0
      %998 = vmatprep.subr.bf16.mxu0 0
      %999 = vmatpush2.bf16.msra.mxu0 0
      %1000 = vmatprep.subr.bf16.mxu0 0
      %1001 = vmatpush2.bf16.msra.mxu0 0
      %1002 = vmatprep.subr.bf16.mxu0 0
      %1003 = vmatpush2.bf16.msra.mxu0 0
      %1004 = vmatprep.subr.bf16.mxu0 0
      %1005 = vmatpush2.bf16.msra.mxu0 0
      %1006 = vmatprep.subr.bf16.mxu0 0
      %1007 = vmatpush2.bf16.msra.mxu0 0
      %1008 = vmatprep.subr.bf16.mxu0 0
      %1009 = vmatpush2.bf16.msra.mxu0 0
      %1010 = vmatprep.subr.bf16.mxu0 %v928
      %1011 = vmatpush2.bf16.msra.mxu0 %v927
      %1012 = vmatprep.mubr.bf16.mxu0 %v978
      %1013 = vmatmul.mubr.bf16.gmra.mxu0 %v660
      %v1014 = vpop.f32.mrf.mxu0
      %v1015 = vadd.f32 %v721, %v1014
      %v1016 = vpop.f32.mrf.mxu0
      %v1017 = vadd.f32 %v725, %v1016
      %v1018 = vpop.f32.mrf.mxu0
      %v1019 = vadd.f32 %v721, %v1018
      %v1020 = vpop.f32.mrf.mxu0
      %v1021 = vadd.f32 %v725, %v1020
      %1022 = vdwg.mxu0
      %1023 = vmatprep.subr.bf16.mxu0 %v925
      %1024 = vmatpush1.bf16.msra.mxu0 %v924
      %1025 = vmatprep.subr.bf16.mxu0 %v920
      %1026 = vmatpush1.bf16.msra.mxu0 %v919
      %1027 = vmatprep.subr.bf16.mxu0 %v915
      %1028 = vmatpush1.bf16.msra.mxu0 %v914
      %1029 = vmatprep.subr.bf16.mxu0 %v910
      %1030 = vmatpush1.bf16.msra.mxu0 %v909
      %1031 = vmatprep.subr.bf16.mxu0 %v905
      %1032 = vmatpush1.bf16.msra.mxu0 %v904
      %1033 = vmatprep.subr.bf16.mxu0 %v900
      %1034 = vmatpush1.bf16.msra.mxu0 %v899
      %1035 = vmatprep.subr.bf16.mxu0 %v895
      %1036 = vmatpush1.bf16.msra.mxu0 %v894
      %1037 = vmatprep.subr.bf16.mxu0 %v890
      %1038 = vmatpush1.bf16.msra.mxu0 %v889
      %1039 = vmatprep.subr.bf16.mxu0 0
      %1040 = vmatpush2.bf16.msra.mxu0 0
      %1041 = vmatprep.subr.bf16.mxu0 0
      %1042 = vmatpush2.bf16.msra.mxu0 0
      %1043 = vmatprep.subr.bf16.mxu0 0
      %1044 = vmatpush2.bf16.msra.mxu0 0
      %1045 = vmatprep.subr.bf16.mxu0 0
      %1046 = vmatpush2.bf16.msra.mxu0 0
      %1047 = vmatprep.subr.bf16.mxu0 0
      %1048 = vmatpush2.bf16.msra.mxu0 0
      %1049 = vmatprep.subr.bf16.mxu0 0
      %1050 = vmatpush2.bf16.msra.mxu0 0
      %1051 = vmatprep.subr.bf16.mxu0 0
      %1052 = vmatpush2.bf16.msra.mxu0 0
      %1053 = vmatprep.subr.bf16.mxu0 %v930
      %1054 = vmatpush2.bf16.msra.mxu0 %v929
      %1055 = vmatprep.mubr.bf16.mxu0 %v978
      %1056 = vmatmul.mubr.bf16.gmra.mxu0 %v660
      %v1057 = vpop.f32.mrf.mxu0
      %v1058 = vadd.f32 %v729, %v1057
      %v1059 = vpop.f32.mrf.mxu0
      %v1060 = vadd.f32 %v733, %v1059
      %v1061 = vpop.f32.mrf.mxu0
      %v1062 = vadd.f32 %v729, %v1061
      %v1063 = vpop.f32.mrf.mxu0
      %v1064 = vadd.f32 %v733, %v1063
      %1065 = vdwg.mxu0
      %1066 = vmatprep.subr.bf16.mxu0 0
      %1067 = vmatpush1.bf16.msra.mxu0 %v926
      %1068 = vmatprep.subr.bf16.mxu0 0
      %1069 = vmatpush1.bf16.msra.mxu0 %v921
      %1070 = vmatprep.subr.bf16.mxu0 0
      %1071 = vmatpush1.bf16.msra.mxu0 %v916
      %1072 = vmatprep.subr.bf16.mxu0 0
      %1073 = vmatpush1.bf16.msra.mxu0 %v911
      %1074 = vmatprep.subr.bf16.mxu0 0
      %1075 = vmatpush1.bf16.msra.mxu0 %v906
      %1076 = vmatprep.subr.bf16.mxu0 0
      %1077 = vmatpush1.bf16.msra.mxu0 %v901
      %1078 = vmatprep.subr.bf16.mxu0 0
      %1079 = vmatpush1.bf16.msra.mxu0 %v896
      %1080 = vmatprep.subr.bf16.mxu0 0
      %1081 = vmatpush1.bf16.msra.mxu0 %v891
      %1082 = vmatprep.subr.bf16.mxu0 0
      %1083 = vmatpush2.bf16.msra.mxu0 0
      %1084 = vmatprep.subr.bf16.mxu0 0
      %1085 = vmatpush2.bf16.msra.mxu0 0
      %1086 = vmatprep.subr.bf16.mxu0 0
      %1087 = vmatpush2.bf16.msra.mxu0 0
      %1088 = vmatprep.subr.bf16.mxu0 0
      %1089 = vmatpush2.bf16.msra.mxu0 0
      %1090 = vmatprep.subr.bf16.mxu0 0
      %1091 = vmatpush2.bf16.msra.mxu0 0
      %1092 = vmatprep.subr.bf16.mxu0 0
      %1093 = vmatpush2.bf16.msra.mxu0 0
      %1094 = vmatprep.subr.bf16.mxu0 0
      %1095 = vmatpush2.bf16.msra.mxu0 0
      %1096 = vmatprep.subr.bf16.mxu0 0
      %1097 = vmatpush2.bf16.msra.mxu0 %v931
      %1098 = vmatprep.mubr.bf16.mxu0 %v978
      %1099 = vmatmul.mubr.bf16.gmra.mxu0 %v660
      %v1100 = vpop.f32.mrf.mxu0
      %v1101 = vadd.f32 %v737, %v1100
      %v1102 = vpop.f32.mrf.mxu0
      %v1103 = vpop.f32.mrf.mxu0
      %v1104 = vadd.f32 %v737, %v1103
      %v1105 = vpop.f32.mrf.mxu0
      %1106 = vdwg.mxu0
      %1107 = vst [vmem:[%s224] sm:$0xff] %v1015
      %1108 = vst [vmem:[%s224 + $0x8] sm:$0xff] %v1017
      %1109 = vst [vmem:[%s224 + $0x10] sm:$0xff] %v1058
      %1110 = vst [vmem:[%s224 + $0x18] sm:$0xff] %v1060
      %1111 = vst [vmem:[%s224 + $0x20] sm:$0xff] %v1101
      %1112 = vst [vmem:[%s224 + $0x28] sm:$0xff] %v1019
      %1113 = vst [vmem:[%s224 + $0x30] sm:$0xff] %v1021
      %1114 = vst [vmem:[%s224 + $0x38] sm:$0xff] %v1062
      %1115 = vst [vmem:[%s224 + $0x40] sm:$0xff] %v1064
      %1116 = vst [vmem:[%s224 + $0x48] sm:$0xff] %v1104
      %p1117 = scmp.lt.s32.totalorder %s16, 1
      %s1118 = scalar_select %p1117, %s16, 1
      %s1119 = smul.addr %s1118, 10
      %s1120 = smul.addr %s1119, 8
      %s1121 = scalar_lea.vmem %s5, %s1120
      // Predicated region
      $region41: #{_lambda_.3} parent=39 // pred_check
        %p1122 = pneg %p144
      $region42: #{_lambda_.3} parent=39 // pred_check_branch
        %1124 = sbr.rel (%p1122) target = $region44
      $region43: #{_lambda_.3} parent=39 // pred_region
        _
      $region44: #{_lambda_.3} parent=39 // pred_fallthru
        _
    $region40: #{_lambda_.3} parent=5 // pred_fallthru
      _
    %p1125 = scmp.le.s32.totalorder 2, %s11
    // Predicated region
    $region45: #{_lambda_.3} parent=5 // pred_check
      %p1126 = pneg %p1125
    $region46: #{_lambda_.3} parent=5 // pred_check_branch
      %1128 = sbr.rel (%p1126) target = $region48
    $region47: #{_lambda_.3} parent=5 // pred_region
      %s1129 = ssub.s32 %s11, 2
      // Predicated region
      $region49: #{_lambda_.3} parent=47 // pred_check
        %p1130 = pneg %p150
      $region50: #{_lambda_.3} parent=47 // pred_check_branch
        %1132 = sbr.rel (%p1130) target = $region52
      $region51: #{_lambda_.3} parent=47 // pred_region
        %p1133 = scmp.lt.s32.totalorder %s17, 1
        %s1134 = scalar_select %p1133, %s17, 1
        %s1135 = smul.addr %s1134, 10
        %s1136 = smul.addr %s1135, 8
        %s1137 = scalar_lea.vmem %s5, %s1136
      $region52: #{_lambda_.3} parent=47 // pred_fallthru
        _
    $region48: #{_lambda_.3} parent=5 // pred_fallthru
      _
  $region6: #{_lambda_.3} parent=0 // loop_footer
    %s15 = sadd.s32 1, %s11
  $region7: #{_lambda_.3} parent=0 // loop_footer_branch
    %10 = sbr.rel target = $region3
  $region8: #{_lambda_.3} parent=0 // loop_exit
    _

// kernel: _lambda_.5
$region0: #{_lambda_.5}
  #allocation0 [shape = 'u32[]', space=smem, size = 0x4, offset = 0x4, fixed_abs, tag = 'smem constant byte address 0x4 - core index']
  #allocation1 [shape = 'u32[144,128]{1,0:T(1,128)}', space=vmem, size = 0x12000, scoped, tag = 'internal scratch']
  %s0 = inlined_call_operand.vmem [shape: f32[2,2,1024], index: 0, kind: input, shape index: {}]
  %s1 = inlined_call_operand.vmem [shape: bf16[2,96,32], index: 1, kind: input, shape index: {}]
  %s2 = inlined_call_operand.vmem [shape: f32[2,3,1024], index: 2, kind: output, shape index: {}]
  %s3 = sld [smem:[#allocation0]]
  $region41: #{_lambda_.5} parent=0
    _
  %s5 = ssub.s32 1, %s3
  %s6 = scalar_select 0, %s5, %s3
  loop: start=0, step=1, limit=10
  $region2: #{_lambda_.5} parent=0 // loop_pre_header
    _
  $region3: #{_lambda_.5} parent=0 // loop_header
    %s8 = sphi 0, %s12
    %p9 = scmp.ge.s32.totalorder %s8, 10
    %s15 = sphi 0, %s27
    %s16 = sphi 0, %s23
    %s17 = sphi 0, %s15
    %s18 = sphi 0, %s16
    %s19 = sphi 0, %s17
    %s20 = sphi 0, %s18
    %s32 = sphi 0, %s34
    %s35 = sphi 0, %s32
    %s36 = sphi 0, %s35
    %s52 = sphi 0, %s36
    %s58 = sphi 0, %s60
    %s61 = sphi 0, %s58
    %s62 = sphi 0, %s61
    %s78 = sphi 0, %s62
    %s86 = sphi 0, %s88
    %s89 = sphi 0, %s86
    %s90 = sphi 0, %s89
    %s106 = sphi 0, %s90
  $region4: #{_lambda_.5} parent=0 // loop_header_branch
    %11 = sbr.rel (%p9) target = $region8
  $region5: #{_lambda_.5} parent=0 // loop_body
    %s13 = ssub.s32 %s8, 1
    %s14 = ssub.s32 %s8, 2
    %s21 = sadd.s32 1, %s16
    %p22 = scmp.ge.s32.totalorder %s21, 4
    %s23 = scalar_select %p22, 0, %s21
    %s24 = sadd.s32 1, %s15
    %s25 = scalar_select %p22, %s24, %s15
    %p26 = scmp.ge.s32.totalorder %s25, 2
    %s27 = scalar_select %p26, 0, %s25
    %s28 = ssub.s32 %s15, %s27
    %s29 = ssub.s32 %s16, %s23
    %s30 = sor.u32 %s28, %s29
    %p31 = scmp.eq.s32.totalorder %s30, 0
    %s33 = sadd.s32 %s32, 1
    %s34 = scalar_select %p31, %s32, %s33
    %p37 = pneg %p31
    %p38 = scmp.eq.s32.totalorder %s8, 7
    %p39 = por %p37, %p38
    %p40 = scmp.ne.s32.totalorder %s32, %s35
    %p41 = scmp.eq.s32.totalorder %s8, 0
    %p42 = por %p40, %p41
    %p43 = scmp.ne.s32.totalorder %s32, %s35
    %p44 = scmp.eq.s32.totalorder %s13, 7
    %p45 = por %p43, %p44
    %p46 = scmp.ne.s32.totalorder %s35, %s36
    %p47 = scmp.eq.s32.totalorder %s13, 0
    %p48 = por %p46, %p47
    %p49 = scmp.ne.s32.totalorder %s35, %s36
    %p50 = scmp.eq.s32.totalorder %s14, 7
    %p51 = por %p49, %p50
    %p53 = scmp.ne.s32.totalorder %s36, %s52
    %p54 = scmp.eq.s32.totalorder %s14, 0
    %p55 = por %p53, %p54
    %s56 = ssub.s32 %s15, %s27
    %p57 = scmp.eq.s32.totalorder %s56, 0
    %s59 = sadd.s32 %s58, 1
    %s60 = scalar_select %p57, %s58, %s59
    %p63 = pneg %p57
    %p64 = scmp.eq.s32.totalorder %s8, 7
    %p65 = por %p63, %p64
    %p66 = scmp.ne.s32.totalorder %s58, %s61
    %p67 = scmp.eq.s32.totalorder %s8, 0
    %p68 = por %p66, %p67
    %p69 = scmp.ne.s32.totalorder %s58, %s61
    %p70 = scmp.eq.s32.totalorder %s13, 7
    %p71 = por %p69, %p70
    %p72 = scmp.ne.s32.totalorder %s61, %s62
    %p73 = scmp.eq.s32.totalorder %s13, 0
    %p74 = por %p72, %p73
    %p75 = scmp.ne.s32.totalorder %s61, %s62
    %p76 = scmp.eq.s32.totalorder %s14, 7
    %p77 = por %p75, %p76
    %p79 = scmp.ne.s32.totalorder %s62, %s78
    %p80 = scmp.eq.s32.totalorder %s14, 0
    %p81 = por %p79, %p80
    %s82 = ssub.s32 %s15, %s27
    %s83 = ssub.s32 %s16, %s23
    %s84 = sor.u32 %s82, %s83
    %p85 = scmp.eq.s32.totalorder %s84, 0
    %s87 = sadd.s32 %s86, 1
    %s88 = scalar_select %p85, %s86, %s87
    %p91 = pneg %p85
    %p92 = scmp.eq.s32.totalorder %s8, 7
    %p93 = por %p91, %p92
    %p94 = scmp.ne.s32.totalorder %s86, %s89
    %p95 = scmp.eq.s32.totalorder %s8, 0
    %p96 = por %p94, %p95
    %p97 = scmp.ne.s32.totalorder %s86, %s89
    %p98 = scmp.eq.s32.totalorder %s13, 7
    %p99 = por %p97, %p98
    %p100 = scmp.ne.s32.totalorder %s89, %s90
    %p101 = scmp.eq.s32.totalorder %s13, 0
    %p102 = por %p100, %p101
    %p103 = scmp.ne.s32.totalorder %s89, %s90
    %p104 = scmp.eq.s32.totalorder %s14, 7
    %p105 = por %p103, %p104
    %p107 = scmp.ne.s32.totalorder %s90, %s106
    %p108 = scmp.eq.s32.totalorder %s14, 0
    %p109 = por %p107, %p108
    %p110 = scmp.le.s32.totalorder 1, %s8
    %p111 = scmp.lt.s32.totalorder %s8, 9
    %p112 = pnand %p110, %p111
    %p113 = pneg %p112
    // Predicated region
    $region9: #{_lambda_.5} parent=5 // pred_check
      _
    $region10: #{_lambda_.5} parent=5 // pred_check_branch
      %115 = sbr.rel (%p112) target = $region12
    $region11: #{_lambda_.5} parent=5 // pred_region
      %s116 = ssub.s32 %s8, 1
    $region12: #{_lambda_.5} parent=5 // pred_fallthru
      _
    %p117 = scmp.lt.s32.totalorder %s8, 8
    // Predicated region
    $region13: #{_lambda_.5} parent=5 // pred_check
      %p118 = pneg %p117
    $region14: #{_lambda_.5} parent=5 // pred_check_branch
      %120 = sbr.rel (%p118) target = $region16
    $region15: #{_lambda_.5} parent=5 // pred_region
      // Predicated region
      $region17: #{_lambda_.5} parent=15 // pred_check
        %p121 = pneg %p42
      $region18: #{_lambda_.5} parent=15 // pred_check_branch
        %123 = sbr.rel (%p121) target = $region20
      $region19: #{_lambda_.5} parent=15 // pred_region
        %s124 = smul.u32 2, %s16
        %p125 = scmp.lt.s32.totalorder %s15, 1
        %s126 = scalar_select %p125, %s15, 1
        %p127 = scmp.lt.s32.totalorder %s124, 7
        %s128 = scalar_select %p127, %s124, 7
        %s129 = smul.addr %s126, 8
        %s130 = sadd.s32 %s128, %s129
        %s131 = smul.addr %s130, 2
        %s132 = scalar_lea.vmem %s0, %s131
        %s133 = smul.u32 2, %s16
      $region20: #{_lambda_.5} parent=15 // pred_fallthru
        _
      // Predicated region
      $region21: #{_lambda_.5} parent=15 // pred_check
        %p134 = pneg %p68
      $region22: #{_lambda_.5} parent=15 // pred_check_branch
        %136 = sbr.rel (%p134) target = $region24
      $region23: #{_lambda_.5} parent=15 // pred_region
        %p137 = scmp.lt.s32.totalorder %s15, 1
        %s138 = scalar_select %p137, %s15, 1
        %s139 = smul.addr %s138, 12
        %s140 = smul.addr %s139, 4
        %s141 = scalar_lea.vmem %s1, %s140
      $region24: #{_lambda_.5} parent=15 // pred_fallthru
        _
    $region16: #{_lambda_.5} parent=5 // pred_fallthru
      _
    %p142 = scmp.le.s32.totalorder 1, %s8
    %p143 = scmp.lt.s32.totalorder %s8, 9
    %p144 = pnand %p142, %p143
    %p145 = pneg %p144
    // Predicated region
    $region25: #{_lambda_.5} parent=5 // pred_check
      _
    $region26: #{_lambda_.5} parent=5 // pred_check_branch
      %147 = sbr.rel (%p144) target = $region28
    $region27: #{_lambda_.5} parent=5 // pred_region
      %s148 = ssub.s32 %s8, 1
      %s149 = smul.u32 2, %s18
      %p150 = scmp.lt.s32.totalorder %s17, 1
      %s151 = scalar_select %p150, %s17, 1
      %p152 = scmp.lt.s32.totalorder %s149, 7
      %s153 = scalar_select %p152, %s149, 7
      %s154 = smul.addr %s151, 8
      %s155 = sadd.s32 %s153, %s154
      %s156 = smul.addr %s155, 2
      %s157 = scalar_lea.vmem %s0, %s156
      %p158 = pneg %p48
      %p159 = pneg %p45
      %p160 = scmp.lt.s32.totalorder %s17, 1
      %s161 = scalar_select %p160, %s17, 1
      %s162 = smul.addr %s161, 12
      %s163 = smul.addr %s162, 4
      %s164 = scalar_lea.vmem %s1, %s163
      %p165 = pneg %p74
      %p166 = pneg %p71
      %p167 = pneg %p102
      %p168 = pneg %p99
      %s169 = smul.u32 2, %s18
      %p170 = scmp.lt.s32.totalorder %s17, 1
      %s171 = scalar_select %p170, %s17, 1
      %p172 = scmp.lt.s32.totalorder %s169, 7
      %s173 = scalar_select %p172, %s169, 7
      %s174 = smul.addr %s171, 8
      %s175 = sadd.s32 %s173, %s174
      %s176 = smul.addr %s175, 4
      %s177 = scalar_lea.vmem %s2, %s176
      %s178 = smul.u32 2, %s18
      %p179 = scmp.lt.s32.totalorder %s17, 1
      %s180 = scalar_select %p179, %s17, 1
      %p181 = scmp.lt.s32.totalorder %s178, 7
      %s182 = scalar_select %p181, %s178, 7
      %s183 = smul.addr %s180, 8
      %s184 = sadd.s32 %s182, %s183
      %s185 = smul.addr %s184, 2
      %s186 = scalar_lea.vmem %s0, %s185
      %s187 = smul.u32 2, %s18
      %p188 = scmp.lt.s32.totalorder %s17, 1
      %s189 = scalar_select %p188, %s17, 1
      %s190 = smul.addr %s189, 12
      %s191 = smul.addr %s190, 4
      %s192 = scalar_lea.vmem %s1, %s191
      %s193 = smul.u32 2, %s18
      %p194 = scmp.lt.s32.totalorder %s17, 1
      %s195 = scalar_select %p194, %s17, 1
      %p196 = scmp.lt.s32.totalorder %s193, 7
      %s197 = scalar_select %p196, %s193, 7
      %s198 = smul.addr %s195, 8
      %s199 = sadd.s32 %s197, %s198
      %s200 = smul.addr %s199, 4
      %s201 = scalar_lea.vmem %s2, %s200
      %s202 = smul.u32 2, %s18
      %v204 = vld [vmem:[%s186] ss:$2 sm:$0x3]
      %s205 = scalar_lea.vmem %s186, 1
      %v206 = vld [vmem:[%s205] ss:$2 sm:$0x3]
      %v207 = vadd.f32 %v204, 1.0
      %v208 = vmul.f32 %v207, 16.0
      %v209 = vsub.f32 %v208, 0.5
      %v210 = vmax.f32 %v209, 0.0
      %v211 = vmin.f32 %v210, 31.0
      %v212 = vadd.f32 %v206, 1.0
      %v213 = vmul.f32 %v212, 16.0
      %v214 = vsub.f32 %v213, 0.5
      %v215 = vmax.f32 %v214, 0.0
      %v216 = vmin.f32 %v215, 31.0
      %v217 = vfloor.f32 %v211
      %v218 = vfloor.f32 %v216
      %v219 = vsub.f32 %v211, %v217
      %v220 = vsub.f32 1.0, %v219
      %v221 = vsub.f32 %v216, %v218
      %v222 = vsub.f32 1.0, %v221
      %v223 = vcvt.f32.s32.to.zero.pseudo %v217
      %v224 = vcvt.f32.s32.to.zero.pseudo %v218
      %v225 = vadd.s32 %v223, 1
      %vm226 = vcmp.lt.s32.totalorder %v225, 31
      %v227 = vsel %vm226, %v225, 31
      %v228 = vadd.s32 %v224, 1
      %vm229 = vcmp.lt.s32.totalorder %v228, 31
      %v230 = vsel %vm229, %v228, 31
      %v231 = vlaneseq
      %v232 = vshrl.u32 %v231, 7
      %v233 = vadd.s32 %v232, 8
      %v234 = vadd.s32 %v232, 16
      %v235 = vadd.s32 %v232, 24
      %v236 = vlaneseq
      %v237 = vshrl.u32 %v236, 7
      %v238 = vsub.s32 0, %v237
      %v239 = vrot.slane %v223, %v238
      %v240 = vlaneseq
      %v241 = vshrl.u32 %v240, 7
      %v242 = vsub.s32 1, %v241
      %v243 = vrot.slane %v223, %v242
      %vm244 = vcmp.eq.s32.totalorder %v232, %v239
      %vm245 = vcmp.eq.s32.totalorder %v232, %v243
      %vm246 = vcmp.eq.s32.totalorder %v233, %v239
      %vm247 = vcmp.eq.s32.totalorder %v233, %v243
      %vm248 = vcmp.eq.s32.totalorder %v234, %v239
      %vm249 = vcmp.eq.s32.totalorder %v234, %v243
      %vm250 = vcmp.eq.s32.totalorder %v235, %v239
      %vm251 = vcmp.eq.s32.totalorder %v235, %v243
      %v252 = vsel %vm244, 1, 0
      %v253 = vsel %vm245, 1, 0
      %v254 = vsel %vm246, 1, 0
      %v255 = vsel %vm247, 1, 0
      %v256 = vsel %vm248, 1, 0
      %v257 = vsel %vm249, 1, 0
      %v258 = vsel %vm250, 1, 0
      %v259 = vsel %vm251, 1, 0
      %v260 = vcvt.s32.f32 %v252
      %v261 = vcvt.s32.f32 %v253
      %v262 = vcvt.s32.f32 %v254
      %v263 = vcvt.s32.f32 %v255
      %v264 = vcvt.s32.f32 %v256
      %v265 = vcvt.s32.f32 %v257
      %v266 = vcvt.s32.f32 %v258
      %v267 = vcvt.s32.f32 %v259
      %v269 = vlaneseq
      %v270 = vshrl.u32 %v269, 7
      %v271 = vsub.s32 0, %v270
      %v272 = vrot.slane %v220, %v271
      %v273 = vlaneseq
      %v274 = vshrl.u32 %v273, 7
      %v275 = vsub.s32 1, %v274
      %v276 = vrot.slane %v220, %v275
      %v279 = vmul.f32 %v272, %v260
      %v280 = vmul.f32 %v276, %v261
      %v281 = vmul.f32 %v272, %v262
      %v282 = vmul.f32 %v276, %v263
      %v283 = vmul.f32 %v272, %v264
      %v284 = vmul.f32 %v276, %v265
      %v285 = vmul.f32 %v272, %v266
      %v286 = vmul.f32 %v276, %v267
      %v287 = vlaneseq
      %v288 = vshrl.u32 %v287, 7
      %v289 = vsub.s32 0, %v288
      %v290 = vrot.slane %v227, %v289
      %v291 = vlaneseq
      %v292 = vshrl.u32 %v291, 7
      %v293 = vsub.s32 1, %v292
      %v294 = vrot.slane %v227, %v293
      %vm295 = vcmp.eq.s32.totalorder %v232, %v290
      %vm296 = vcmp.eq.s32.totalorder %v232, %v294
      %vm297 = vcmp.eq.s32.totalorder %v233, %v290
      %vm298 = vcmp.eq.s32.totalorder %v233, %v294
      %vm299 = vcmp.eq.s32.totalorder %v234, %v290
      %vm300 = vcmp.eq.s32.totalorder %v234, %v294
      %vm301 = vcmp.eq.s32.totalorder %v235, %v290
      %vm302 = vcmp.eq.s32.totalorder %v235, %v294
      %v303 = vsel %vm295, 1, 0
      %v304 = vsel %vm296, 1, 0
      %v305 = vsel %vm297, 1, 0
      %v306 = vsel %vm298, 1, 0
      %v307 = vsel %vm299, 1, 0
      %v308 = vsel %vm300, 1, 0
      %v309 = vsel %vm301, 1, 0
      %v310 = vsel %vm302, 1, 0
      %v311 = vcvt.s32.f32 %v303
      %v312 = vcvt.s32.f32 %v304
      %v313 = vcvt.s32.f32 %v305
      %v314 = vcvt.s32.f32 %v306
      %v315 = vcvt.s32.f32 %v307
      %v316 = vcvt.s32.f32 %v308
      %v317 = vcvt.s32.f32 %v309
      %v318 = vcvt.s32.f32 %v310
      %v320 = vlaneseq
      %v321 = vshrl.u32 %v320, 7
      %v322 = vsub.s32 0, %v321
      %v323 = vrot.slane %v219, %v322
      %v324 = vlaneseq
      %v325 = vshrl.u32 %v324, 7
      %v326 = vsub.s32 1, %v325
      %v327 = vrot.slane %v219, %v326
      %v330 = vmul.f32 %v323, %v311
      %v331 = vmul.f32 %v327, %v312
      %v332 = vmul.f32 %v323, %v313
      %v333 = vmul.f32 %v327, %v314
      %v334 = vmul.f32 %v323, %v315
      %v335 = vmul.f32 %v327, %v316
      %v336 = vmul.f32 %v323, %v317
      %v337 = vmul.f32 %v327, %v318
      %v338 = vadd.f32 %v279, %v330
      %v339 = vadd.f32 %v280, %v331
      %v340 = vadd.f32 %v281, %v332
      %v341 = vadd.f32 %v282, %v333
      %v342 = vadd.f32 %v283, %v334
      %v343 = vadd.f32 %v284, %v335
      %v344 = vadd.f32 %v285, %v336
      %v345 = vadd.f32 %v286, %v337
      %v346 = vlaneseq
      %v347 = vshrl.u32 %v346, 7
      %v348 = vsub.s32 0, %v347
      %v349 = vrot.slane %v224, %v348
      %v350 = vlaneseq
      %v351 = vshrl.u32 %v350, 7
      %v352 = vsub.s32 1, %v351
      %v353 = vrot.slane %v224, %v352
      %vm354 = vcmp.eq.s32.totalorder %v232, %v349
      %vm355 = vcmp.eq.s32.totalorder %v232, %v353
      %vm356 = vcmp.eq.s32.totalorder %v233, %v349
      %vm357 = vcmp.eq.s32.totalorder %v233, %v353
      %vm358 = vcmp.eq.s32.totalorder %v234, %v349
      %vm359 = vcmp.eq.s32.totalorder %v234, %v353
      %vm360 = vcmp.eq.s32.totalorder %v235, %v349
      %vm361 = vcmp.eq.s32.totalorder %v235, %v353
      %v362 = vsel %vm354, 1, 0
      %v363 = vsel %vm355, 1, 0
      %v364 = vsel %vm356, 1, 0
      %v365 = vsel %vm357, 1, 0
      %v366 = vsel %vm358, 1, 0
      %v367 = vsel %vm359, 1, 0
      %v368 = vsel %vm360, 1, 0
      %v369 = vsel %vm361, 1, 0
      %v370 = vcvt.s32.f32 %v362
      %v371 = vcvt.s32.f32 %v363
      %v372 = vcvt.s32.f32 %v364
      %v373 = vcvt.s32.f32 %v365
      %v374 = vcvt.s32.f32 %v366
      %v375 = vcvt.s32.f32 %v367
      %v376 = vcvt.s32.f32 %v368
      %v377 = vcvt.s32.f32 %v369
      %v379 = vlaneseq
      %v380 = vshrl.u32 %v379, 7
      %v381 = vsub.s32 0, %v380
      %v382 = vrot.slane %v222, %v381
      %v383 = vlaneseq
      %v384 = vshrl.u32 %v383, 7
      %v385 = vsub.s32 1, %v384
      %v386 = vrot.slane %v222, %v385
      %v389 = vmul.f32 %v382, %v370
      %v390 = vmul.f32 %v386, %v371
      %v391 = vmul.f32 %v382, %v372
      %v392 = vmul.f32 %v386, %v373
      %v393 = vmul.f32 %v382, %v374
      %v394 = vmul.f32 %v386, %v375
      %v395 = vmul.f32 %v382, %v376
      %v396 = vmul.f32 %v386, %v377
      %v397 = vlaneseq
      %v398 = vshrl.u32 %v397, 7
      %v399 = vsub.s32 0, %v398
      %v400 = vrot.slane %v230, %v399
      %v401 = vlaneseq
      %v402 = vshrl.u32 %v401, 7
      %v403 = vsub.s32 1, %v402
      %v404 = vrot.slane %v230, %v403
      %vm405 = vcmp.eq.s32.totalorder %v232, %v400
      %vm406 = vcmp.eq.s32.totalorder %v232, %v404
      %vm407 = vcmp.eq.s32.totalorder %v233, %v400
      %vm408 = vcmp.eq.s32.totalorder %v233, %v404
      %vm409 = vcmp.eq.s32.totalorder %v234, %v400
      %vm410 = vcmp.eq.s32.totalorder %v234, %v404
      %vm411 = vcmp.eq.s32.totalorder %v235, %v400
      %vm412 = vcmp.eq.s32.totalorder %v235, %v404
      %v413 = vsel %vm405, 1, 0
      %v414 = vsel %vm406, 1, 0
      %v415 = vsel %vm407, 1, 0
      %v416 = vsel %vm408, 1, 0
      %v417 = vsel %vm409, 1, 0
      %v418 = vsel %vm410, 1, 0
      %v419 = vsel %vm411, 1, 0
      %v420 = vsel %vm412, 1, 0
      %v421 = vcvt.s32.f32 %v413
      %v422 = vcvt.s32.f32 %v414
      %v423 = vcvt.s32.f32 %v415
      %v424 = vcvt.s32.f32 %v416
      %v425 = vcvt.s32.f32 %v417
      %v426 = vcvt.s32.f32 %v418
      %v427 = vcvt.s32.f32 %v419
      %v428 = vcvt.s32.f32 %v420
      %v430 = vlaneseq
      %v431 = vshrl.u32 %v430, 7
      %v432 = vsub.s32 0, %v431
      %v433 = vrot.slane %v221, %v432
      %v434 = vlaneseq
      %v435 = vshrl.u32 %v434, 7
      %v436 = vsub.s32 1, %v435
      %v437 = vrot.slane %v221, %v436
      %v440 = vmul.f32 %v433, %v421
      %v441 = vmul.f32 %v437, %v422
      %v442 = vmul.f32 %v433, %v423
      %v443 = vmul.f32 %v437, %v424
      %v444 = vmul.f32 %v433, %v425
      %v445 = vmul.f32 %v437, %v426
      %v446 = vmul.f32 %v433, %v427
      %v447 = vmul.f32 %v437, %v428
      %v448 = vadd.f32 %v389, %v440
      %v449 = vadd.f32 %v390, %v441
      %v450 = vadd.f32 %v391, %v442
      %v451 = vadd.f32 %v392, %v443
      %v452 = vadd.f32 %v393, %v444
      %v453 = vadd.f32 %v394, %v445
      %v454 = vadd.f32 %v395, %v446
      %v455 = vadd.f32 %v396, %v447
      %v456 = vld [vmem:[%s192] sm:$0xf]
      %v457 = vld [vmem:[%s192 + $0x4] sm:$0xf]
      %v458 = vld [vmem:[%s192 + $0x8] sm:$0xf]
      %v459 = vld [vmem:[%s192 + $0xc] sm:$0xf]
      %v460 = vld [vmem:[%s192 + $0x10] sm:$0xf]
      %v461 = vld [vmem:[%s192 + $0x14] sm:$0xf]
      %v462 = vld [vmem:[%s192 + $0x18] sm:$0xf]
      %v463 = vld [vmem:[%s192 + $0x1c] sm:$0xf]
      %v464 = vld [vmem:[%s192 + $0x20] sm:$0xf]
      %v465 = vld [vmem:[%s192 + $0x24] sm:$0xf]
      %v466 = vld [vmem:[%s192 + $0x28] sm:$0xf]
      %v467 = vld [vmem:[%s192 + $0x2c] sm:$0xf]
      %v468 = vpack.c.bf16 %v340, %v338
      %v469 = vpack.c.bf16 %v341, %v339
      %v470 = vpack.c.bf16 %v344, %v342
      %v471 = vpack.c.bf16 %v345, %v343
      %v484 = vunpack.c.l.b16 %v456
      %v485 = vunpack.c.l.b16 %v457
      %v486 = vunpack.c.l.b16 %v458
      %v487 = vunpack.c.l.b16 %v459
      %v488 = vunpack.c.l.b16 %v460
      %v489 = vunpack.c.l.b16 %v461
      %v490 = vunpack.c.l.b16 %v462
      %v491 = vunpack.c.l.b16 %v463
      %v492 = vunpack.c.l.b16 %v464
      %v493 = vunpack.c.l.b16 %v465
      %v494 = vunpack.c.l.b16 %v466
      %v495 = vunpack.c.l.b16 %v467
      %v496 = vpack.c.b16 %v485, %v484
      %v497 = vpack.c.b16 %v487, %v486
      %v498 = vpack.c.b16 %v489, %v488
      %v499 = vpack.c.b16 %v491, %v490
      %v500 = vpack.c.b16 %v493, %v492
      %v501 = vpack.c.b16 %v495, %v494
      %vm502 = vcmask 261120
      %v504 = vsel %vm502, %v496, 0
      %v507 = vsel %vm502, %v497, 0
      %v510 = vsel %vm502, %v498, 0
      %v513 = vsel %vm502, %v499, 0
      %v516 = vsel %vm502, %v500, 0
      %v519 = vsel %vm502, %v501, 0
      %521 = vmatprep.subr.bf16.mxu0 0
      %522 = vmatpush1.bf16.msra.mxu0 0
      %523 = vmatprep.subr.bf16.mxu0 0
      %524 = vmatpush1.bf16.msra.mxu0 0
      %525 = vmatprep.subr.bf16.mxu0 0
      %526 = vmatpush1.bf16.msra.mxu0 0
      %527 = vmatprep.subr.bf16.mxu0 0
      %528 = vmatpush1.bf16.msra.mxu0 0
      %529 = vmatprep.subr.bf16.mxu0 0
      %530 = vmatpush1.bf16.msra.mxu0 0
      %531 = vmatprep.subr.bf16.mxu0 0
      %532 = vmatpush1.bf16.msra.mxu0 0
      %533 = vmatprep.subr.bf16.mxu0 %v471
      %534 = vmatpush1.bf16.msra.mxu0 %v470
      %535 = vmatprep.subr.bf16.mxu0 %v469
      %536 = vmatpush1.bf16.msra.mxu0 %v468
      %537 = vmatprep.subr.bf16.mxu0 0
      %538 = vmatpush2.bf16.msra.mxu0 0
      %539 = vmatprep.subr.bf16.mxu0 0
      %540 = vmatpush2.bf16.msra.mxu0 0
      %541 = vmatprep.subr.bf16.mxu0 0
      %542 = vmatpush2.bf16.msra.mxu0 0
      %543 = vmatprep.subr.bf16.mxu0 0
      %544 = vmatpush2.bf16.msra.mxu0 0
      %545 = vmatprep.subr.bf16.mxu0 0
      %546 = vmatpush2.bf16.msra.mxu0 0
      %547 = vmatprep.subr.bf16.mxu0 0
      %548 = vmatpush2.bf16.msra.mxu0 0
      %549 = vmatprep.subr.bf16.mxu0 0
      %550 = vmatpush2.bf16.msra.mxu0 0
      %551 = vmatprep.subr.bf16.mxu0 0
      %552 = vmatpush2.bf16.msra.mxu0 0
      %553 = vmatprep.mubr.bf16.mxu0 0
      %554 = vmatmul.mubr.bf16.gmra.mxu0 %v504
      %v555 = vpop.f32.mrf.mxu0
      %v556 = vadd.f32 0.0, %v555
      %v557 = vpop.f32.mrf.mxu0
      %v558 = vadd.f32 0.0, %v557
      %v559 = vpop.f32.mrf.mxu0
      %v560 = vadd.f32 0.0, %v559
      %v561 = vpop.f32.mrf.mxu0
      %v562 = vadd.f32 0.0, %v561
      %563 = vmatprep.mubr.bf16.mxu0 0
      %564 = vmatmul.mubr.bf16.gmra.mxu0 %v507
      %v565 = vpop.f32.mrf.mxu0
      %v566 = vadd.f32 0.0, %v565
      %v567 = vpop.f32.mrf.mxu0
      %v568 = vadd.f32 0.0, %v567
      %v569 = vpop.f32.mrf.mxu0
      %v570 = vadd.f32 0.0, %v569
      %v571 = vpop.f32.mrf.mxu0
      %v572 = vadd.f32 0.0, %v571
      %573 = vmatprep.mubr.bf16.mxu0 0
      %574 = vmatmul.mubr.bf16.gmra.mxu0 %v510
      %v575 = vpop.f32.mrf.mxu0
      %v576 = vadd.f32 0.0, %v575
      %v577 = vpop.f32.mrf.mxu0
      %v578 = vadd.f32 0.0, %v577
      %v579 = vpop.f32.mrf.mxu0
      %v580 = vadd.f32 0.0, %v579
      %v581 = vpop.f32.mrf.mxu0
      %v582 = vadd.f32 0.0, %v581
      %583 = vmatprep.mubr.bf16.mxu0 0
      %584 = vmatmul.mubr.bf16.gmra.mxu0 %v513
      %v585 = vpop.f32.mrf.mxu0
      %v586 = vadd.f32 0.0, %v585
      %v587 = vpop.f32.mrf.mxu0
      %v588 = vadd.f32 0.0, %v587
      %v589 = vpop.f32.mrf.mxu0
      %v590 = vadd.f32 0.0, %v589
      %v591 = vpop.f32.mrf.mxu0
      %v592 = vadd.f32 0.0, %v591
      %593 = vmatprep.mubr.bf16.mxu0 0
      %594 = vmatmul.mubr.bf16.gmra.mxu0 %v516
      %v595 = vpop.f32.mrf.mxu0
      %v596 = vadd.f32 0.0, %v595
      %v597 = vpop.f32.mrf.mxu0
      %v598 = vadd.f32 0.0, %v597
      %v599 = vpop.f32.mrf.mxu0
      %v600 = vadd.f32 0.0, %v599
      %v601 = vpop.f32.mrf.mxu0
      %v602 = vadd.f32 0.0, %v601
      %603 = vmatprep.mubr.bf16.mxu0 0
      %604 = vmatmul.mubr.bf16.gmra.mxu0 %v519
      %v605 = vpop.f32.mrf.mxu0
      %v606 = vadd.f32 0.0, %v605
      %v607 = vpop.f32.mrf.mxu0
      %v608 = vadd.f32 0.0, %v607
      %v609 = vpop.f32.mrf.mxu0
      %v610 = vadd.f32 0.0, %v609
      %v611 = vpop.f32.mrf.mxu0
      %v612 = vadd.f32 0.0, %v611
      %613 = vdwg.mxu0
      %v614 = vmul.f32 %v556, %v448
      %v615 = vmul.f32 %v558, %v449
      %v616 = vmul.f32 %v560, %v450
      %v617 = vmul.f32 %v562, %v451
      %v618 = vmul.f32 %v566, %v452
      %v619 = vmul.f32 %v568, %v453
      %v620 = vmul.f32 %v570, %v454
      %v621 = vmul.f32 %v572, %v455
      %v622 = vmul.f32 %v576, %v448
      %v623 = vmul.f32 %v578, %v449
      %v624 = vmul.f32 %v580, %v450
      %v625 = vmul.f32 %v582, %v451
      %v626 = vmul.f32 %v586, %v452
      %v627 = vmul.f32 %v588, %v453
      %v628 = vmul.f32 %v590, %v454
      %v629 = vmul.f32 %v592, %v455
      %v630 = vmul.f32 %v596, %v448
      %v631 = vmul.f32 %v598, %v449
      %v632 = vmul.f32 %v600, %v450
      %v633 = vmul.f32 %v602, %v451
      %v634 = vmul.f32 %v606, %v452
      %v635 = vmul.f32 %v608, %v453
      %v636 = vmul.f32 %v610, %v454
      %v637 = vmul.f32 %v612, %v455
      %v638 = vadd.f32 %v614, %v616
      %v639 = vadd.f32 %v638, %v618
      %v640 = vadd.f32 %v639, %v620
      %v641 = vrot.slane %v640, 4
      %v642 = vadd.f32 %v640, %v641
      %v643 = vrot.slane %v642, 2
      %v644 = vadd.f32 %v642, %v643
      %v645 = vrot.slane %v644, 1
      %v646 = vadd.f32 %v644, %v645
      %v647 = vadd.f32 %v615, %v617
      %v648 = vadd.f32 %v647, %v619
      %v649 = vadd.f32 %v648, %v621
      %v650 = vrot.slane %v649, 4
      %v651 = vadd.f32 %v649, %v650
      %v652 = vrot.slane %v651, 2
      %v653 = vadd.f32 %v651, %v652
      %v654 = vrot.slane %v653, 1
      %v655 = vadd.f32 %v653, %v654
      %v656 = vadd.f32 %v622, %v624
      %v657 = vadd.f32 %v656, %v626
      %v658 = vadd.f32 %v657, %v628
      %v659 = vrot.slane %v658, 4
      %v660 = vadd.f32 %v658, %v659
      %v661 = vrot.slane %v660, 2
      %v662 = vadd.f32 %v660, %v661
      %v663 = vrot.slane %v662, 1
      %v664 = vadd.f32 %v662, %v663
      %v665 = vadd.f32 %v623, %v625
      %v666 = vadd.f32 %v665, %v627
      %v667 = vadd.f32 %v666, %v629
      %v668 = vrot.slane %v667, 4
      %v669 = vadd.f32 %v667, %v668
      %v670 = vrot.slane %v669, 2
      %v671 = vadd.f32 %v669, %v670
      %v672 = vrot.slane %v671, 1
      %v673 = vadd.f32 %v671, %v672
      %v674 = vadd.f32 %v630, %v632
      %v675 = vadd.f32 %v674, %v634
      %v676 = vadd.f32 %v675, %v636
      %v677 = vrot.slane %v676, 4
      %v678 = vadd.f32 %v676, %v677
      %v679 = vrot.slane %v678, 2
      %v680 = vadd.f32 %v678, %v679
      %v681 = vrot.slane %v680, 1
      %v682 = vadd.f32 %v680, %v681
      %v683 = vadd.f32 %v631, %v633
      %v684 = vadd.f32 %v683, %v635
      %v685 = vadd.f32 %v684, %v637
      %v686 = vrot.slane %v685, 4
      %v687 = vadd.f32 %v685, %v686
      %v688 = vrot.slane %v687, 2
      %v689 = vadd.f32 %v687, %v688
      %v690 = vrot.slane %v689, 1
      %v691 = vadd.f32 %v689, %v690
      %v698 = vcombine.low %v646, %v655
      %v699 = vcombine.low %v664, %v673
      %v700 = vcombine.low %v682, %v691
      %v701 = vrot.slane %v699, 7
      %vm702 = vcmask 1041409
      %v703 = vsel %vm702, %v701, %v698
      %vm704 = vcmask 1045509
      %v705 = vsel %vm704, %v701, %v703
      %v706 = vrot.slane %v700, 6
      %vm707 = vcmask 1042434
      %v708 = vsel %vm707, %v706, %v705
      %vm709 = vcmask 1046534
      %v710 = vsel %vm709, %v706, %v708
      %712 = vst [vmem:[%s201] sm:$0x77] %v710
      %s713 = smul.u32 2, %s18
      %p714 = scmp.lt.s32.totalorder %s17, 1
      %s715 = scalar_select %p714, %s17, 1
      %p716 = scmp.lt.s32.totalorder %s713, 7
      %s717 = scalar_select %p716, %s713, 7
      %s718 = smul.addr %s715, 8
      %s719 = sadd.s32 %s717, %s718
      %s720 = smul.addr %s719, 4
      %s721 = scalar_lea.vmem %s2, %s720
      // Predicated region
      $region29: #{_lambda_.5} parent=27 // pred_check
        %p722 = pneg %p99
      $region30: #{_lambda_.5} parent=27 // pred_check_branch
        %724 = sbr.rel (%p722) target = $region32
      $region31: #{_lambda_.5} parent=27 // pred_region
        %s725 = smul.u32 2, %s18
      $region32: #{_lambda_.5} parent=27 // pred_fallthru
        _
    $region28: #{_lambda_.5} parent=5 // pred_fallthru
      _
    %p726 = scmp.le.s32.totalorder 2, %s8
    // Predicated region
    $region33: #{_lambda_.5} parent=5 // pred_check
      %p727 = pneg %p726
    $region34: #{_lambda_.5} parent=5 // pred_check_branch
      %729 = sbr.rel (%p727) target = $region36
    $region35: #{_lambda_.5} parent=5 // pred_region
      %s730 = ssub.s32 %s8, 2
      // Predicated region
      $region37: #{_lambda_.5} parent=35 // pred_check
        %p731 = pneg %p105
      $region38: #{_lambda_.5} parent=35 // pred_check_branch
        %733 = sbr.rel (%p731) target = $region40
      $region39: #{_lambda_.5} parent=35 // pred_region
        %s734 = smul.u32 2, %s20
        %p735 = scmp.lt.s32.totalorder %s19, 1
        %s736 = scalar_select %p735, %s19, 1
        %p737 = scmp.lt.s32.totalorder %s734, 7
        %s738 = scalar_select %p737, %s734, 7
        %s739 = smul.addr %s736, 8
        %s740 = sadd.s32 %s738, %s739
        %s741 = smul.addr %s740, 4
        %s742 = scalar_lea.vmem %s2, %s741
      $region40: #{_lambda_.5} parent=35 // pred_fallthru
        _
    $region36: #{_lambda_.5} parent=5 // pred_fallthru
      _
  $region6: #{_lambda_.5} parent=0 // loop_footer
    %s12 = sadd.s32 1, %s8
  $region7: #{_lambda_.5} parent=0 // loop_footer_branch
    %7 = sbr.rel target = $region3
  $region8: #{_lambda_.5} parent=0 // loop_exit
    _

</llo_original>
